<compile_context>
chip_gen: v7x
topology: tpu7x:2x2x1
jax: 0.10.0
libtpu: 0.0.40
codegen_flags: <defaults>
</compile_context>

<pallas_src>
import jax
import jax.numpy as jnp
from jax.experimental import pallas as pl
from jax.experimental.pallas import tpu as pltpu

VMEM = pltpu.MemorySpace.VMEM


def _vmem_specs(n):
    return [pl.BlockSpec(memory_space=VMEM) for _ in range(n)]


# ----------------------------------------------------------------------------
# One fused kernel per branch: VAE layer1 + VAE layer2 + spatial conv stack
# + classification head.
# ----------------------------------------------------------------------------
def _branch_kernel(
    # ---- spectral inputs ----
    x_ref, wml1_ref, bml1_ref, wd1_ref, bd1_ref,
    wml2_ref, bml2_ref, wd2_ref, bd2_ref, n1_ref, n2_ref,
    # ---- spatial inputs ----
    x2d_ref, xcol_ref, w1_ref, b1_ref, g1_ref, beta1_ref, w1blk_ref, t30_ref,
    w2_ref, b2_ref, g2_ref, beta2_ref, w3mix_ref, b3_ref, mask_ref, rsel_ref,
    csel_ref,
    # ---- classification inputs ----
    e1_ref, e2_ref, wc_ref, bc_ref,
    # ---- outputs ----
    h1_ref, xhat1_ref, kld1_ref, cat_ref, spat_ref, h2_ref, xhat2_ref,
    kld2_ref, out_ref,
):
    f32 = jnp.float32
    eps = 1e-5

    def mm(a, b):
        return jnp.dot(a, b, preferred_element_type=f32)

    def sigmoid(v):
        return pl.reciprocal(1.0 + jnp.exp(-v), approx=True)

    # ---------------- spectral VAE, layer 1 ----------------
    x = x_ref[...]                                   # (B, din)
    batch = x.shape[0]
    din = x.shape[1]
    hid = n1_ref.shape[1]
    r = n2_ref.shape[1]

    ml1 = mm(x, wml1_ref[...]) + bml1_ref[...]       # (B, 2*hid) = [mean | log_var]
    mean1 = ml1[:, :hid]
    logvar1 = ml1[:, hid:]
    elv1 = jnp.exp(logvar1)                          # exp(log_var), reused by KLD
    h1 = mean1 + jnp.sqrt(elv1) * n1_ref[...]        # mean + exp(lv/2) * noise
    h1_ref[...] = h1
    xhat1_ref[...] = jnp.tanh(mm(h1, wd1_ref[...]) + bd1_ref[...])
    t1 = 1.0 + logvar1 - mean1 * mean1 - elv1
    s1 = jnp.sum(jnp.sum(t1, axis=1, keepdims=True), axis=0, keepdims=True)
    kld1_ref[...] = (-0.5 / float(din * batch)) * s1

    # ---------------- spectral VAE, layer 2 ----------------
    ml2 = mm(h1, wml2_ref[...]) + bml2_ref[...]      # (B, 2*r)
    mean2 = ml2[:, :r]
    logvar2 = ml2[:, r:]
    elv2 = jnp.exp(logvar2)
    h2raw = mean2 + jnp.sqrt(elv2) * n2_ref[...]
    xhat2_ref[...] = jnp.tanh(mm(h2raw, wd2_ref[...]) + bd2_ref[...])
    t2 = 1.0 + logvar2 - mean2 * mean2 - elv2
    s2 = jnp.sum(jnp.sum(t2, axis=1, keepdims=True), axis=0, keepdims=True)
    kld2_ref[...] = (-0.5 / float(hid * batch)) * s2
    h2 = sigmoid(h2raw)                              # sigmoid applied in CDSSnet.forward
    h2_ref[...] = h2

    # ---------------- spatial model ----------------
    # 1x1 conv BN statistics from the non-replicated slab (each of the B*P*P
    # positions exactly once -> identical to BatchNorm2d training statistics).
    y50 = mm(x2d_ref[...], w1_ref[...]) + b1_ref[...]           # (B*P*P, 30)
    mu1 = jnp.mean(y50, axis=0, keepdims=True)
    var1 = jnp.mean((y50 - mu1) ** 2, axis=0, keepdims=True)    # biased variance
    a1 = g1_ref[...] * jax.lax.rsqrt(var1 + eps)                # BN scale  (1, 30)
    c1 = beta1_ref[...] - mu1 * a1 + b1_ref[...] * a1           # BN shift + folded conv bias
    a1t = mm(a1, t30_ref[...])                                  # tiled to (1, 9*30)
    c1t = mm(c1, t30_ref[...])
    # conv1 + BN + ReLU on the input-side im2col (1x1 conv commutes with the
    # 3x3 patch extraction); w1blk = block-diag(w1) over the 9 taps.
    hcol = jnp.maximum(mm(xcol_ref[...], w1blk_ref[...]) * a1t + c1t, 0.0)  # (B*9, 270)

    # 3x3 valid conv as ONE matmul, then BN(train) + ReLU.
    z2 = mm(hcol, w2_ref[...]) + b2_ref[...]                    # (B*9, 10)
    mu2 = jnp.mean(z2, axis=0, keepdims=True)
    var2 = jnp.mean((z2 - mu2) ** 2, axis=0, keepdims=True)
    z2 = jnp.maximum(
        (z2 - mu2) * jax.lax.rsqrt(var2 + eps) * g2_ref[...] + beta2_ref[...], 0.0)

    # flatten + Linear + Sigmoid, reshape-free:
    #   e[row, p*r+j] = sum_c z2[row, c] * w3[p*10+c, j];
    #   mask keeps p == row % n_pos, csel folds the n_pos lane blocks,
    #   rsel sums the n_pos rows belonging to each batch element.
    e = mm(z2, w3mix_ref[...]) * mask_ref[...]                  # (B*9, 9*r)
    f = mm(e, csel_ref[...])                                    # (B*9, r)
    spat = sigmoid(mm(rsel_ref[...], f) + b3_ref[...])          # (B, r)
    spat_ref[...] = spat

    # ---------------- classification head ----------------
    cat = mm(h2, e1_ref[...]) + mm(spat, e2_ref[...])           # [h2 | spat], (B, 2r)
    cat_ref[...] = cat
    out_ref[...] = mm(cat, wc_ref[...]) + bc_ref[...]           # (B, class_num)


# ----------------------------------------------------------------------------
# Wrapper-side layout glue (tiny, pure data movement / constants).
# ----------------------------------------------------------------------------
def _spatial_glue(x_nchw, sp):
    b, cin, patch, _ = x_nchw.shape
    ho = patch - 2
    n_pos = ho * ho
    r = sp["b3"].shape[-1]
    c2out = sp["w2"].shape[1]                                    # 10
    x_nhwc = jnp.transpose(x_nchw, (0, 2, 3, 1))                 # (B, P, P, Cin)
    x2d = x_nhwc.reshape(b * patch * patch, cin)
    taps = []
    for dy in range(3):
        for dx in range(3):
            taps.append(x_nhwc[:, dy:dy + ho, dx:dx + ho, :])
    xcol = jnp.concatenate(taps, axis=-1).reshape(b * n_pos, 9 * cin)
    w1blk = jnp.kron(jnp.eye(9, dtype=jnp.float32), sp["w1"])    # (9*Cin, 9*30)
    w3mix = sp["w3"].reshape(n_pos, c2out, r).transpose(1, 0, 2).reshape(c2out, n_pos * r)
    return x2d, xcol, w1blk, w3mix


def _selector_consts(batch, n_pos, c1out, r):
    """Constant 0/1 selector matrices (compile-time constants under jit)."""
    t30 = jnp.tile(jnp.eye(c1out, dtype=jnp.float32), (1, 9))            # (30, 9*30)
    rows = jnp.arange(batch * n_pos) % n_pos
    cols = jnp.arange(n_pos * r) // r
    mask = (rows[:, None] == cols[None, :]).astype(jnp.float32)          # (B*n_pos, n_pos*r)
    csel = jnp.tile(jnp.eye(r, dtype=jnp.float32), (n_pos, 1))           # (n_pos*r, r)
    rsel = jnp.repeat(jnp.eye(batch, dtype=jnp.float32), n_pos, axis=1)  # (B, B*n_pos)
    e1 = jnp.eye(r, 2 * r, dtype=jnp.float32)                            # [I | 0]
    e2 = jnp.eye(r, 2 * r, k=r, dtype=jnp.float32)                       # [0 | I]
    return t30, mask, csel, rsel, e1, e2


def _branch_forward(spec_x, noise1, noise2, spat_x, vae1, vae2, sp, cls_w, cls_b):
    b, din = spec_x.shape
    hidden = vae1["wml"].shape[1] // 2
    r = vae2["wml"].shape[1] // 2
    patch = spat_x.shape[2]
    n_pos = (patch - 2) ** 2
    class_num = cls_w.shape[1]
    c1out = sp["w1"].shape[1]

    x2d, xcol, w1blk, w3mix = _spatial_glue(spat_x, sp)
    t30, mask, csel, rsel, e1, e2 = _selector_consts(b, n_pos, c1out, r)

    out_shape = (
        jax.ShapeDtypeStruct((b, hidden), jnp.float32),     # hidden1
        jax.ShapeDtypeStruct((b, din), jnp.float32),        # input_hat_1
        jax.ShapeDtypeStruct((1, 1), jnp.float32),          # kld_1
        jax.ShapeDtypeStruct((b, 2 * r), jnp.float32),      # [h2 | spatial]
        jax.ShapeDtypeStruct((b, r), jnp.float32),          # spatial out
        jax.ShapeDtypeStruct((b, r), jnp.float32),          # sigmoid(hidden2)
        jax.ShapeDtypeStruct((b, hidden), jnp.float32),     # input_hat_2
        jax.ShapeDtypeStruct((1, 1), jnp.float32),          # kld_2
        jax.ShapeDtypeStruct((b, class_num), jnp.float32),  # class logits
    )
    h1, xhat1, kld1, cat, spat, h2, xhat2, kld2, out = pl.pallas_call(
        _branch_kernel,
        out_shape=out_shape,
        in_specs=_vmem_specs(32),
        out_specs=tuple(_vmem_specs(9)),
    )(spec_x, vae1["wml"], vae1["bml"], vae1["wd"], vae1["bd"],
      vae2["wml"], vae2["bml"], vae2["wd"], vae2["bd"], noise1, noise2,
      x2d, xcol, sp["w1"], sp["b1"], sp["g1"], sp["beta1"], w1blk, t30,
      sp["w2"], sp["b2"], sp["g2"], sp["beta2"], w3mix, sp["b3"], mask, rsel,
      csel, e1, e2, cls_w, cls_b)
    return h1, xhat1, kld1[0, 0], cat, spat, h2, xhat2, kld2[0, 0], out


@jax.jit
def cdssnet_forward(params, s_spec, t_spec, s_spat, t_spat, noises):
    tau = params["tau"]
    (s_h1, s_xh1, s_kld1, s_cat, s_spatial, s_h2, s_xh2, s_kld2,
     s_out) = _branch_forward(s_spec, noises["s1"], noises["s2"], s_spat,
                              params["s_vae1"], params["s_vae2"],
                              params["s_spatial"], params["cls_w"], params["cls_b"])
    (t_h1, t_xh1, t_kld1, t_cat, t_spatial, t_h2, t_xh2, t_kld2,
     t_out) = _branch_forward(t_spec, noises["t1"], noises["t2"], t_spat,
                              params["t_vae1"], params["t_vae2"],
                              params["t_spatial"], params["cls_w"], params["cls_b"])
    return (s_h1, s_xh1, s_kld1, s_cat, s_spatial, s_h2, s_xh2, s_kld2,
            t_h1, t_xh1, t_kld1, t_cat, t_spatial, t_h2, t_xh2, t_kld2,
            tau, s_out, t_out)


# ----------------------------------------------------------------------------
# Parameter construction (deterministic, synthetic).
# Note: w2 rows are ordered (tap = dy*3+dx, conv1-channel) and w3 rows are
# ordered (position = oy*ho+ox, conv2-channel); permute trained PyTorch weights
# accordingly before loading.
# ----------------------------------------------------------------------------
def init_vae_layer(key, din, dout):
    k1, k2 = jax.random.split(key)
    return dict(
        wml=jax.random.normal(k1, (din, 2 * dout), jnp.float32) * 0.002,  # [mean | log_var]
        bml=jnp.zeros((1, 2 * dout), jnp.float32),
        wd=jax.random.normal(k2, (dout, din), jnp.float32) * 0.002,
        bd=jnp.zeros((1, din), jnp.float32),
    )


def init_spatial(key, cin, patch, r):
    n_pos = (patch - 2) ** 2
    k1, k2, k3 = jax.random.split(key, 3)
    return dict(
        w1=jax.random.normal(k1, (cin, 30), jnp.float32) * 0.05,
        b1=jnp.zeros((1, 30), jnp.float32),
        g1=jnp.ones((1, 30), jnp.float32), beta1=jnp.zeros((1, 30), jnp.float32),
        w2=jax.random.normal(k2, (9 * 30, 10), jnp.float32) * 0.05,
        b2=jnp.zeros((1, 10), jnp.float32),
        g2=jnp.ones((1, 10), jnp.float32), beta2=jnp.zeros((1, 10), jnp.float32),
        w3=jax.random.normal(k3, (n_pos * 10, r), jnp.float32) * 0.05,
        b3=jnp.zeros((1, r), jnp.float32),
    )


def init_params(key, s_dim, t_dim, patch, hidden, r, class_num):
    ks = jax.random.split(key, 7)
    return dict(
        tau=jnp.array([0.8], jnp.float32),
        s_vae1=init_vae_layer(ks[0], s_dim, hidden),
        s_vae2=init_vae_layer(ks[1], hidden, r),
        t_vae1=init_vae_layer(ks[2], t_dim, hidden),
        t_vae2=init_vae_layer(ks[3], hidden, r),
        s_spatial=init_spatial(ks[4], s_dim, patch, r),
        t_spatial=init_spatial(ks[5], t_dim, patch, r),
        cls_w=jax.random.normal(ks[6], (2 * r, class_num), jnp.float32) * 0.05,
        cls_b=jnp.zeros((1, class_num), jnp.float32),
    )


if __name__ == "__main__":
    B = 2
    SOURCE_DIM = 6
    TARGET_DIM = 4
    PATCH = 5
    HIDDEN = 32
    R = 16
    CLASS_NUM = 3

    key = jax.random.PRNGKey(0)
    kp, kx1, kx2, kx3, kx4, kn1, kn2, kn3, kn4 = jax.random.split(key, 9)

    params = init_params(kp, SOURCE_DIM, TARGET_DIM, PATCH, HIDDEN, R, CLASS_NUM)

    source_spectral = jax.random.normal(kx1, (B, SOURCE_DIM), jnp.float32)
    target_spectral = jax.random.normal(kx2, (B, TARGET_DIM), jnp.float32)
    source_spatial = jax.random.normal(kx3, (B, SOURCE_DIM, PATCH, PATCH), jnp.float32)
    target_spatial = jax.random.normal(kx4, (B, TARGET_DIM, PATCH, PATCH), jnp.float32)

    noises = dict(
        s1=jax.random.normal(kn1, (B, HIDDEN), jnp.float32),
        s2=jax.random.normal(kn2, (B, R), jnp.float32),
        t1=jax.random.normal(kn3, (B, HIDDEN), jnp.float32),
        t2=jax.random.normal(kn4, (B, R), jnp.float32),
    )

    outs = cdssnet_forward(params, source_spectral, target_spectral,
                           source_spatial, target_spatial, noises)
    jax.block_until_ready(outs)

    # Light sanity checks on shapes.
    assert outs[0].shape == (B, HIDDEN)        # source_hidden_spectral_1
    assert outs[3].shape == (B, 2 * R)         # source_hidden_spectral_spatial
    assert outs[4].shape == (B, R)             # source_out_spatial
    assert outs[16].shape == (1,)              # tau
    assert outs[17].shape == (B, CLASS_NUM)    # source_out
    assert outs[18].shape == (B, CLASS_NUM)    # target_out

    print("KERNEL_OK")
</pallas_src>

<mosaic_0001>
module attributes {stable_mosaic.version = 11 : i64} {
  func.func @_branch_kernel(%arg0: memref<2x6xf32, #tpu.memory_space<vmem>>, %arg1: memref<6x64xf32, #tpu.memory_space<vmem>>, %arg2: memref<1x64xf32, #tpu.memory_space<vmem>>, %arg3: memref<32x6xf32, #tpu.memory_space<vmem>>, %arg4: memref<1x6xf32, #tpu.memory_space<vmem>>, %arg5: memref<32x32xf32, #tpu.memory_space<vmem>>, %arg6: memref<1x32xf32, #tpu.memory_space<vmem>>, %arg7: memref<16x32xf32, #tpu.memory_space<vmem>>, %arg8: memref<1x32xf32, #tpu.memory_space<vmem>>, %arg9: memref<2x32xf32, #tpu.memory_space<vmem>>, %arg10: memref<2x16xf32, #tpu.memory_space<vmem>>, %arg11: memref<50x6xf32, #tpu.memory_space<vmem>>, %arg12: memref<18x54xf32, #tpu.memory_space<vmem>>, %arg13: memref<6x30xf32, #tpu.memory_space<vmem>>, %arg14: memref<1x30xf32, #tpu.memory_space<vmem>>, %arg15: memref<1x30xf32, #tpu.memory_space<vmem>>, %arg16: memref<1x30xf32, #tpu.memory_space<vmem>>, %arg17: memref<54x270xf32, #tpu.memory_space<vmem>>, %arg18: memref<30x270xf32, #tpu.memory_space<vmem>>, %arg19: memref<270x10xf32, #tpu.memory_space<vmem>>, %arg20: memref<1x10xf32, #tpu.memory_space<vmem>>, %arg21: memref<1x10xf32, #tpu.memory_space<vmem>>, %arg22: memref<1x10xf32, #tpu.memory_space<vmem>>, %arg23: memref<10x144xf32, #tpu.memory_space<vmem>>, %arg24: memref<1x16xf32, #tpu.memory_space<vmem>>, %arg25: memref<18x144xf32, #tpu.memory_space<vmem>>, %arg26: memref<2x18xf32, #tpu.memory_space<vmem>>, %arg27: memref<144x16xf32, #tpu.memory_space<vmem>>, %arg28: memref<16x32xf32, #tpu.memory_space<vmem>>, %arg29: memref<16x32xf32, #tpu.memory_space<vmem>>, %arg30: memref<32x3xf32, #tpu.memory_space<vmem>>, %arg31: memref<1x3xf32, #tpu.memory_space<vmem>>, %arg32: memref<2x32xf32, #tpu.memory_space<vmem>>, %arg33: memref<2x6xf32, #tpu.memory_space<vmem>>, %arg34: memref<1x1xf32, #tpu.memory_space<vmem>>, %arg35: memref<2x32xf32, #tpu.memory_space<vmem>>, %arg36: memref<2x16xf32, #tpu.memory_space<vmem>>, %arg37: memref<2x16xf32, #tpu.memory_space<vmem>>, %arg38: memref<2x32xf32, #tpu.memory_space<vmem>>, %arg39: memref<1x1xf32, #tpu.memory_space<vmem>>, %arg40: memref<2x3xf32, #tpu.memory_space<vmem>>) attributes {dimension_semantics = [], scalar_prefetch = 0 : i64, scratch_operands = 0 : i64, tpu.core_type = #tpu.core_type<tc>} {
    %c0 = arith.constant 0 : index
    %c0_0 = arith.constant 0 : index
    %0 = vector.load %arg0[%c0, %c0_0] : memref<2x6xf32, #tpu.memory_space<vmem>>, vector<2x6xf32>
    %c0_1 = arith.constant 0 : index
    %c0_2 = arith.constant 0 : index
    %1 = vector.load %arg1[%c0_1, %c0_2] : memref<6x64xf32, #tpu.memory_space<vmem>>, vector<6x64xf32>
    %cst = arith.constant dense<0.000000e+00> : vector<2x64xf32>
    %2 = tpu.matmul %0, %1, %cst {dimension_numbers = #tpu.dot_dimension_numbers<[1], [0], [0], [1], [0, 0, 1, 1], [], []>} : vector<2x6xf32>, vector<6x64xf32>, vector<2x64xf32> -> vector<2x64xf32>
    %c0_3 = arith.constant 0 : index
    %c0_4 = arith.constant 0 : index
    %3 = vector.load %arg2[%c0_3, %c0_4] : memref<1x64xf32, #tpu.memory_space<vmem>>, vector<1x64xf32>
    %4 = vector.broadcast %3 : vector<1x64xf32> to vector<2x64xf32>
    %5 = arith.addf %2, %4 : vector<2x64xf32>
    %6 = vector.extract_strided_slice %5 {offsets = [0, 0], sizes = [2, 32], strides = [1, 1]} : vector<2x64xf32> to vector<2x32xf32>
    %7 = vector.extract_strided_slice %5 {offsets = [0, 32], sizes = [2, 32], strides = [1, 1]} : vector<2x64xf32> to vector<2x32xf32>
    %8 = math.exp %7 : vector<2x32xf32>
    %9 = math.sqrt %8 : vector<2x32xf32>
    %c0_5 = arith.constant 0 : index
    %c0_6 = arith.constant 0 : index
    %10 = vector.load %arg9[%c0_5, %c0_6] : memref<2x32xf32, #tpu.memory_space<vmem>>, vector<2x32xf32>
    %11 = arith.mulf %9, %10 : vector<2x32xf32>
    %12 = arith.addf %6, %11 : vector<2x32xf32>
    %c0_7 = arith.constant 0 : index
    %c0_8 = arith.constant 0 : index
    %13 = vector.load %arg32[%c0_7, %c0_8] : memref<2x32xf32, #tpu.memory_space<vmem>>, vector<2x32xf32>
    tpu.vector_store %arg32[%c0_7, %c0_8], %12 {strides = array<i32>} : memref<2x32xf32, #tpu.memory_space<vmem>>, vector<2x32xf32>,
    %c0_9 = arith.constant 0 : index
    %c0_10 = arith.constant 0 : index
    %14 = vector.load %arg3[%c0_9, %c0_10] : memref<32x6xf32, #tpu.memory_space<vmem>>, vector<32x6xf32>
    %cst_11 = arith.constant dense<0.000000e+00> : vector<2x6xf32>
    %15 = tpu.matmul %12, %14, %cst_11 {dimension_numbers = #tpu.dot_dimension_numbers<[1], [0], [0], [1], [0, 0, 1, 1], [], []>} : vector<2x32xf32>, vector<32x6xf32>, vector<2x6xf32> -> vector<2x6xf32>
    %c0_12 = arith.constant 0 : index
    %c0_13 = arith.constant 0 : index
    %16 = vector.load %arg4[%c0_12, %c0_13] : memref<1x6xf32, #tpu.memory_space<vmem>>, vector<1x6xf32>
    %17 = vector.broadcast %16 : vector<1x6xf32> to vector<2x6xf32>
    %18 = arith.addf %15, %17 : vector<2x6xf32>
    %19 = math.tanh %18 : vector<2x6xf32>
    %c0_14 = arith.constant 0 : index
    %c0_15 = arith.constant 0 : index
    %20 = vector.load %arg33[%c0_14, %c0_15] : memref<2x6xf32, #tpu.memory_space<vmem>>, vector<2x6xf32>
    tpu.vector_store %arg33[%c0_14, %c0_15], %19 {strides = array<i32>} : memref<2x6xf32, #tpu.memory_space<vmem>>, vector<2x6xf32>,
    %cst_16 = arith.constant 1.000000e+00 : f32
    %21 = vector.broadcast %cst_16 : f32 to vector<2x32xf32>
    %22 = arith.addf %21, %7 : vector<2x32xf32>
    %23 = arith.mulf %6, %6 : vector<2x32xf32>
    %24 = arith.subf %22, %23 : vector<2x32xf32>
    %25 = arith.subf %24, %8 : vector<2x32xf32>
    %cst_17 = arith.constant dense<0.000000e+00> : vector<2xf32>
    %26 = vector.multi_reduction <add>, %25, %cst_17 [1] : vector<2x32xf32> to vector<2xf32>
    %27 = vector.shape_cast %26 : vector<2xf32> to vector<2x1xf32>
    %cst_18 = arith.constant dense<0.000000e+00> : vector<1xf32>
    %28 = vector.multi_reduction <add>, %27, %cst_18 [0] : vector<2x1xf32> to vector<1xf32>
    %29 = vector.shape_cast %28 : vector<1xf32> to vector<1x1xf32>
    %cst_19 = arith.constant -0.0416666679 : f32
    %30 = vector.broadcast %cst_19 : f32 to vector<1x1xf32>
    %31 = arith.mulf %30, %29 : vector<1x1xf32>
    %c0_20 = arith.constant 0 : index
    %c0_21 = arith.constant 0 : index
    %32 = vector.load %arg34[%c0_20, %c0_21] : memref<1x1xf32, #tpu.memory_space<vmem>>, vector<1x1xf32>
    tpu.vector_store %arg34[%c0_20, %c0_21], %31 {strides = array<i32>} : memref<1x1xf32, #tpu.memory_space<vmem>>, vector<1x1xf32>,
    %c0_22 = arith.constant 0 : index
    %c0_23 = arith.constant 0 : index
    %33 = vector.load %arg5[%c0_22, %c0_23] : memref<32x32xf32, #tpu.memory_space<vmem>>, vector<32x32xf32>
    %cst_24 = arith.constant dense<0.000000e+00> : vector<2x32xf32>
    %34 = tpu.matmul %12, %33, %cst_24 {dimension_numbers = #tpu.dot_dimension_numbers<[1], [0], [0], [1], [0, 0, 1, 1], [], []>} : vector<2x32xf32>, vector<32x32xf32>, vector<2x32xf32> -> vector<2x32xf32>
    %c0_25 = arith.constant 0 : index
    %c0_26 = arith.constant 0 : index
    %35 = vector.load %arg6[%c0_25, %c0_26] : memref<1x32xf32, #tpu.memory_space<vmem>>, vector<1x32xf32>
    %36 = vector.broadcast %35 : vector<1x32xf32> to vector<2x32xf32>
    %37 = arith.addf %34, %36 : vector<2x32xf32>
    %38 = vector.extract_strided_slice %37 {offsets = [0, 0], sizes = [2, 16], strides = [1, 1]} : vector<2x32xf32> to vector<2x16xf32>
    %39 = vector.extract_strided_slice %37 {offsets = [0, 16], sizes = [2, 16], strides = [1, 1]} : vector<2x32xf32> to vector<2x16xf32>
    %40 = math.exp %39 : vector<2x16xf32>
    %41 = math.sqrt %40 : vector<2x16xf32>
    %c0_27 = arith.constant 0 : index
    %c0_28 = arith.constant 0 : index
    %42 = vector.load %arg10[%c0_27, %c0_28] : memref<2x16xf32, #tpu.memory_space<vmem>>, vector<2x16xf32>
    %43 = arith.mulf %41, %42 : vector<2x16xf32>
    %44 = arith.addf %38, %43 : vector<2x16xf32>
    %c0_29 = arith.constant 0 : index
    %c0_30 = arith.constant 0 : index
    %45 = vector.load %arg7[%c0_29, %c0_30] : memref<16x32xf32, #tpu.memory_space<vmem>>, vector<16x32xf32>
    %cst_31 = arith.constant dense<0.000000e+00> : vector<2x32xf32>
    %46 = tpu.matmul %44, %45, %cst_31 {dimension_numbers = #tpu.dot_dimension_numbers<[1], [0], [0], [1], [0, 0, 1, 1], [], []>} : vector<2x16xf32>, vector<16x32xf32>, vector<2x32xf32> -> vector<2x32xf32>
    %c0_32 = arith.constant 0 : index
    %c0_33 = arith.constant 0 : index
    %47 = vector.load %arg8[%c0_32, %c0_33] : memref<1x32xf32, #tpu.memory_space<vmem>>, vector<1x32xf32>
    %48 = vector.broadcast %47 : vector<1x32xf32> to vector<2x32xf32>
    %49 = arith.addf %46, %48 : vector<2x32xf32>
    %50 = math.tanh %49 : vector<2x32xf32>
    %c0_34 = arith.constant 0 : index
    %c0_35 = arith.constant 0 : index
    %51 = vector.load %arg38[%c0_34, %c0_35] : memref<2x32xf32, #tpu.memory_space<vmem>>, vector<2x32xf32>
    tpu.vector_store %arg38[%c0_34, %c0_35], %50 {strides = array<i32>} : memref<2x32xf32, #tpu.memory_space<vmem>>, vector<2x32xf32>,
    %cst_36 = arith.constant 1.000000e+00 : f32
    %52 = vector.broadcast %cst_36 : f32 to vector<2x16xf32>
    %53 = arith.addf %52, %39 : vector<2x16xf32>
    %54 = arith.mulf %38, %38 : vector<2x16xf32>
    %55 = arith.subf %53, %54 : vector<2x16xf32>
    %56 = arith.subf %55, %40 : vector<2x16xf32>
    %cst_37 = arith.constant dense<0.000000e+00> : vector<2xf32>
    %57 = vector.multi_reduction <add>, %56, %cst_37 [1] : vector<2x16xf32> to vector<2xf32>
    %58 = vector.shape_cast %57 : vector<2xf32> to vector<2x1xf32>
    %cst_38 = arith.constant dense<0.000000e+00> : vector<1xf32>
    %59 = vector.multi_reduction <add>, %58, %cst_38 [0] : vector<2x1xf32> to vector<1xf32>
    %60 = vector.shape_cast %59 : vector<1xf32> to vector<1x1xf32>
    %cst_39 = arith.constant -7.812500e-03 : f32
    %61 = vector.broadcast %cst_39 : f32 to vector<1x1xf32>
    %62 = arith.mulf %61, %60 : vector<1x1xf32>
    %c0_40 = arith.constant 0 : index
    %c0_41 = arith.constant 0 : index
    %63 = vector.load %arg39[%c0_40, %c0_41] : memref<1x1xf32, #tpu.memory_space<vmem>>, vector<1x1xf32>
    tpu.vector_store %arg39[%c0_40, %c0_41], %62 {strides = array<i32>} : memref<1x1xf32, #tpu.memory_space<vmem>>, vector<1x1xf32>,
    %cst_42 = arith.constant 0.000000e+00 : f32
    %64 = vector.broadcast %cst_42 : f32 to vector<2x16xf32>
    %65 = arith.subf %64, %44 : vector<2x16xf32>
    %66 = math.exp %65 : vector<2x16xf32>
    %cst_43 = arith.constant 1.000000e+00 : f32
    %67 = vector.broadcast %cst_43 : f32 to vector<2x16xf32>
    %68 = arith.addf %67, %66 : vector<2x16xf32>
    %69 = tpu.reciprocal %68 {approx = true} : vector<2x16xf32> -> vector<2x16xf32>
    %c0_44 = arith.constant 0 : index
    %c0_45 = arith.constant 0 : index
    %70 = vector.load %arg37[%c0_44, %c0_45] : memref<2x16xf32, #tpu.memory_space<vmem>>, vector<2x16xf32>
    tpu.vector_store %arg37[%c0_44, %c0_45], %69 {strides = array<i32>} : memref<2x16xf32, #tpu.memory_space<vmem>>, vector<2x16xf32>,
    %c0_46 = arith.constant 0 : index
    %c0_47 = arith.constant 0 : index
    %71 = vector.load %arg11[%c0_46, %c0_47] : memref<50x6xf32, #tpu.memory_space<vmem>>, vector<50x6xf32>
    %c0_48 = arith.constant 0 : index
    %c0_49 = arith.constant 0 : index
    %72 = vector.load %arg13[%c0_48, %c0_49] : memref<6x30xf32, #tpu.memory_space<vmem>>, vector<6x30xf32>
    %cst_50 = arith.constant dense<0.000000e+00> : vector<50x30xf32>
    %73 = tpu.matmul %71, %72, %cst_50 {dimension_numbers = #tpu.dot_dimension_numbers<[1], [0], [0], [1], [0, 0, 1, 1], [], []>} : vector<50x6xf32>, vector<6x30xf32>, vector<50x30xf32> -> vector<50x30xf32>
    %c0_51 = arith.constant 0 : index
    %c0_52 = arith.constant 0 : index
    %74 = vector.load %arg14[%c0_51, %c0_52] : memref<1x30xf32, #tpu.memory_space<vmem>>, vector<1x30xf32>
    %75 = vector.broadcast %74 : vector<1x30xf32> to vector<50x30xf32>
    %76 = arith.addf %73, %75 : vector<50x30xf32>
    %cst_53 = arith.constant dense<0.000000e+00> : vector<30xf32>
    %77 = vector.multi_reduction <add>, %76, %cst_53 [0] : vector<50x30xf32> to vector<30xf32>
    %78 = vector.shape_cast %77 : vector<30xf32> to vector<1x30xf32>
    %cst_54 = arith.constant 5.000000e+01 : f32
    %79 = vector.broadcast %cst_54 : f32 to vector<1x30xf32>
    %80 = arith.divf %78, %79 : vector<1x30xf32>
    %81 = vector.broadcast %80 : vector<1x30xf32> to vector<50x30xf32>
    %82 = arith.subf %76, %81 : vector<50x30xf32>
    %83 = arith.mulf %82, %82 : vector<50x30xf32>
    %cst_55 = arith.constant dense<0.000000e+00> : vector<30xf32>
    %84 = vector.multi_reduction <add>, %83, %cst_55 [0] : vector<50x30xf32> to vector<30xf32>
    %85 = vector.shape_cast %84 : vector<30xf32> to vector<1x30xf32>
    %cst_56 = arith.constant 5.000000e+01 : f32
    %86 = vector.broadcast %cst_56 : f32 to vector<1x30xf32>
    %87 = arith.divf %85, %86 : vector<1x30xf32>
    %c0_57 = arith.constant 0 : index
    %c0_58 = arith.constant 0 : index
    %88 = vector.load %arg15[%c0_57, %c0_58] : memref<1x30xf32, #tpu.memory_space<vmem>>, vector<1x30xf32>
    %cst_59 = arith.constant 9.99999974E-6 : f32
    %89 = vector.broadcast %cst_59 : f32 to vector<1x30xf32>
    %90 = arith.addf %87, %89 : vector<1x30xf32>
    %91 = math.rsqrt %90 : vector<1x30xf32>
    %92 = arith.mulf %88, %91 : vector<1x30xf32>
    %c0_60 = arith.constant 0 : index
    %c0_61 = arith.constant 0 : index
    %93 = vector.load %arg16[%c0_60, %c0_61] : memref<1x30xf32, #tpu.memory_space<vmem>>, vector<1x30xf32>
    %94 = arith.mulf %80, %92 : vector<1x30xf32>
    %95 = arith.subf %93, %94 : vector<1x30xf32>
    %c0_62 = arith.constant 0 : index
    %c0_63 = arith.constant 0 : index
    %96 = vector.load %arg14[%c0_62, %c0_63] : memref<1x30xf32, #tpu.memory_space<vmem>>, vector<1x30xf32>
    %97 = arith.mulf %96, %92 : vector<1x30xf32>
    %98 = arith.addf %95, %97 : vector<1x30xf32>
    %c0_64 = arith.constant 0 : index
    %c0_65 = arith.constant 0 : index
    %99 = vector.load %arg18[%c0_64, %c0_65] : memref<30x270xf32, #tpu.memory_space<vmem>>, vector<30x270xf32>
    %cst_66 = arith.constant dense<0.000000e+00> : vector<1x270xf32>
    %100 = tpu.matmul %92, %99, %cst_66 {dimension_numbers = #tpu.dot_dimension_numbers<[1], [0], [0], [1], [0, 0, 1, 1], [], []>} : vector<1x30xf32>, vector<30x270xf32>, vector<1x270xf32> -> vector<1x270xf32>
    %c0_67 = arith.constant 0 : index
    %c0_68 = arith.constant 0 : index
    %101 = vector.load %arg18[%c0_67, %c0_68] : memref<30x270xf32, #tpu.memory_space<vmem>>, vector<30x270xf32>
    %cst_69 = arith.constant dense<0.000000e+00> : vector<1x270xf32>
    %102 = tpu.matmul %98, %101, %cst_69 {dimension_numbers = #tpu.dot_dimension_numbers<[1], [0], [0], [1], [0, 0, 1, 1], [], []>} : vector<1x30xf32>, vector<30x270xf32>, vector<1x270xf32> -> vector<1x270xf32>
    %c0_70 = arith.constant 0 : index
    %c0_71 = arith.constant 0 : index
    %103 = vector.load %arg12[%c0_70, %c0_71] : memref<18x54xf32, #tpu.memory_space<vmem>>, vector<18x54xf32>
    %c0_72 = arith.constant 0 : index
    %c0_73 = arith.constant 0 : index
    %104 = vector.load %arg17[%c0_72, %c0_73] : memref<54x270xf32, #tpu.memory_space<vmem>>, vector<54x270xf32>
    %cst_74 = arith.constant dense<0.000000e+00> : vector<18x270xf32>
    %105 = tpu.matmul %103, %104, %cst_74 {dimension_numbers = #tpu.dot_dimension_numbers<[1], [0], [0], [1], [0, 0, 1, 1], [], []>} : vector<18x54xf32>, vector<54x270xf32>, vector<18x270xf32> -> vector<18x270xf32>
    %106 = vector.broadcast %100 : vector<1x270xf32> to vector<18x270xf32>
    %107 = arith.mulf %105, %106 : vector<18x270xf32>
    %108 = vector.broadcast %102 : vector<1x270xf32> to vector<18x270xf32>
    %109 = arith.addf %107, %108 : vector<18x270xf32>
    %cst_75 = arith.constant 0.000000e+00 : f32
    %110 = vector.broadcast %cst_75 : f32 to vector<18x270xf32>
    %111 = arith.maximumf %109, %110 : vector<18x270xf32>
    %c0_76 = arith.constant 0 : index
    %c0_77 = arith.constant 0 : index
    %112 = vector.load %arg19[%c0_76, %c0_77] : memref<270x10xf32, #tpu.memory_space<vmem>>, vector<270x10xf32>
    %cst_78 = arith.constant dense<0.000000e+00> : vector<18x10xf32>
    %113 = tpu.matmul %111, %112, %cst_78 {dimension_numbers = #tpu.dot_dimension_numbers<[1], [0], [0], [1], [0, 0, 1, 1], [], []>} : vector<18x270xf32>, vector<270x10xf32>, vector<18x10xf32> -> vector<18x10xf32>
    %c0_79 = arith.constant 0 : index
    %c0_80 = arith.constant 0 : index
    %114 = vector.load %arg20[%c0_79, %c0_80] : memref<1x10xf32, #tpu.memory_space<vmem>>, vector<1x10xf32>
    %115 = vector.broadcast %114 : vector<1x10xf32> to vector<18x10xf32>
    %116 = arith.addf %113, %115 : vector<18x10xf32>
    %cst_81 = arith.constant dense<0.000000e+00> : vector<10xf32>
    %117 = vector.multi_reduction <add>, %116, %cst_81 [0] : vector<18x10xf32> to vector<10xf32>
    %118 = vector.shape_cast %117 : vector<10xf32> to vector<1x10xf32>
    %cst_82 = arith.constant 1.800000e+01 : f32
    %119 = vector.broadcast %cst_82 : f32 to vector<1x10xf32>
    %120 = arith.divf %118, %119 : vector<1x10xf32>
    %121 = vector.broadcast %120 : vector<1x10xf32> to vector<18x10xf32>
    %122 = arith.subf %116, %121 : vector<18x10xf32>
    %123 = arith.mulf %122, %122 : vector<18x10xf32>
    %cst_83 = arith.constant dense<0.000000e+00> : vector<10xf32>
    %124 = vector.multi_reduction <add>, %123, %cst_83 [0] : vector<18x10xf32> to vector<10xf32>
    %125 = vector.shape_cast %124 : vector<10xf32> to vector<1x10xf32>
    %cst_84 = arith.constant 1.800000e+01 : f32
    %126 = vector.broadcast %cst_84 : f32 to vector<1x10xf32>
    %127 = arith.divf %125, %126 : vector<1x10xf32>
    %128 = vector.broadcast %120 : vector<1x10xf32> to vector<18x10xf32>
    %129 = arith.subf %116, %128 : vector<18x10xf32>
    %cst_85 = arith.constant 9.99999974E-6 : f32
    %130 = vector.broadcast %cst_85 : f32 to vector<1x10xf32>
    %131 = arith.addf %127, %130 : vector<1x10xf32>
    %132 = math.rsqrt %131 : vector<1x10xf32>
    %133 = vector.broadcast %132 : vector<1x10xf32> to vector<18x10xf32>
    %134 = arith.mulf %129, %133 : vector<18x10xf32>
    %c0_86 = arith.constant 0 : index
    %c0_87 = arith.constant 0 : index
    %135 = vector.load %arg21[%c0_86, %c0_87] : memref<1x10xf32, #tpu.memory_space<vmem>>, vector<1x10xf32>
    %136 = vector.broadcast %135 : vector<1x10xf32> to vector<18x10xf32>
    %137 = arith.mulf %134, %136 : vector<18x10xf32>
    %c0_88 = arith.constant 0 : index
    %c0_89 = arith.constant 0 : index
    %138 = vector.load %arg22[%c0_88, %c0_89] : memref<1x10xf32, #tpu.memory_space<vmem>>, vector<1x10xf32>
    %139 = vector.broadcast %138 : vector<1x10xf32> to vector<18x10xf32>
    %140 = arith.addf %137, %139 : vector<18x10xf32>
    %cst_90 = arith.constant 0.000000e+00 : f32
    %141 = vector.broadcast %cst_90 : f32 to vector<18x10xf32>
    %142 = arith.maximumf %140, %141 : vector<18x10xf32>
    %c0_91 = arith.constant 0 : index
    %c0_92 = arith.constant 0 : index
    %143 = vector.load %arg23[%c0_91, %c0_92] : memref<10x144xf32, #tpu.memory_space<vmem>>, vector<10x144xf32>
    %cst_93 = arith.constant dense<0.000000e+00> : vector<18x144xf32>
    %144 = tpu.matmul %142, %143, %cst_93 {dimension_numbers = #tpu.dot_dimension_numbers<[1], [0], [0], [1], [0, 0, 1, 1], [], []>} : vector<18x10xf32>, vector<10x144xf32>, vector<18x144xf32> -> vector<18x144xf32>
    %c0_94 = arith.constant 0 : index
    %c0_95 = arith.constant 0 : index
    %145 = vector.load %arg25[%c0_94, %c0_95] : memref<18x144xf32, #tpu.memory_space<vmem>>, vector<18x144xf32>
    %146 = arith.mulf %144, %145 : vector<18x144xf32>
    %c0_96 = arith.constant 0 : index
    %c0_97 = arith.constant 0 : index
    %147 = vector.load %arg27[%c0_96, %c0_97] : memref<144x16xf32, #tpu.memory_space<vmem>>, vector<144x16xf32>
    %cst_98 = arith.constant dense<0.000000e+00> : vector<18x16xf32>
    %148 = tpu.matmul %146, %147, %cst_98 {dimension_numbers = #tpu.dot_dimension_numbers<[1], [0], [0], [1], [0, 0, 1, 1], [], []>} : vector<18x144xf32>, vector<144x16xf32>, vector<18x16xf32> -> vector<18x16xf32>
    %c0_99 = arith.constant 0 : index
    %c0_100 = arith.constant 0 : index
    %149 = vector.load %arg26[%c0_99, %c0_100] : memref<2x18xf32, #tpu.memory_space<vmem>>, vector<2x18xf32>
    %cst_101 = arith.constant dense<0.000000e+00> : vector<2x16xf32>
    %150 = tpu.matmul %149, %148, %cst_101 {dimension_numbers = #tpu.dot_dimension_numbers<[1], [0], [0], [1], [0, 0, 1, 1], [], []>} : vector<2x18xf32>, vector<18x16xf32>, vector<2x16xf32> -> vector<2x16xf32>
    %c0_102 = arith.constant 0 : index
    %c0_103 = arith.constant 0 : index
    %151 = vector.load %arg24[%c0_102, %c0_103] : memref<1x16xf32, #tpu.memory_space<vmem>>, vector<1x16xf32>
    %152 = vector.broadcast %151 : vector<1x16xf32> to vector<2x16xf32>
    %153 = arith.addf %150, %152 : vector<2x16xf32>
    %cst_104 = arith.constant 0.000000e+00 : f32
    %154 = vector.broadcast %cst_104 : f32 to vector<2x16xf32>
    %155 = arith.subf %154, %153 : vector<2x16xf32>
    %156 = math.exp %155 : vector<2x16xf32>
    %cst_105 = arith.constant 1.000000e+00 : f32
    %157 = vector.broadcast %cst_105 : f32 to vector<2x16xf32>
    %158 = arith.addf %157, %156 : vector<2x16xf32>
    %159 = tpu.reciprocal %158 {approx = true} : vector<2x16xf32> -> vector<2x16xf32>
    %c0_106 = arith.constant 0 : index
    %c0_107 = arith.constant 0 : index
    %160 = vector.load %arg36[%c0_106, %c0_107] : memref<2x16xf32, #tpu.memory_space<vmem>>, vector<2x16xf32>
    tpu.vector_store %arg36[%c0_106, %c0_107], %159 {strides = array<i32>} : memref<2x16xf32, #tpu.memory_space<vmem>>, vector<2x16xf32>,
    %c0_108 = arith.constant 0 : index
    %c0_109 = arith.constant 0 : index
    %161 = vector.load %arg28[%c0_108, %c0_109] : memref<16x32xf32, #tpu.memory_space<vmem>>, vector<16x32xf32>
    %cst_110 = arith.constant dense<0.000000e+00> : vector<2x32xf32>
    %162 = tpu.matmul %69, %161, %cst_110 {dimension_numbers = #tpu.dot_dimension_numbers<[1], [0], [0], [1], [0, 0, 1, 1], [], []>} : vector<2x16xf32>, vector<16x32xf32>, vector<2x32xf32> -> vector<2x32xf32>
    %c0_111 = arith.constant 0 : index
    %c0_112 = arith.constant 0 : index
    %163 = vector.load %arg29[%c0_111, %c0_112] : memref<16x32xf32, #tpu.memory_space<vmem>>, vector<16x32xf32>
    %cst_113 = arith.constant dense<0.000000e+00> : vector<2x32xf32>
    %164 = tpu.matmul %159, %163, %cst_113 {dimension_numbers = #tpu.dot_dimension_numbers<[1], [0], [0], [1], [0, 0, 1, 1], [], []>} : vector<2x16xf32>, vector<16x32xf32>, vector<2x32xf32> -> vector<2x32xf32>
    %165 = arith.addf %162, %164 : vector<2x32xf32>
    %c0_114 = arith.constant 0 : index
    %c0_115 = arith.constant 0 : index
    %166 = vector.load %arg35[%c0_114, %c0_115] : memref<2x32xf32, #tpu.memory_space<vmem>>, vector<2x32xf32>
    tpu.vector_store %arg35[%c0_114, %c0_115], %165 {strides = array<i32>} : memref<2x32xf32, #tpu.memory_space<vmem>>, vector<2x32xf32>,
    %c0_116 = arith.constant 0 : index
    %c0_117 = arith.constant 0 : index
    %167 = vector.load %arg30[%c0_116, %c0_117] : memref<32x3xf32, #tpu.memory_space<vmem>>, vector<32x3xf32>
    %cst_118 = arith.constant dense<0.000000e+00> : vector<2x3xf32>
    %168 = tpu.matmul %165, %167, %cst_118 {dimension_numbers = #tpu.dot_dimension_numbers<[1], [0], [0], [1], [0, 0, 1, 1], [], []>} : vector<2x32xf32>, vector<32x3xf32>, vector<2x3xf32> -> vector<2x3xf32>
    %c0_119 = arith.constant 0 : index
    %c0_120 = arith.constant 0 : index
    %169 = vector.load %arg31[%c0_119, %c0_120] : memref<1x3xf32, #tpu.memory_space<vmem>>, vector<1x3xf32>
    %170 = vector.broadcast %169 : vector<1x3xf32> to vector<2x3xf32>
    %171 = arith.addf %168, %170 : vector<2x3xf32>
    %c0_121 = arith.constant 0 : index
    %c0_122 = arith.constant 0 : index
    %172 = vector.load %arg40[%c0_121, %c0_122] : memref<2x3xf32, #tpu.memory_space<vmem>>, vector<2x3xf32>
    tpu.vector_store %arg40[%c0_121, %c0_122], %171 {strides = array<i32>} : memref<2x3xf32, #tpu.memory_space<vmem>>, vector<2x3xf32>,
    return
  }
}

module attributes {stable_mosaic.version = 11 : i64} {
  func.func @_branch_kernel(%arg0: memref<2x4xf32, #tpu.memory_space<vmem>>, %arg1: memref<4x64xf32, #tpu.memory_space<vmem>>, %arg2: memref<1x64xf32, #tpu.memory_space<vmem>>, %arg3: memref<32x4xf32, #tpu.memory_space<vmem>>, %arg4: memref<1x4xf32, #tpu.memory_space<vmem>>, %arg5: memref<32x32xf32, #tpu.memory_space<vmem>>, %arg6: memref<1x32xf32, #tpu.memory_space<vmem>>, %arg7: memref<16x32xf32, #tpu.memory_space<vmem>>, %arg8: memref<1x32xf32, #tpu.memory_space<vmem>>, %arg9: memref<2x32xf32, #tpu.memory_space<vmem>>, %arg10: memref<2x16xf32, #tpu.memory_space<vmem>>, %arg11: memref<50x4xf32, #tpu.memory_space<vmem>>, %arg12: memref<18x36xf32, #tpu.memory_space<vmem>>, %arg13: memref<4x30xf32, #tpu.memory_space<vmem>>, %arg14: memref<1x30xf32, #tpu.memory_space<vmem>>, %arg15: memref<1x30xf32, #tpu.memory_space<vmem>>, %arg16: memref<1x30xf32, #tpu.memory_space<vmem>>, %arg17: memref<36x270xf32, #tpu.memory_space<vmem>>, %arg18: memref<30x270xf32, #tpu.memory_space<vmem>>, %arg19: memref<270x10xf32, #tpu.memory_space<vmem>>, %arg20: memref<1x10xf32, #tpu.memory_space<vmem>>, %arg21: memref<1x10xf32, #tpu.memory_space<vmem>>, %arg22: memref<1x10xf32, #tpu.memory_space<vmem>>, %arg23: memref<10x144xf32, #tpu.memory_space<vmem>>, %arg24: memref<1x16xf32, #tpu.memory_space<vmem>>, %arg25: memref<18x144xf32, #tpu.memory_space<vmem>>, %arg26: memref<2x18xf32, #tpu.memory_space<vmem>>, %arg27: memref<144x16xf32, #tpu.memory_space<vmem>>, %arg28: memref<16x32xf32, #tpu.memory_space<vmem>>, %arg29: memref<16x32xf32, #tpu.memory_space<vmem>>, %arg30: memref<32x3xf32, #tpu.memory_space<vmem>>, %arg31: memref<1x3xf32, #tpu.memory_space<vmem>>, %arg32: memref<2x32xf32, #tpu.memory_space<vmem>>, %arg33: memref<2x4xf32, #tpu.memory_space<vmem>>, %arg34: memref<1x1xf32, #tpu.memory_space<vmem>>, %arg35: memref<2x32xf32, #tpu.memory_space<vmem>>, %arg36: memref<2x16xf32, #tpu.memory_space<vmem>>, %arg37: memref<2x16xf32, #tpu.memory_space<vmem>>, %arg38: memref<2x32xf32, #tpu.memory_space<vmem>>, %arg39: memref<1x1xf32, #tpu.memory_space<vmem>>, %arg40: memref<2x3xf32, #tpu.memory_space<vmem>>) attributes {dimension_semantics = [], scalar_prefetch = 0 : i64, scratch_operands = 0 : i64, tpu.core_type = #tpu.core_type<tc>} {
    %c0 = arith.constant 0 : index
    %c0_0 = arith.constant 0 : index
    %0 = vector.load %arg0[%c0, %c0_0] : memref<2x4xf32, #tpu.memory_space<vmem>>, vector<2x4xf32>
    %c0_1 = arith.constant 0 : index
    %c0_2 = arith.constant 0 : index
    %1 = vector.load %arg1[%c0_1, %c0_2] : memref<4x64xf32, #tpu.memory_space<vmem>>, vector<4x64xf32>
    %cst = arith.constant dense<0.000000e+00> : vector<2x64xf32>
    %2 = tpu.matmul %0, %1, %cst {dimension_numbers = #tpu.dot_dimension_numbers<[1], [0], [0], [1], [0, 0, 1, 1], [], []>} : vector<2x4xf32>, vector<4x64xf32>, vector<2x64xf32> -> vector<2x64xf32>
    %c0_3 = arith.constant 0 : index
    %c0_4 = arith.constant 0 : index
    %3 = vector.load %arg2[%c0_3, %c0_4] : memref<1x64xf32, #tpu.memory_space<vmem>>, vector<1x64xf32>
    %4 = vector.broadcast %3 : vector<1x64xf32> to vector<2x64xf32>
    %5 = arith.addf %2, %4 : vector<2x64xf32>
    %6 = vector.extract_strided_slice %5 {offsets = [0, 0], sizes = [2, 32], strides = [1, 1]} : vector<2x64xf32> to vector<2x32xf32>
    %7 = vector.extract_strided_slice %5 {offsets = [0, 32], sizes = [2, 32], strides = [1, 1]} : vector<2x64xf32> to vector<2x32xf32>
    %8 = math.exp %7 : vector<2x32xf32>
    %9 = math.sqrt %8 : vector<2x32xf32>
    %c0_5 = arith.constant 0 : index
    %c0_6 = arith.constant 0 : index
    %10 = vector.load %arg9[%c0_5, %c0_6] : memref<2x32xf32, #tpu.memory_space<vmem>>, vector<2x32xf32>
    %11 = arith.mulf %9, %10 : vector<2x32xf32>
    %12 = arith.addf %6, %11 : vector<2x32xf32>
    %c0_7 = arith.constant 0 : index
    %c0_8 = arith.constant 0 : index
    %13 = vector.load %arg32[%c0_7, %c0_8] : memref<2x32xf32, #tpu.memory_space<vmem>>, vector<2x32xf32>
    tpu.vector_store %arg32[%c0_7, %c0_8], %12 {strides = array<i32>} : memref<2x32xf32, #tpu.memory_space<vmem>>, vector<2x32xf32>,
    %c0_9 = arith.constant 0 : index
    %c0_10 = arith.constant 0 : index
    %14 = vector.load %arg3[%c0_9, %c0_10] : memref<32x4xf32, #tpu.memory_space<vmem>>, vector<32x4xf32>
    %cst_11 = arith.constant dense<0.000000e+00> : vector<2x4xf32>
    %15 = tpu.matmul %12, %14, %cst_11 {dimension_numbers = #tpu.dot_dimension_numbers<[1], [0], [0], [1], [0, 0, 1, 1], [], []>} : vector<2x32xf32>, vector<32x4xf32>, vector<2x4xf32> -> vector<2x4xf32>
    %c0_12 = arith.constant 0 : index
    %c0_13 = arith.constant 0 : index
    %16 = vector.load %arg4[%c0_12, %c0_13] : memref<1x4xf32, #tpu.memory_space<vmem>>, vector<1x4xf32>
    %17 = vector.broadcast %16 : vector<1x4xf32> to vector<2x4xf32>
    %18 = arith.addf %15, %17 : vector<2x4xf32>
    %19 = math.tanh %18 : vector<2x4xf32>
    %c0_14 = arith.constant 0 : index
    %c0_15 = arith.constant 0 : index
    %20 = vector.load %arg33[%c0_14, %c0_15] : memref<2x4xf32, #tpu.memory_space<vmem>>, vector<2x4xf32>
    tpu.vector_store %arg33[%c0_14, %c0_15], %19 {strides = array<i32>} : memref<2x4xf32, #tpu.memory_space<vmem>>, vector<2x4xf32>,
    %cst_16 = arith.constant 1.000000e+00 : f32
    %21 = vector.broadcast %cst_16 : f32 to vector<2x32xf32>
    %22 = arith.addf %21, %7 : vector<2x32xf32>
    %23 = arith.mulf %6, %6 : vector<2x32xf32>
    %24 = arith.subf %22, %23 : vector<2x32xf32>
    %25 = arith.subf %24, %8 : vector<2x32xf32>
    %cst_17 = arith.constant dense<0.000000e+00> : vector<2xf32>
    %26 = vector.multi_reduction <add>, %25, %cst_17 [1] : vector<2x32xf32> to vector<2xf32>
    %27 = vector.shape_cast %26 : vector<2xf32> to vector<2x1xf32>
    %cst_18 = arith.constant dense<0.000000e+00> : vector<1xf32>
    %28 = vector.multi_reduction <add>, %27, %cst_18 [0] : vector<2x1xf32> to vector<1xf32>
    %29 = vector.shape_cast %28 : vector<1xf32> to vector<1x1xf32>
    %cst_19 = arith.constant -6.250000e-02 : f32
    %30 = vector.broadcast %cst_19 : f32 to vector<1x1xf32>
    %31 = arith.mulf %30, %29 : vector<1x1xf32>
    %c0_20 = arith.constant 0 : index
    %c0_21 = arith.constant 0 : index
    %32 = vector.load %arg34[%c0_20, %c0_21] : memref<1x1xf32, #tpu.memory_space<vmem>>, vector<1x1xf32>
    tpu.vector_store %arg34[%c0_20, %c0_21], %31 {strides = array<i32>} : memref<1x1xf32, #tpu.memory_space<vmem>>, vector<1x1xf32>,
    %c0_22 = arith.constant 0 : index
    %c0_23 = arith.constant 0 : index
    %33 = vector.load %arg5[%c0_22, %c0_23] : memref<32x32xf32, #tpu.memory_space<vmem>>, vector<32x32xf32>
    %cst_24 = arith.constant dense<0.000000e+00> : vector<2x32xf32>
    %34 = tpu.matmul %12, %33, %cst_24 {dimension_numbers = #tpu.dot_dimension_numbers<[1], [0], [0], [1], [0, 0, 1, 1], [], []>} : vector<2x32xf32>, vector<32x32xf32>, vector<2x32xf32> -> vector<2x32xf32>
    %c0_25 = arith.constant 0 : index
    %c0_26 = arith.constant 0 : index
    %35 = vector.load %arg6[%c0_25, %c0_26] : memref<1x32xf32, #tpu.memory_space<vmem>>, vector<1x32xf32>
    %36 = vector.broadcast %35 : vector<1x32xf32> to vector<2x32xf32>
    %37 = arith.addf %34, %36 : vector<2x32xf32>
    %38 = vector.extract_strided_slice %37 {offsets = [0, 0], sizes = [2, 16], strides = [1, 1]} : vector<2x32xf32> to vector<2x16xf32>
    %39 = vector.extract_strided_slice %37 {offsets = [0, 16], sizes = [2, 16], strides = [1, 1]} : vector<2x32xf32> to vector<2x16xf32>
    %40 = math.exp %39 : vector<2x16xf32>
    %41 = math.sqrt %40 : vector<2x16xf32>
    %c0_27 = arith.constant 0 : index
    %c0_28 = arith.constant 0 : index
    %42 = vector.load %arg10[%c0_27, %c0_28] : memref<2x16xf32, #tpu.memory_space<vmem>>, vector<2x16xf32>
    %43 = arith.mulf %41, %42 : vector<2x16xf32>
    %44 = arith.addf %38, %43 : vector<2x16xf32>
    %c0_29 = arith.constant 0 : index
    %c0_30 = arith.constant 0 : index
    %45 = vector.load %arg7[%c0_29, %c0_30] : memref<16x32xf32, #tpu.memory_space<vmem>>, vector<16x32xf32>
    %cst_31 = arith.constant dense<0.000000e+00> : vector<2x32xf32>
    %46 = tpu.matmul %44, %45, %cst_31 {dimension_numbers = #tpu.dot_dimension_numbers<[1], [0], [0], [1], [0, 0, 1, 1], [], []>} : vector<2x16xf32>, vector<16x32xf32>, vector<2x32xf32> -> vector<2x32xf32>
    %c0_32 = arith.constant 0 : index
    %c0_33 = arith.constant 0 : index
    %47 = vector.load %arg8[%c0_32, %c0_33] : memref<1x32xf32, #tpu.memory_space<vmem>>, vector<1x32xf32>
    %48 = vector.broadcast %47 : vector<1x32xf32> to vector<2x32xf32>
    %49 = arith.addf %46, %48 : vector<2x32xf32>
    %50 = math.tanh %49 : vector<2x32xf32>
    %c0_34 = arith.constant 0 : index
    %c0_35 = arith.constant 0 : index
    %51 = vector.load %arg38[%c0_34, %c0_35] : memref<2x32xf32, #tpu.memory_space<vmem>>, vector<2x32xf32>
    tpu.vector_store %arg38[%c0_34, %c0_35], %50 {strides = array<i32>} : memref<2x32xf32, #tpu.memory_space<vmem>>, vector<2x32xf32>,
    %cst_36 = arith.constant 1.000000e+00 : f32
    %52 = vector.broadcast %cst_36 : f32 to vector<2x16xf32>
    %53 = arith.addf %52, %39 : vector<2x16xf32>
    %54 = arith.mulf %38, %38 : vector<2x16xf32>
    %55 = arith.subf %53, %54 : vector<2x16xf32>
    %56 = arith.subf %55, %40 : vector<2x16xf32>
    %cst_37 = arith.constant dense<0.000000e+00> : vector<2xf32>
    %57 = vector.multi_reduction <add>, %56, %cst_37 [1] : vector<2x16xf32> to vector<2xf32>
    %58 = vector.shape_cast %57 : vector<2xf32> to vector<2x1xf32>
    %cst_38 = arith.constant dense<0.000000e+00> : vector<1xf32>
    %59 = vector.multi_reduction <add>, %58, %cst_38 [0] : vector<2x1xf32> to vector<1xf32>
    %60 = vector.shape_cast %59 : vector<1xf32> to vector<1x1xf32>
    %cst_39 = arith.constant -7.812500e-03 : f32
    %61 = vector.broadcast %cst_39 : f32 to vector<1x1xf32>
    %62 = arith.mulf %61, %60 : vector<1x1xf32>
    %c0_40 = arith.constant 0 : index
    %c0_41 = arith.constant 0 : index
    %63 = vector.load %arg39[%c0_40, %c0_41] : memref<1x1xf32, #tpu.memory_space<vmem>>, vector<1x1xf32>
    tpu.vector_store %arg39[%c0_40, %c0_41], %62 {strides = array<i32>} : memref<1x1xf32, #tpu.memory_space<vmem>>, vector<1x1xf32>,
    %cst_42 = arith.constant 0.000000e+00 : f32
    %64 = vector.broadcast %cst_42 : f32 to vector<2x16xf32>
    %65 = arith.subf %64, %44 : vector<2x16xf32>
    %66 = math.exp %65 : vector<2x16xf32>
    %cst_43 = arith.constant 1.000000e+00 : f32
    %67 = vector.broadcast %cst_43 : f32 to vector<2x16xf32>
    %68 = arith.addf %67, %66 : vector<2x16xf32>
    %69 = tpu.reciprocal %68 {approx = true} : vector<2x16xf32> -> vector<2x16xf32>
    %c0_44 = arith.constant 0 : index
    %c0_45 = arith.constant 0 : index
    %70 = vector.load %arg37[%c0_44, %c0_45] : memref<2x16xf32, #tpu.memory_space<vmem>>, vector<2x16xf32>
    tpu.vector_store %arg37[%c0_44, %c0_45], %69 {strides = array<i32>} : memref<2x16xf32, #tpu.memory_space<vmem>>, vector<2x16xf32>,
    %c0_46 = arith.constant 0 : index
    %c0_47 = arith.constant 0 : index
    %71 = vector.load %arg11[%c0_46, %c0_47] : memref<50x4xf32, #tpu.memory_space<vmem>>, vector<50x4xf32>
    %c0_48 = arith.constant 0 : index
    %c0_49 = arith.constant 0 : index
    %72 = vector.load %arg13[%c0_48, %c0_49] : memref<4x30xf32, #tpu.memory_space<vmem>>, vector<4x30xf32>
    %cst_50 = arith.constant dense<0.000000e+00> : vector<50x30xf32>
    %73 = tpu.matmul %71, %72, %cst_50 {dimension_numbers = #tpu.dot_dimension_numbers<[1], [0], [0], [1], [0, 0, 1, 1], [], []>} : vector<50x4xf32>, vector<4x30xf32>, vector<50x30xf32> -> vector<50x30xf32>
    %c0_51 = arith.constant 0 : index
    %c0_52 = arith.constant 0 : index
    %74 = vector.load %arg14[%c0_51, %c0_52] : memref<1x30xf32, #tpu.memory_space<vmem>>, vector<1x30xf32>
    %75 = vector.broadcast %74 : vector<1x30xf32> to vector<50x30xf32>
    %76 = arith.addf %73, %75 : vector<50x30xf32>
    %cst_53 = arith.constant dense<0.000000e+00> : vector<30xf32>
    %77 = vector.multi_reduction <add>, %76, %cst_53 [0] : vector<50x30xf32> to vector<30xf32>
    %78 = vector.shape_cast %77 : vector<30xf32> to vector<1x30xf32>
    %cst_54 = arith.constant 5.000000e+01 : f32
    %79 = vector.broadcast %cst_54 : f32 to vector<1x30xf32>
    %80 = arith.divf %78, %79 : vector<1x30xf32>
    %81 = vector.broadcast %80 : vector<1x30xf32> to vector<50x30xf32>
    %82 = arith.subf %76, %81 : vector<50x30xf32>
    %83 = arith.mulf %82, %82 : vector<50x30xf32>
    %cst_55 = arith.constant dense<0.000000e+00> : vector<30xf32>
    %84 = vector.multi_reduction <add>, %83, %cst_55 [0] : vector<50x30xf32> to vector<30xf32>
    %85 = vector.shape_cast %84 : vector<30xf32> to vector<1x30xf32>
    %cst_56 = arith.constant 5.000000e+01 : f32
    %86 = vector.broadcast %cst_56 : f32 to vector<1x30xf32>
    %87 = arith.divf %85, %86 : vector<1x30xf32>
    %c0_57 = arith.constant 0 : index
    %c0_58 = arith.constant 0 : index
    %88 = vector.load %arg15[%c0_57, %c0_58] : memref<1x30xf32, #tpu.memory_space<vmem>>, vector<1x30xf32>
    %cst_59 = arith.constant 9.99999974E-6 : f32
    %89 = vector.broadcast %cst_59 : f32 to vector<1x30xf32>
    %90 = arith.addf %87, %89 : vector<1x30xf32>
    %91 = math.rsqrt %90 : vector<1x30xf32>
    %92 = arith.mulf %88, %91 : vector<1x30xf32>
    %c0_60 = arith.constant 0 : index
    %c0_61 = arith.constant 0 : index
    %93 = vector.load %arg16[%c0_60, %c0_61] : memref<1x30xf32, #tpu.memory_space<vmem>>, vector<1x30xf32>
    %94 = arith.mulf %80, %92 : vector<1x30xf32>
    %95 = arith.subf %93, %94 : vector<1x30xf32>
    %c0_62 = arith.constant 0 : index
    %c0_63 = arith.constant 0 : index
    %96 = vector.load %arg14[%c0_62, %c0_63] : memref<1x30xf32, #tpu.memory_space<vmem>>, vector<1x30xf32>
    %97 = arith.mulf %96, %92 : vector<1x30xf32>
    %98 = arith.addf %95, %97 : vector<1x30xf32>
    %c0_64 = arith.constant 0 : index
    %c0_65 = arith.constant 0 : index
    %99 = vector.load %arg18[%c0_64, %c0_65] : memref<30x270xf32, #tpu.memory_space<vmem>>, vector<30x270xf32>
    %cst_66 = arith.constant dense<0.000000e+00> : vector<1x270xf32>
    %100 = tpu.matmul %92, %99, %cst_66 {dimension_numbers = #tpu.dot_dimension_numbers<[1], [0], [0], [1], [0, 0, 1, 1], [], []>} : vector<1x30xf32>, vector<30x270xf32>, vector<1x270xf32> -> vector<1x270xf32>
    %c0_67 = arith.constant 0 : index
    %c0_68 = arith.constant 0 : index
    %101 = vector.load %arg18[%c0_67, %c0_68] : memref<30x270xf32, #tpu.memory_space<vmem>>, vector<30x270xf32>
    %cst_69 = arith.constant dense<0.000000e+00> : vector<1x270xf32>
    %102 = tpu.matmul %98, %101, %cst_69 {dimension_numbers = #tpu.dot_dimension_numbers<[1], [0], [0], [1], [0, 0, 1, 1], [], []>} : vector<1x30xf32>, vector<30x270xf32>, vector<1x270xf32> -> vector<1x270xf32>
    %c0_70 = arith.constant 0 : index
    %c0_71 = arith.constant 0 : index
    %103 = vector.load %arg12[%c0_70, %c0_71] : memref<18x36xf32, #tpu.memory_space<vmem>>, vector<18x36xf32>
    %c0_72 = arith.constant 0 : index
    %c0_73 = arith.constant 0 : index
    %104 = vector.load %arg17[%c0_72, %c0_73] : memref<36x270xf32, #tpu.memory_space<vmem>>, vector<36x270xf32>
    %cst_74 = arith.constant dense<0.000000e+00> : vector<18x270xf32>
    %105 = tpu.matmul %103, %104, %cst_74 {dimension_numbers = #tpu.dot_dimension_numbers<[1], [0], [0], [1], [0, 0, 1, 1], [], []>} : vector<18x36xf32>, vector<36x270xf32>, vector<18x270xf32> -> vector<18x270xf32>
    %106 = vector.broadcast %100 : vector<1x270xf32> to vector<18x270xf32>
    %107 = arith.mulf %105, %106 : vector<18x270xf32>
    %108 = vector.broadcast %102 : vector<1x270xf32> to vector<18x270xf32>
    %109 = arith.addf %107, %108 : vector<18x270xf32>
    %cst_75 = arith.constant 0.000000e+00 : f32
    %110 = vector.broadcast %cst_75 : f32 to vector<18x270xf32>
    %111 = arith.maximumf %109, %110 : vector<18x270xf32>
    %c0_76 = arith.constant 0 : index
    %c0_77 = arith.constant 0 : index
    %112 = vector.load %arg19[%c0_76, %c0_77] : memref<270x10xf32, #tpu.memory_space<vmem>>, vector<270x10xf32>
    %cst_78 = arith.constant dense<0.000000e+00> : vector<18x10xf32>
    %113 = tpu.matmul %111, %112, %cst_78 {dimension_numbers = #tpu.dot_dimension_numbers<[1], [0], [0], [1], [0, 0, 1, 1], [], []>} : vector<18x270xf32>, vector<270x10xf32>, vector<18x10xf32> -> vector<18x10xf32>
    %c0_79 = arith.constant 0 : index
    %c0_80 = arith.constant 0 : index
    %114 = vector.load %arg20[%c0_79, %c0_80] : memref<1x10xf32, #tpu.memory_space<vmem>>, vector<1x10xf32>
    %115 = vector.broadcast %114 : vector<1x10xf32> to vector<18x10xf32>
    %116 = arith.addf %113, %115 : vector<18x10xf32>
    %cst_81 = arith.constant dense<0.000000e+00> : vector<10xf32>
    %117 = vector.multi_reduction <add>, %116, %cst_81 [0] : vector<18x10xf32> to vector<10xf32>
    %118 = vector.shape_cast %117 : vector<10xf32> to vector<1x10xf32>
    %cst_82 = arith.constant 1.800000e+01 : f32
    %119 = vector.broadcast %cst_82 : f32 to vector<1x10xf32>
    %120 = arith.divf %118, %119 : vector<1x10xf32>
    %121 = vector.broadcast %120 : vector<1x10xf32> to vector<18x10xf32>
    %122 = arith.subf %116, %121 : vector<18x10xf32>
    %123 = arith.mulf %122, %122 : vector<18x10xf32>
    %cst_83 = arith.constant dense<0.000000e+00> : vector<10xf32>
    %124 = vector.multi_reduction <add>, %123, %cst_83 [0] : vector<18x10xf32> to vector<10xf32>
    %125 = vector.shape_cast %124 : vector<10xf32> to vector<1x10xf32>
    %cst_84 = arith.constant 1.800000e+01 : f32
    %126 = vector.broadcast %cst_84 : f32 to vector<1x10xf32>
    %127 = arith.divf %125, %126 : vector<1x10xf32>
    %128 = vector.broadcast %120 : vector<1x10xf32> to vector<18x10xf32>
    %129 = arith.subf %116, %128 : vector<18x10xf32>
    %cst_85 = arith.constant 9.99999974E-6 : f32
    %130 = vector.broadcast %cst_85 : f32 to vector<1x10xf32>
    %131 = arith.addf %127, %130 : vector<1x10xf32>
    %132 = math.rsqrt %131 : vector<1x10xf32>
    %133 = vector.broadcast %132 : vector<1x10xf32> to vector<18x10xf32>
    %134 = arith.mulf %129, %133 : vector<18x10xf32>
    %c0_86 = arith.constant 0 : index
    %c0_87 = arith.constant 0 : index
    %135 = vector.load %arg21[%c0_86, %c0_87] : memref<1x10xf32, #tpu.memory_space<vmem>>, vector<1x10xf32>
    %136 = vector.broadcast %135 : vector<1x10xf32> to vector<18x10xf32>
    %137 = arith.mulf %134, %136 : vector<18x10xf32>
    %c0_88 = arith.constant 0 : index
    %c0_89 = arith.constant 0 : index
    %138 = vector.load %arg22[%c0_88, %c0_89] : memref<1x10xf32, #tpu.memory_space<vmem>>, vector<1x10xf32>
    %139 = vector.broadcast %138 : vector<1x10xf32> to vector<18x10xf32>
    %140 = arith.addf %137, %139 : vector<18x10xf32>
    %cst_90 = arith.constant 0.000000e+00 : f32
    %141 = vector.broadcast %cst_90 : f32 to vector<18x10xf32>
    %142 = arith.maximumf %140, %141 : vector<18x10xf32>
    %c0_91 = arith.constant 0 : index
    %c0_92 = arith.constant 0 : index
    %143 = vector.load %arg23[%c0_91, %c0_92] : memref<10x144xf32, #tpu.memory_space<vmem>>, vector<10x144xf32>
    %cst_93 = arith.constant dense<0.000000e+00> : vector<18x144xf32>
    %144 = tpu.matmul %142, %143, %cst_93 {dimension_numbers = #tpu.dot_dimension_numbers<[1], [0], [0], [1], [0, 0, 1, 1], [], []>} : vector<18x10xf32>, vector<10x144xf32>, vector<18x144xf32> -> vector<18x144xf32>
    %c0_94 = arith.constant 0 : index
    %c0_95 = arith.constant 0 : index
    %145 = vector.load %arg25[%c0_94, %c0_95] : memref<18x144xf32, #tpu.memory_space<vmem>>, vector<18x144xf32>
    %146 = arith.mulf %144, %145 : vector<18x144xf32>
    %c0_96 = arith.constant 0 : index
    %c0_97 = arith.constant 0 : index
    %147 = vector.load %arg27[%c0_96, %c0_97] : memref<144x16xf32, #tpu.memory_space<vmem>>, vector<144x16xf32>
    %cst_98 = arith.constant dense<0.000000e+00> : vector<18x16xf32>
    %148 = tpu.matmul %146, %147, %cst_98 {dimension_numbers = #tpu.dot_dimension_numbers<[1], [0], [0], [1], [0, 0, 1, 1], [], []>} : vector<18x144xf32>, vector<144x16xf32>, vector<18x16xf32> -> vector<18x16xf32>
    %c0_99 = arith.constant 0 : index
    %c0_100 = arith.constant 0 : index
    %149 = vector.load %arg26[%c0_99, %c0_100] : memref<2x18xf32, #tpu.memory_space<vmem>>, vector<2x18xf32>
    %cst_101 = arith.constant dense<0.000000e+00> : vector<2x16xf32>
    %150 = tpu.matmul %149, %148, %cst_101 {dimension_numbers = #tpu.dot_dimension_numbers<[1], [0], [0], [1], [0, 0, 1, 1], [], []>} : vector<2x18xf32>, vector<18x16xf32>, vector<2x16xf32> -> vector<2x16xf32>
    %c0_102 = arith.constant 0 : index
    %c0_103 = arith.constant 0 : index
    %151 = vector.load %arg24[%c0_102, %c0_103] : memref<1x16xf32, #tpu.memory_space<vmem>>, vector<1x16xf32>
    %152 = vector.broadcast %151 : vector<1x16xf32> to vector<2x16xf32>
    %153 = arith.addf %150, %152 : vector<2x16xf32>
    %cst_104 = arith.constant 0.000000e+00 : f32
    %154 = vector.broadcast %cst_104 : f32 to vector<2x16xf32>
    %155 = arith.subf %154, %153 : vector<2x16xf32>
    %156 = math.exp %155 : vector<2x16xf32>
    %cst_105 = arith.constant 1.000000e+00 : f32
    %157 = vector.broadcast %cst_105 : f32 to vector<2x16xf32>
    %158 = arith.addf %157, %156 : vector<2x16xf32>
    %159 = tpu.reciprocal %158 {approx = true} : vector<2x16xf32> -> vector<2x16xf32>
    %c0_106 = arith.constant 0 : index
    %c0_107 = arith.constant 0 : index
    %160 = vector.load %arg36[%c0_106, %c0_107] : memref<2x16xf32, #tpu.memory_space<vmem>>, vector<2x16xf32>
    tpu.vector_store %arg36[%c0_106, %c0_107], %159 {strides = array<i32>} : memref<2x16xf32, #tpu.memory_space<vmem>>, vector<2x16xf32>,
    %c0_108 = arith.constant 0 : index
    %c0_109 = arith.constant 0 : index
    %161 = vector.load %arg28[%c0_108, %c0_109] : memref<16x32xf32, #tpu.memory_space<vmem>>, vector<16x32xf32>
    %cst_110 = arith.constant dense<0.000000e+00> : vector<2x32xf32>
    %162 = tpu.matmul %69, %161, %cst_110 {dimension_numbers = #tpu.dot_dimension_numbers<[1], [0], [0], [1], [0, 0, 1, 1], [], []>} : vector<2x16xf32>, vector<16x32xf32>, vector<2x32xf32> -> vector<2x32xf32>
    %c0_111 = arith.constant 0 : index
    %c0_112 = arith.constant 0 : index
    %163 = vector.load %arg29[%c0_111, %c0_112] : memref<16x32xf32, #tpu.memory_space<vmem>>, vector<16x32xf32>
    %cst_113 = arith.constant dense<0.000000e+00> : vector<2x32xf32>
    %164 = tpu.matmul %159, %163, %cst_113 {dimension_numbers = #tpu.dot_dimension_numbers<[1], [0], [0], [1], [0, 0, 1, 1], [], []>} : vector<2x16xf32>, vector<16x32xf32>, vector<2x32xf32> -> vector<2x32xf32>
    %165 = arith.addf %162, %164 : vector<2x32xf32>
    %c0_114 = arith.constant 0 : index
    %c0_115 = arith.constant 0 : index
    %166 = vector.load %arg35[%c0_114, %c0_115] : memref<2x32xf32, #tpu.memory_space<vmem>>, vector<2x32xf32>
    tpu.vector_store %arg35[%c0_114, %c0_115], %165 {strides = array<i32>} : memref<2x32xf32, #tpu.memory_space<vmem>>, vector<2x32xf32>,
    %c0_116 = arith.constant 0 : index
    %c0_117 = arith.constant 0 : index
    %167 = vector.load %arg30[%c0_116, %c0_117] : memref<32x3xf32, #tpu.memory_space<vmem>>, vector<32x3xf32>
    %cst_118 = arith.constant dense<0.000000e+00> : vector<2x3xf32>
    %168 = tpu.matmul %165, %167, %cst_118 {dimension_numbers = #tpu.dot_dimension_numbers<[1], [0], [0], [1], [0, 0, 1, 1], [], []>} : vector<2x32xf32>, vector<32x3xf32>, vector<2x3xf32> -> vector<2x3xf32>
    %c0_119 = arith.constant 0 : index
    %c0_120 = arith.constant 0 : index
    %169 = vector.load %arg31[%c0_119, %c0_120] : memref<1x3xf32, #tpu.memory_space<vmem>>, vector<1x3xf32>
    %170 = vector.broadcast %169 : vector<1x3xf32> to vector<2x3xf32>
    %171 = arith.addf %168, %170 : vector<2x3xf32>
    %c0_121 = arith.constant 0 : index
    %c0_122 = arith.constant 0 : index
    %172 = vector.load %arg40[%c0_121, %c0_122] : memref<2x3xf32, #tpu.memory_space<vmem>>, vector<2x3xf32>
    tpu.vector_store %arg40[%c0_121, %c0_122], %171 {strides = array<i32>} : memref<2x3xf32, #tpu.memory_space<vmem>>, vector<2x3xf32>,
    return
  }
}

</mosaic_0001>

<llo_original>
// kernel: tile.24
$region0: #{tile.24}
  %s0 = inlined_call_operand.vmem [shape: f32[30,9,30], index: 0, kind: input, shape index: {}]
  %s1 = inlined_call_operand.vmem [shape: f32[30,270], index: 1, kind: output, shape index: {}]
  %v2 = vld [vmem:[%s0] sm:$0xff]
  %vm3 = vcmask 244736
  %4 = vst.msk [vmem:[%s1] sm:$0xff] %vm3, %v2
  %s5 = scalar_lea.vmem %s0, 8
  %v6 = vld [vmem:[%s5] sm:$0xff]
  %vm7 = vcmask 244736
  %s8 = scalar_lea.vmem %s1, 8
  %9 = vst.msk [vmem:[%s8] sm:$0xff] %vm7, %v6
  %s10 = scalar_lea.vmem %s0, 16
  %v11 = vld [vmem:[%s10] sm:$0xff]
  %vm12 = vcmask 244736
  %s13 = scalar_lea.vmem %s1, 16
  %14 = vst.msk [vmem:[%s13] sm:$0xff] %vm12, %v11
  %s15 = scalar_lea.vmem %s0, 24
  %v16 = vld [vmem:[%s15] sm:$0x3f]
  %vm17 = vcmask 244736
  %s18 = scalar_lea.vmem %s1, 24
  %19 = vst.msk [vmem:[%s18] sm:$0x3f] %vm17, %v16
  %s20 = scalar_lea.vmem %s0, 32
  %v21 = vld [vmem:[%s20] sm:$0xff]
  %vm22 = vcmask 244736
  %s23 = scalar_lea.vmem %s1, 30
  %24 = vst.msk [vmem:[%s23] sm:$0xff] %vm22, %v21
  %s25 = scalar_lea.vmem %s0, 40
  %v26 = vld [vmem:[%s25] sm:$0xff]
  %vm27 = vcmask 244736
  %s28 = scalar_lea.vmem %s1, 38
  %29 = vst.msk [vmem:[%s28] sm:$0xff] %vm27, %v26
  %s30 = scalar_lea.vmem %s0, 48
  %v31 = vld [vmem:[%s30] sm:$0xff]
  %vm32 = vcmask 244736
  %s33 = scalar_lea.vmem %s1, 46
  %34 = vst.msk [vmem:[%s33] sm:$0xff] %vm32, %v31
  %s35 = scalar_lea.vmem %s0, 56
  %v36 = vld [vmem:[%s35] sm:$0x3f]
  %vm37 = vcmask 244736
  %s38 = scalar_lea.vmem %s1, 54
  %39 = vst.msk [vmem:[%s38] sm:$0x3f] %vm37, %v36
  %s40 = scalar_lea.vmem %s0, 64
  %v41 = vld [vmem:[%s40] sm:$0xff]
  %vm42 = vcmask 244736
  %s43 = scalar_lea.vmem %s1, 60
  %44 = vst.msk [vmem:[%s43] sm:$0xff] %vm42, %v41
  %s45 = scalar_lea.vmem %s0, 72
  %v46 = vld [vmem:[%s45] sm:$0xff]
  %vm47 = vcmask 244736
  %s48 = scalar_lea.vmem %s1, 68
  %49 = vst.msk [vmem:[%s48] sm:$0xff] %vm47, %v46
  %s50 = scalar_lea.vmem %s0, 80
  %v51 = vld [vmem:[%s50] sm:$0xff]
  %vm52 = vcmask 244736
  %s53 = scalar_lea.vmem %s1, 76
  %54 = vst.msk [vmem:[%s53] sm:$0xff] %vm52, %v51
  %s55 = scalar_lea.vmem %s0, 88
  %v56 = vld [vmem:[%s55] sm:$0x3f]
  %vm57 = vcmask 244736
  %s58 = scalar_lea.vmem %s1, 84
  %59 = vst.msk [vmem:[%s58] sm:$0x3f] %vm57, %v56
  %s60 = scalar_lea.vmem %s0, 96
  %v61 = vld [vmem:[%s60] sm:$0xff]
  %vm62 = vcmask 244736
  %s63 = scalar_lea.vmem %s1, 90
  %64 = vst.msk [vmem:[%s63] sm:$0xff] %vm62, %v61
  %s65 = scalar_lea.vmem %s0, 104
  %v66 = vld [vmem:[%s65] sm:$0xff]
  %vm67 = vcmask 244736
  %s68 = scalar_lea.vmem %s1, 98
  %69 = vst.msk [vmem:[%s68] sm:$0xff] %vm67, %v66
  %s70 = scalar_lea.vmem %s0, 112
  %v71 = vld [vmem:[%s70] sm:$0xff]
  %vm72 = vcmask 244736
  %s73 = scalar_lea.vmem %s1, 106
  %74 = vst.msk [vmem:[%s73] sm:$0xff] %vm72, %v71
  %s75 = scalar_lea.vmem %s0, 120
  %v76 = vld [vmem:[%s75] sm:$0x3f]
  %vm77 = vcmask 244736
  %s78 = scalar_lea.vmem %s1, 114
  %79 = vst.msk [vmem:[%s78] sm:$0x3f] %vm77, %v76
  %s80 = scalar_lea.vmem %s0, 128
  %v81 = vld [vmem:[%s80] sm:$0xff]
  %vm82 = vcmask 244736
  %s83 = scalar_lea.vmem %s1, 120
  %84 = vst.msk [vmem:[%s83] sm:$0xff] %vm82, %v81
  %s85 = scalar_lea.vmem %s0, 136
  %v86 = vld [vmem:[%s85] sm:$0xff]
  %vm87 = vcmask 244736
  %s88 = scalar_lea.vmem %s1, 128
  %89 = vst.msk [vmem:[%s88] sm:$0xff] %vm87, %v86
  %s90 = scalar_lea.vmem %s0, 144
  %v91 = vld [vmem:[%s90] sm:$0xff]
  %vm92 = vcmask 244736
  %s93 = scalar_lea.vmem %s1, 136
  %94 = vst.msk [vmem:[%s93] sm:$0xff] %vm92, %v91
  %s95 = scalar_lea.vmem %s0, 152
  %v96 = vld [vmem:[%s95] sm:$0x3f]
  %vm97 = vcmask 244736
  %s98 = scalar_lea.vmem %s1, 144
  %99 = vst.msk [vmem:[%s98] sm:$0x3f] %vm97, %v96
  %s100 = scalar_lea.vmem %s0, 160
  %v101 = vld [vmem:[%s100] sm:$0xff]
  %vm102 = vcmask 244736
  %s103 = scalar_lea.vmem %s1, 150
  %104 = vst.msk [vmem:[%s103] sm:$0xff] %vm102, %v101
  %s105 = scalar_lea.vmem %s0, 168
  %v106 = vld [vmem:[%s105] sm:$0xff]
  %vm107 = vcmask 244736
  %s108 = scalar_lea.vmem %s1, 158
  %109 = vst.msk [vmem:[%s108] sm:$0xff] %vm107, %v106
  %s110 = scalar_lea.vmem %s0, 176
  %v111 = vld [vmem:[%s110] sm:$0xff]
  %vm112 = vcmask 244736
  %s113 = scalar_lea.vmem %s1, 166
  %114 = vst.msk [vmem:[%s113] sm:$0xff] %vm112, %v111
  %s115 = scalar_lea.vmem %s0, 184
  %v116 = vld [vmem:[%s115] sm:$0x3f]
  %vm117 = vcmask 244736
  %s118 = scalar_lea.vmem %s1, 174
  %119 = vst.msk [vmem:[%s118] sm:$0x3f] %vm117, %v116
  %s120 = scalar_lea.vmem %s0, 192
  %v121 = vld [vmem:[%s120] sm:$0xff]
  %vm122 = vcmask 244736
  %s123 = scalar_lea.vmem %s1, 180
  %124 = vst.msk [vmem:[%s123] sm:$0xff] %vm122, %v121
  %s125 = scalar_lea.vmem %s0, 200
  %v126 = vld [vmem:[%s125] sm:$0xff]
  %vm127 = vcmask 244736
  %s128 = scalar_lea.vmem %s1, 188
  %129 = vst.msk [vmem:[%s128] sm:$0xff] %vm127, %v126
  %s130 = scalar_lea.vmem %s0, 208
  %v131 = vld [vmem:[%s130] sm:$0xff]
  %vm132 = vcmask 244736
  %s133 = scalar_lea.vmem %s1, 196
  %134 = vst.msk [vmem:[%s133] sm:$0xff] %vm132, %v131
  %s135 = scalar_lea.vmem %s0, 216
  %v136 = vld [vmem:[%s135] sm:$0x3f]
  %vm137 = vcmask 244736
  %s138 = scalar_lea.vmem %s1, 204
  %139 = vst.msk [vmem:[%s138] sm:$0x3f] %vm137, %v136
  %s140 = scalar_lea.vmem %s0, 224
  %v141 = vld [vmem:[%s140] sm:$0xff]
  %vm142 = vcmask 244736
  %s143 = scalar_lea.vmem %s1, 210
  %144 = vst.msk [vmem:[%s143] sm:$0xff] %vm142, %v141
  %s145 = scalar_lea.vmem %s0, 232
  %v146 = vld [vmem:[%s145] sm:$0xff]
  %vm147 = vcmask 244736
  %s148 = scalar_lea.vmem %s1, 218
  %149 = vst.msk [vmem:[%s148] sm:$0xff] %vm147, %v146
  %s150 = scalar_lea.vmem %s0, 240
  %v151 = vld [vmem:[%s150] sm:$0xff]
  %vm152 = vcmask 244736
  %s153 = scalar_lea.vmem %s1, 226
  %154 = vst.msk [vmem:[%s153] sm:$0xff] %vm152, %v151
  %s155 = scalar_lea.vmem %s0, 248
  %v156 = vld [vmem:[%s155] sm:$0x3f]
  %vm157 = vcmask 244736
  %s158 = scalar_lea.vmem %s1, 234
  %159 = vst.msk [vmem:[%s158] sm:$0x3f] %vm157, %v156
  %s160 = scalar_lea.vmem %s0, 256
  %v161 = vld [vmem:[%s160] sm:$0xff]
  %vm162 = vcmask 244736
  %s163 = scalar_lea.vmem %s1, 240
  %164 = vst.msk [vmem:[%s163] sm:$0xff] %vm162, %v161
  %s165 = scalar_lea.vmem %s0, 264
  %v166 = vld [vmem:[%s165] sm:$0xff]
  %vm167 = vcmask 244736
  %s168 = scalar_lea.vmem %s1, 248
  %169 = vst.msk [vmem:[%s168] sm:$0xff] %vm167, %v166
  %s170 = scalar_lea.vmem %s0, 272
  %v171 = vld [vmem:[%s170] sm:$0xff]
  %vm172 = vcmask 244736
  %s173 = scalar_lea.vmem %s1, 256
  %174 = vst.msk [vmem:[%s173] sm:$0xff] %vm172, %v171
  %s175 = scalar_lea.vmem %s0, 280
  %v176 = vld [vmem:[%s175] sm:$0x3f]
  %vm177 = vcmask 244736
  %s178 = scalar_lea.vmem %s1, 264
  %179 = vst.msk [vmem:[%s178] sm:$0x3f] %vm177, %v176

// kernel: cdssnet_forward.2
$region0: #{cdssnet_forward.2}
  #allocation0 [shape = 'u32[]', space=smem, size = 0x4, offset = 0x4, fixed_abs, tag = 'smem constant byte address 0x4 - core index']
  #allocation1 [shape = 'u32[144,128]{1,0:T(1,128)}', space=vmem, size = 0x12000, scoped, tag = 'internal scratch']
  %s0 = inlined_call_operand.smem [shape: u32[41], index: -1, kind: input, shape index: {}]
  %s1 = sld [smem:[%s0]]
  %s2 = scalar_lea.smem %s0, 1
  %s3 = sld [smem:[%s2]]
  %s4 = scalar_lea.smem %s0, 2
  %s5 = sld [smem:[%s4]]
  %s6 = scalar_lea.smem %s0, 3
  %s7 = sld [smem:[%s6]]
  %s8 = scalar_lea.smem %s0, 4
  %s9 = sld [smem:[%s8]]
  %s10 = scalar_lea.smem %s0, 5
  %s11 = sld [smem:[%s10]]
  %s12 = scalar_lea.smem %s0, 6
  %s13 = sld [smem:[%s12]]
  %s14 = scalar_lea.smem %s0, 7
  %s15 = sld [smem:[%s14]]
  %s16 = scalar_lea.smem %s0, 8
  %s17 = sld [smem:[%s16]]
  %s18 = scalar_lea.smem %s0, 9
  %s19 = sld [smem:[%s18]]
  %s20 = scalar_lea.smem %s0, 10
  %s21 = sld [smem:[%s20]]
  %s22 = scalar_lea.smem %s0, 11
  %s23 = sld [smem:[%s22]]
  %s24 = scalar_lea.smem %s0, 12
  %s25 = sld [smem:[%s24]]
  %s26 = scalar_lea.smem %s0, 13
  %s27 = sld [smem:[%s26]]
  %s28 = scalar_lea.smem %s0, 14
  %s29 = sld [smem:[%s28]]
  %s30 = scalar_lea.smem %s0, 15
  %s31 = sld [smem:[%s30]]
  %s32 = scalar_lea.smem %s0, 16
  %s33 = sld [smem:[%s32]]
  %s34 = scalar_lea.smem %s0, 17
  %s35 = sld [smem:[%s34]]
  %s36 = scalar_lea.smem %s0, 18
  %s37 = sld [smem:[%s36]]
  %s38 = scalar_lea.smem %s0, 19
  %s39 = sld [smem:[%s38]]
  %s40 = scalar_lea.smem %s0, 20
  %s41 = sld [smem:[%s40]]
  %s42 = scalar_lea.smem %s0, 21
  %s43 = sld [smem:[%s42]]
  %s44 = scalar_lea.smem %s0, 22
  %s45 = sld [smem:[%s44]]
  %s46 = scalar_lea.smem %s0, 23
  %s47 = sld [smem:[%s46]]
  %s48 = scalar_lea.smem %s0, 24
  %s49 = sld [smem:[%s48]]
  %s50 = scalar_lea.smem %s0, 25
  %s51 = sld [smem:[%s50]]
  %s52 = scalar_lea.smem %s0, 26
  %s53 = sld [smem:[%s52]]
  %s54 = scalar_lea.smem %s0, 27
  %s55 = sld [smem:[%s54]]
  %s56 = scalar_lea.smem %s0, 28
  %s57 = sld [smem:[%s56]]
  %s58 = scalar_lea.smem %s0, 29
  %s59 = sld [smem:[%s58]]
  %s60 = scalar_lea.smem %s0, 30
  %s61 = sld [smem:[%s60]]
  %s62 = scalar_lea.smem %s0, 31
  %s63 = sld [smem:[%s62]]
  %s64 = scalar_lea.smem %s0, 32
  %s65 = sld [smem:[%s64]]
  %s66 = scalar_lea.smem %s0, 33
  %s67 = sld [smem:[%s66]]
  %s68 = scalar_lea.smem %s0, 34
  %s69 = sld [smem:[%s68]]
  %s70 = scalar_lea.smem %s0, 35
  %s71 = sld [smem:[%s70]]
  %s72 = scalar_lea.smem %s0, 36
  %s73 = sld [smem:[%s72]]
  %s74 = scalar_lea.smem %s0, 37
  %s75 = sld [smem:[%s74]]
  %s76 = scalar_lea.smem %s0, 38
  %s77 = sld [smem:[%s76]]
  %s78 = scalar_lea.smem %s0, 39
  %s79 = sld [smem:[%s78]]
  %s80 = scalar_lea.smem %s0, 40
  %s81 = sld [smem:[%s80]]
  %82 = xla_tuple %s65, %s67, %s69, %s71, %s73, %s75, %s77, %s79, %s81
  %s83 = sld [smem:[#allocation0]]
  $region202: #{cdssnet_forward.2} parent=0
    _
  %s85 = ssub.s32 1, %s83
  %s86 = scalar_select 0, %s85, %s83
  $region1: #{cdssnet_forward.2} parent=0
    #allocation2 [shape = 'u8[1024]{0}', space=vmem, size = 0x400, scoped, tag = 'output window, operand 0, single buffered']
    #allocation3 [shape = 's32[1]{0}', space=sflag, size = 0x4, scoped, tag = 'scoped memory for cdssnet_forward.2']
    #allocation4 [shape = 'u8[1024]{0}', space=vmem, size = 0x400, scoped, tag = 'output window, operand 1, single buffered']
    #allocation5 [shape = 's32[1]{0}', space=sflag, size = 0x4, scoped, tag = 'scoped memory for cdssnet_forward.2']
    #allocation6 [shape = 'u8[512]{0}', space=vmem, size = 0x400, scoped, tag = 'output window, operand 2, single buffered']
    #allocation7 [shape = 'u8[1024]{0}', space=vmem, size = 0x400, scoped, tag = 'output window, operand 3, single buffered']
    #allocation8 [shape = 's32[1]{0}', space=sflag, size = 0x4, scoped, tag = 'scoped memory for cdssnet_forward.2']
    #allocation9 [shape = 'u8[1024]{0}', space=vmem, size = 0x400, scoped, tag = 'output window, operand 4, single buffered']
    #allocation10 [shape = 'u8[1024]{0}', space=vmem, size = 0x400, scoped, tag = 'output window, operand 5, single buffered']
    #allocation11 [shape = 's32[1]{0}', space=sflag, size = 0x4, scoped, tag = 'scoped memory for cdssnet_forward.2']
    #allocation12 [shape = 'u8[1024]{0}', space=vmem, size = 0x400, scoped, tag = 'output window, operand 6, single buffered']
    #allocation13 [shape = 'u8[512]{0}', space=vmem, size = 0x400, scoped, tag = 'output window, operand 7, single buffered']
    #allocation14 [shape = 's32[1]{0}', space=sflag, size = 0x4, scoped, tag = 'scoped memory for cdssnet_forward.2']
    #allocation15 [shape = 'u8[1024]{0}', space=vmem, size = 0x400, scoped, tag = 'output window, operand 8, single buffered']
    %87 = vsyncpa [#allocation3], 0
    %88 = vsyncpa [#allocation5], 0
    %89 = vsyncpa [#allocation8], 0
    %90 = vsyncpa [#allocation11], 0
    %91 = vsyncpa [#allocation14], 0
    // Predicated region
    $region2: #{cdssnet_forward.2} parent=1 // pred_check
      _
    $region3: #{cdssnet_forward.2} parent=1 // pred_check_branch
      %93 = sbr.rel (0) target = $region5
    $region4: #{cdssnet_forward.2} parent=1 // pred_region
      _
    $region5: #{cdssnet_forward.2} parent=1 // pred_fallthru
      _
    // Predicated region
    $region6: #{cdssnet_forward.2} parent=1 // pred_check
      _
    $region7: #{cdssnet_forward.2} parent=1 // pred_check_branch
      %95 = sbr.rel (0) target = $region9
    $region8: #{cdssnet_forward.2} parent=1 // pred_region
      _
    $region9: #{cdssnet_forward.2} parent=1 // pred_fallthru
      _
    // Predicated region
    $region10: #{cdssnet_forward.2} parent=1 // pred_check
      _
    $region11: #{cdssnet_forward.2} parent=1 // pred_check_branch
      %97 = sbr.rel (0) target = $region13
    $region12: #{cdssnet_forward.2} parent=1 // pred_region
      _
    $region13: #{cdssnet_forward.2} parent=1 // pred_fallthru
      _
    // Predicated region
    $region14: #{cdssnet_forward.2} parent=1 // pred_check
      _
    $region15: #{cdssnet_forward.2} parent=1 // pred_check_branch
      %99 = sbr.rel (0) target = $region17
    $region16: #{cdssnet_forward.2} parent=1 // pred_region
      _
    $region17: #{cdssnet_forward.2} parent=1 // pred_fallthru
      _
    // Predicated region
    $region18: #{cdssnet_forward.2} parent=1 // pred_check
      _
    $region19: #{cdssnet_forward.2} parent=1 // pred_check_branch
      %101 = sbr.rel (0) target = $region21
    $region20: #{cdssnet_forward.2} parent=1 // pred_region
      _
    $region21: #{cdssnet_forward.2} parent=1 // pred_fallthru
      _
    // Predicated region
    $region22: #{cdssnet_forward.2} parent=1 // pred_check
      _
    $region23: #{cdssnet_forward.2} parent=1 // pred_check_branch
      %103 = sbr.rel (0) target = $region25
    $region24: #{cdssnet_forward.2} parent=1 // pred_region
      _
    $region25: #{cdssnet_forward.2} parent=1 // pred_fallthru
      _
    // Predicated region
    $region26: #{cdssnet_forward.2} parent=1 // pred_check
      _
    $region27: #{cdssnet_forward.2} parent=1 // pred_check_branch
      %105 = sbr.rel (0) target = $region29
    $region28: #{cdssnet_forward.2} parent=1 // pred_region
      _
    $region29: #{cdssnet_forward.2} parent=1 // pred_fallthru
      _
    // Predicated region
    $region30: #{cdssnet_forward.2} parent=1 // pred_check
      _
    $region31: #{cdssnet_forward.2} parent=1 // pred_check_branch
      %107 = sbr.rel (0) target = $region33
    $region32: #{cdssnet_forward.2} parent=1 // pred_region
      _
    $region33: #{cdssnet_forward.2} parent=1 // pred_fallthru
      _
    // Predicated region
    $region34: #{cdssnet_forward.2} parent=1 // pred_check
      _
    $region35: #{cdssnet_forward.2} parent=1 // pred_check_branch
      %109 = sbr.rel (0) target = $region37
    $region36: #{cdssnet_forward.2} parent=1 // pred_region
      _
    $region37: #{cdssnet_forward.2} parent=1 // pred_fallthru
      _
    // Predicated region
    $region38: #{cdssnet_forward.2} parent=1 // pred_check
      _
    $region39: #{cdssnet_forward.2} parent=1 // pred_check_branch
      %111 = sbr.rel (0) target = $region41
    $region40: #{cdssnet_forward.2} parent=1 // pred_region
      _
    $region41: #{cdssnet_forward.2} parent=1 // pred_fallthru
      _
    // Predicated region
    $region42: #{cdssnet_forward.2} parent=1 // pred_check
      _
    $region43: #{cdssnet_forward.2} parent=1 // pred_check_branch
      %113 = sbr.rel (0) target = $region45
    $region44: #{cdssnet_forward.2} parent=1 // pred_region
      _
    $region45: #{cdssnet_forward.2} parent=1 // pred_fallthru
      _
    // Predicated region
    $region46: #{cdssnet_forward.2} parent=1 // pred_check
      _
    $region47: #{cdssnet_forward.2} parent=1 // pred_check_branch
      %115 = sbr.rel (0) target = $region49
    $region48: #{cdssnet_forward.2} parent=1 // pred_region
      _
    $region49: #{cdssnet_forward.2} parent=1 // pred_fallthru
      _
    // Predicated region
    $region50: #{cdssnet_forward.2} parent=1 // pred_check
      _
    $region51: #{cdssnet_forward.2} parent=1 // pred_check_branch
      %117 = sbr.rel (0) target = $region53
    $region52: #{cdssnet_forward.2} parent=1 // pred_region
      _
    $region53: #{cdssnet_forward.2} parent=1 // pred_fallthru
      _
    // Predicated region
    $region54: #{cdssnet_forward.2} parent=1 // pred_check
      _
    $region55: #{cdssnet_forward.2} parent=1 // pred_check_branch
      %119 = sbr.rel (0) target = $region57
    $region56: #{cdssnet_forward.2} parent=1 // pred_region
      _
    $region57: #{cdssnet_forward.2} parent=1 // pred_fallthru
      _
    // Predicated region
    $region58: #{cdssnet_forward.2} parent=1 // pred_check
      _
    $region59: #{cdssnet_forward.2} parent=1 // pred_check_branch
      %121 = sbr.rel (0) target = $region61
    $region60: #{cdssnet_forward.2} parent=1 // pred_region
      _
    $region61: #{cdssnet_forward.2} parent=1 // pred_fallthru
      _
    // Predicated region
    $region62: #{cdssnet_forward.2} parent=1 // pred_check
      _
    $region63: #{cdssnet_forward.2} parent=1 // pred_check_branch
      %123 = sbr.rel (0) target = $region65
    $region64: #{cdssnet_forward.2} parent=1 // pred_region
      _
    $region65: #{cdssnet_forward.2} parent=1 // pred_fallthru
      _
    // Predicated region
    $region66: #{cdssnet_forward.2} parent=1 // pred_check
      _
    $region67: #{cdssnet_forward.2} parent=1 // pred_check_branch
      %125 = sbr.rel (0) target = $region69
    $region68: #{cdssnet_forward.2} parent=1 // pred_region
      _
    $region69: #{cdssnet_forward.2} parent=1 // pred_fallthru
      _
    // Predicated region
    $region70: #{cdssnet_forward.2} parent=1 // pred_check
      _
    $region71: #{cdssnet_forward.2} parent=1 // pred_check_branch
      %127 = sbr.rel (0) target = $region73
    $region72: #{cdssnet_forward.2} parent=1 // pred_region
      _
    $region73: #{cdssnet_forward.2} parent=1 // pred_fallthru
      _
    // Predicated region
    $region74: #{cdssnet_forward.2} parent=1 // pred_check
      _
    $region75: #{cdssnet_forward.2} parent=1 // pred_check_branch
      %129 = sbr.rel (0) target = $region77
    $region76: #{cdssnet_forward.2} parent=1 // pred_region
      _
    $region77: #{cdssnet_forward.2} parent=1 // pred_fallthru
      _
    // Predicated region
    $region78: #{cdssnet_forward.2} parent=1 // pred_check
      _
    $region79: #{cdssnet_forward.2} parent=1 // pred_check_branch
      %131 = sbr.rel (0) target = $region81
    $region80: #{cdssnet_forward.2} parent=1 // pred_region
      _
    $region81: #{cdssnet_forward.2} parent=1 // pred_fallthru
      _
    // Predicated region
    $region82: #{cdssnet_forward.2} parent=1 // pred_check
      _
    $region83: #{cdssnet_forward.2} parent=1 // pred_check_branch
      %133 = sbr.rel (0) target = $region85
    $region84: #{cdssnet_forward.2} parent=1 // pred_region
      _
    $region85: #{cdssnet_forward.2} parent=1 // pred_fallthru
      _
    // Predicated region
    $region86: #{cdssnet_forward.2} parent=1 // pred_check
      _
    $region87: #{cdssnet_forward.2} parent=1 // pred_check_branch
      %135 = sbr.rel (0) target = $region89
    $region88: #{cdssnet_forward.2} parent=1 // pred_region
      _
    $region89: #{cdssnet_forward.2} parent=1 // pred_fallthru
      _
    // Predicated region
    $region90: #{cdssnet_forward.2} parent=1 // pred_check
      _
    $region91: #{cdssnet_forward.2} parent=1 // pred_check_branch
      %137 = sbr.rel (0) target = $region93
    $region92: #{cdssnet_forward.2} parent=1 // pred_region
      _
    $region93: #{cdssnet_forward.2} parent=1 // pred_fallthru
      _
    // Predicated region
    $region94: #{cdssnet_forward.2} parent=1 // pred_check
      _
    $region95: #{cdssnet_forward.2} parent=1 // pred_check_branch
      %139 = sbr.rel (0) target = $region97
    $region96: #{cdssnet_forward.2} parent=1 // pred_region
      _
    $region97: #{cdssnet_forward.2} parent=1 // pred_fallthru
      _
    // Predicated region
    $region98: #{cdssnet_forward.2} parent=1 // pred_check
      _
    $region99: #{cdssnet_forward.2} parent=1 // pred_check_branch
      %141 = sbr.rel (0) target = $region101
    $region100: #{cdssnet_forward.2} parent=1 // pred_region
      _
    $region101: #{cdssnet_forward.2} parent=1 // pred_fallthru
      _
    // Predicated region
    $region102: #{cdssnet_forward.2} parent=1 // pred_check
      _
    $region103: #{cdssnet_forward.2} parent=1 // pred_check_branch
      %143 = sbr.rel (0) target = $region105
    $region104: #{cdssnet_forward.2} parent=1 // pred_region
      _
    $region105: #{cdssnet_forward.2} parent=1 // pred_fallthru
      _
    // Predicated region
    $region106: #{cdssnet_forward.2} parent=1 // pred_check
      _
    $region107: #{cdssnet_forward.2} parent=1 // pred_check_branch
      %145 = sbr.rel (0) target = $region109
    $region108: #{cdssnet_forward.2} parent=1 // pred_region
      _
    $region109: #{cdssnet_forward.2} parent=1 // pred_fallthru
      _
    // Predicated region
    $region110: #{cdssnet_forward.2} parent=1 // pred_check
      _
    $region111: #{cdssnet_forward.2} parent=1 // pred_check_branch
      %147 = sbr.rel (0) target = $region113
    $region112: #{cdssnet_forward.2} parent=1 // pred_region
      _
    $region113: #{cdssnet_forward.2} parent=1 // pred_fallthru
      _
    // Predicated region
    $region114: #{cdssnet_forward.2} parent=1 // pred_check
      _
    $region115: #{cdssnet_forward.2} parent=1 // pred_check_branch
      %149 = sbr.rel (0) target = $region117
    $region116: #{cdssnet_forward.2} parent=1 // pred_region
      _
    $region117: #{cdssnet_forward.2} parent=1 // pred_fallthru
      _
    // Predicated region
    $region118: #{cdssnet_forward.2} parent=1 // pred_check
      _
    $region119: #{cdssnet_forward.2} parent=1 // pred_check_branch
      %151 = sbr.rel (0) target = $region121
    $region120: #{cdssnet_forward.2} parent=1 // pred_region
      _
    $region121: #{cdssnet_forward.2} parent=1 // pred_fallthru
      _
    // Predicated region
    $region122: #{cdssnet_forward.2} parent=1 // pred_check
      _
    $region123: #{cdssnet_forward.2} parent=1 // pred_check_branch
      %153 = sbr.rel (0) target = $region125
    $region124: #{cdssnet_forward.2} parent=1 // pred_region
      _
    $region125: #{cdssnet_forward.2} parent=1 // pred_fallthru
      _
    // Predicated region
    $region126: #{cdssnet_forward.2} parent=1 // pred_check
      _
    $region127: #{cdssnet_forward.2} parent=1 // pred_check_branch
      %155 = sbr.rel (0) target = $region129
    $region128: #{cdssnet_forward.2} parent=1 // pred_region
      _
    $region129: #{cdssnet_forward.2} parent=1 // pred_fallthru
      _
    %v156 = vld [vmem:[%s1] sm:$0x3]
    %v157 = vld [vmem:[%s3] sm:$0x3f]
    %v158 = vld [vmem:[%s5] sm:$0x1]
    %v160 = vlaneseq
    %v161 = vshrl.u32 %v160, 7
    %v162 = vsub.s32 0, %v161
    %v163 = vrot.slane %v158, %v162
    %vm165 = vcmask 48128
    %v167 = vsel %vm165, %v156, 0
    %vm169 = vcmask 1045504
    %v171 = vsel %vm169, %v157, 0
    %173 = vmatprep.subr.mxu0 0.0
    %174 = vmatpush1.msra.mxu0 %v171
    %175 = vmatprep.subr.mxu0 0.0
    %176 = vmatpush1.msra.mxu0 0.0
    %177 = vmatprep.subr.mxu0 0.0
    %178 = vmatpush1.msra.mxu0 0.0
    %179 = vmatprep.subr.mxu0 0.0
    %180 = vmatpush1.msra.mxu0 0.0
    %181 = vmatprep.subr.mxu0 0.0
    %182 = vmatpush1.msra.mxu0 0.0
    %183 = vmatprep.subr.mxu0 0.0
    %184 = vmatpush1.msra.mxu0 0.0
    %185 = vmatprep.subr.mxu0 0.0
    %186 = vmatpush1.msra.mxu0 0.0
    %187 = vmatprep.subr.mxu0 0.0
    %188 = vmatpush1.msra.mxu0 0.0
    %189 = vmatprep.subr.mxu0 0.0
    %190 = vmatpush1.msra.mxu0 0.0
    %191 = vmatprep.subr.mxu0 0.0
    %192 = vmatpush1.msra.mxu0 0.0
    %193 = vmatprep.subr.mxu0 0.0
    %194 = vmatpush1.msra.mxu0 0.0
    %195 = vmatprep.subr.mxu0 0.0
    %196 = vmatpush1.msra.mxu0 0.0
    %197 = vmatprep.subr.mxu0 0.0
    %198 = vmatpush1.msra.mxu0 0.0
    %199 = vmatprep.subr.mxu0 0.0
    %200 = vmatpush1.msra.mxu0 0.0
    %201 = vmatprep.subr.mxu0 0.0
    %202 = vmatpush1.msra.mxu0 0.0
    %203 = vmatprep.subr.mxu0 0.0
    %204 = vmatpush1.msra.mxu0 0.0
    %205 = vmatprep.subr.mxu0 0.0
    %206 = vmatpush1.msra.mxu0 0.0
    %207 = vmatprep.subr.mxu0 0.0
    %208 = vmatpush1.msra.mxu0 0.0
    %209 = vmatprep.subr.mxu0 0.0
    %210 = vmatpush1.msra.mxu0 0.0
    %211 = vmatprep.subr.mxu0 0.0
    %212 = vmatpush1.msra.mxu0 0.0
    %213 = vmatprep.subr.mxu0 0.0
    %214 = vmatpush1.msra.mxu0 0.0
    %215 = vmatprep.subr.mxu0 0.0
    %216 = vmatpush1.msra.mxu0 0.0
    %217 = vmatprep.subr.mxu0 0.0
    %218 = vmatpush1.msra.mxu0 0.0
    %219 = vmatprep.subr.mxu0 0.0
    %220 = vmatpush1.msra.mxu0 0.0
    %221 = vmatprep.subr.mxu0 0.0
    %222 = vmatpush1.msra.mxu0 0.0
    %223 = vmatprep.subr.mxu0 0.0
    %224 = vmatpush1.msra.mxu0 0.0
    %225 = vmatprep.subr.mxu0 0.0
    %226 = vmatpush1.msra.mxu0 0.0
    %227 = vmatprep.subr.mxu0 0.0
    %228 = vmatpush1.msra.mxu0 0.0
    %229 = vmatprep.subr.mxu0 0.0
    %230 = vmatpush1.msra.mxu0 0.0
    %231 = vmatprep.subr.mxu0 0.0
    %232 = vmatpush1.msra.mxu0 0.0
    %233 = vmatprep.subr.mxu0 0.0
    %234 = vmatpush1.msra.mxu0 0.0
    %235 = vmatprep.subr.mxu0 0.0
    %236 = vmatpush1.msra.mxu0 0.0
    %237 = vmatprep.mubr.f32.mxu0 0.0
    %238 = vmatmul.mubr.f32.gmra.mrb[0].mxu0 %v167
    %v239 = vpop.f32.mrb[0].mxu0
    %v240 = vadd.f32 %v163, %v239
    %v241 = vpop.f32.mrb[0].mxu0
    %242 = vdwg.mxu0
    %v243 = vmul.f32 %v240, 1.442695
    %v244 = vpow.pop %v243
    %v245 = vrsqrt.pop %v244
    %v246 = vmul.f32 %v244, %v245
    %vm247 = vcmp.eq.f32.partialorder %v244, inf
    %v248 = vsel %vm247, %v244, %v246
    %vm249 = vcmp.eq.f32.partialorder %v244, 0.0
    %v250 = vand.u32 %v244, 2147483648
    %v251 = vsel %vm249, %v250, %v248
    %v252 = vld [vmem:[%s19] sm:$0x3]
    %254 = vrot.lane.b32.xlu0 %v252, 32
    %v255 = vpop.permute.xlu0 %254
    %v257 = vmul.f32 %v251, %v255
    %259 = vrot.lane.b32.xlu0 %v257, 96
    %v260 = vpop.permute.xlu0 %259
    %v262 = vadd.f32 %v240, %v260
    %vm263 = vcmask 254976
    %264 = vst.msk [vmem:[#allocation2] sm:$0x3] %vm263, %v262
    %v265 = vld [vmem:[%s7] sm:$0xff]
    %v266 = vld [vmem:[%s7 + $0x8] sm:$0xff]
    %v267 = vld [vmem:[%s7 + $0x10] sm:$0xff]
    %v268 = vld [vmem:[%s7 + $0x18] sm:$0xff]
    %v269 = vld [vmem:[%s9] sm:$0x1]
    %v271 = vlaneseq
    %v272 = vshrl.u32 %v271, 7
    %v273 = vsub.s32 0, %v272
    %v274 = vrot.slane %v269, %v273
    %vm276 = vcmask 261120
    %v278 = vsel %vm276, %v262, 0
    %280 = vmatprep.subr.mxu0 0.0
    %281 = vmatpush1.msra.mxu0 %v265
    %282 = vmatprep.subr.mxu0 0.0
    %283 = vmatpush1.msra.mxu0 %v266
    %284 = vmatprep.subr.mxu0 0.0
    %285 = vmatpush1.msra.mxu0 %v267
    %286 = vmatprep.subr.mxu0 0.0
    %287 = vmatpush1.msra.mxu0 %v268
    %288 = vmatprep.subr.mxu0 0.0
    %289 = vmatpush1.msra.mxu0 0.0
    %290 = vmatprep.subr.mxu0 0.0
    %291 = vmatpush1.msra.mxu0 0.0
    %292 = vmatprep.subr.mxu0 0.0
    %293 = vmatpush1.msra.mxu0 0.0
    %294 = vmatprep.subr.mxu0 0.0
    %295 = vmatpush1.msra.mxu0 0.0
    %296 = vmatprep.subr.mxu0 0.0
    %297 = vmatpush1.msra.mxu0 0.0
    %298 = vmatprep.subr.mxu0 0.0
    %299 = vmatpush1.msra.mxu0 0.0
    %300 = vmatprep.subr.mxu0 0.0
    %301 = vmatpush1.msra.mxu0 0.0
    %302 = vmatprep.subr.mxu0 0.0
    %303 = vmatpush1.msra.mxu0 0.0
    %304 = vmatprep.subr.mxu0 0.0
    %305 = vmatpush1.msra.mxu0 0.0
    %306 = vmatprep.subr.mxu0 0.0
    %307 = vmatpush1.msra.mxu0 0.0
    %308 = vmatprep.subr.mxu0 0.0
    %309 = vmatpush1.msra.mxu0 0.0
    %310 = vmatprep.subr.mxu0 0.0
    %311 = vmatpush1.msra.mxu0 0.0
    %312 = vmatprep.subr.mxu0 0.0
    %313 = vmatpush1.msra.mxu0 0.0
    %314 = vmatprep.subr.mxu0 0.0
    %315 = vmatpush1.msra.mxu0 0.0
    %316 = vmatprep.subr.mxu0 0.0
    %317 = vmatpush1.msra.mxu0 0.0
    %318 = vmatprep.subr.mxu0 0.0
    %319 = vmatpush1.msra.mxu0 0.0
    %320 = vmatprep.subr.mxu0 0.0
    %321 = vmatpush1.msra.mxu0 0.0
    %322 = vmatprep.subr.mxu0 0.0
    %323 = vmatpush1.msra.mxu0 0.0
    %324 = vmatprep.subr.mxu0 0.0
    %325 = vmatpush1.msra.mxu0 0.0
    %326 = vmatprep.subr.mxu0 0.0
    %327 = vmatpush1.msra.mxu0 0.0
    %328 = vmatprep.subr.mxu0 0.0
    %329 = vmatpush1.msra.mxu0 0.0
    %330 = vmatprep.subr.mxu0 0.0
    %331 = vmatpush1.msra.mxu0 0.0
    %332 = vmatprep.subr.mxu0 0.0
    %333 = vmatpush1.msra.mxu0 0.0
    %334 = vmatprep.subr.mxu0 0.0
    %335 = vmatpush1.msra.mxu0 0.0
    %336 = vmatprep.subr.mxu0 0.0
    %337 = vmatpush1.msra.mxu0 0.0
    %338 = vmatprep.subr.mxu0 0.0
    %339 = vmatpush1.msra.mxu0 0.0
    %340 = vmatprep.subr.mxu0 0.0
    %341 = vmatpush1.msra.mxu0 0.0
    %342 = vmatprep.subr.mxu0 0.0
    %343 = vmatpush1.msra.mxu0 0.0
    %344 = vmatprep.mubr.f32.mxu0 0.0
    %345 = vmatmul.mubr.f32.gmra.mrb[0].mxu0 %v278
    %v346 = vpop.f32.mrb[0].mxu0
    %v347 = vadd.f32 %v274, %v346
    %v348 = vpop.f32.mrb[0].mxu0
    %349 = vdwg.mxu0
    %v350 = vtanh.pop %v347
    %vm351 = vcmask 41984
    %352 = vst.msk [vmem:[#allocation4] sm:$0x3] %vm351, %v350
    %v353 = vadd.f32 %v240, 1.0
    %v354 = vmul.f32 %v240, %v240
    %356 = vrot.lane.b32.xlu0 %v354, 32
    %v357 = vpop.permute.xlu0 %356
    %v359 = vsub.f32 %v353, %v357
    %v360 = vsub.f32 %v359, %v244
    %362 = vrot.lane.b32.xlu0 %v360, 96
    %v363 = vpop.permute.xlu0 %362
    %v365 = vsel %vm263, %v363, 0.0
    %366 = vadd.xlane.f32.xlu0 %v365
    %v367 = vpop.xlane.xlu0 %366
    %vm368 = vcmask 1041408
    %v369 = vsel %vm368, %v367, 0.0
    %v370 = vrot.slane %v369, 4
    %v371 = vadd.f32 %v369, %v370
    %v372 = vrot.slane %v371, 2
    %v373 = vadd.f32 %v371, %v372
    %v374 = vrot.slane %v373, 1
    %v375 = vadd.f32 %v373, %v374
    %v376 = vmul.f32 %v375, -0.041666668
    %vm377 = vcmask 0
    %378 = vst.msk [vmem:[#allocation6] sm:$0x1] %vm377, %v376
    %v379 = vld [vmem:[%s11] sm:$0xff]
    %v380 = vld [vmem:[%s11 + $0x8] sm:$0xff]
    %v381 = vld [vmem:[%s11 + $0x10] sm:$0xff]
    %v382 = vld [vmem:[%s11 + $0x18] sm:$0xff]
    %v383 = vld [vmem:[%s13] sm:$0x1]
    %v385 = vlaneseq
    %v386 = vshrl.u32 %v385, 7
    %v387 = vsub.s32 0, %v386
    %v388 = vrot.slane %v383, %v387
    %390 = vmatprep.subr.mxu0 0.0
    %391 = vmatpush1.msra.mxu0 %v379
    %392 = vmatprep.subr.mxu0 0.0
    %393 = vmatpush1.msra.mxu0 %v380
    %394 = vmatprep.subr.mxu0 0.0
    %395 = vmatpush1.msra.mxu0 %v381
    %396 = vmatprep.subr.mxu0 0.0
    %397 = vmatpush1.msra.mxu0 %v382
    %398 = vmatprep.subr.mxu0 0.0
    %399 = vmatpush1.msra.mxu0 0.0
    %400 = vmatprep.subr.mxu0 0.0
    %401 = vmatpush1.msra.mxu0 0.0
    %402 = vmatprep.subr.mxu0 0.0
    %403 = vmatpush1.msra.mxu0 0.0
    %404 = vmatprep.subr.mxu0 0.0
    %405 = vmatpush1.msra.mxu0 0.0
    %406 = vmatprep.subr.mxu0 0.0
    %407 = vmatpush1.msra.mxu0 0.0
    %408 = vmatprep.subr.mxu0 0.0
    %409 = vmatpush1.msra.mxu0 0.0
    %410 = vmatprep.subr.mxu0 0.0
    %411 = vmatpush1.msra.mxu0 0.0
    %412 = vmatprep.subr.mxu0 0.0
    %413 = vmatpush1.msra.mxu0 0.0
    %414 = vmatprep.subr.mxu0 0.0
    %415 = vmatpush1.msra.mxu0 0.0
    %416 = vmatprep.subr.mxu0 0.0
    %417 = vmatpush1.msra.mxu0 0.0
    %418 = vmatprep.subr.mxu0 0.0
    %419 = vmatpush1.msra.mxu0 0.0
    %420 = vmatprep.subr.mxu0 0.0
    %421 = vmatpush1.msra.mxu0 0.0
    %422 = vmatprep.subr.mxu0 0.0
    %423 = vmatpush1.msra.mxu0 0.0
    %424 = vmatprep.subr.mxu0 0.0
    %425 = vmatpush1.msra.mxu0 0.0
    %426 = vmatprep.subr.mxu0 0.0
    %427 = vmatpush1.msra.mxu0 0.0
    %428 = vmatprep.subr.mxu0 0.0
    %429 = vmatpush1.msra.mxu0 0.0
    %430 = vmatprep.subr.mxu0 0.0
    %431 = vmatpush1.msra.mxu0 0.0
    %432 = vmatprep.subr.mxu0 0.0
    %433 = vmatpush1.msra.mxu0 0.0
    %434 = vmatprep.subr.mxu0 0.0
    %435 = vmatpush1.msra.mxu0 0.0
    %436 = vmatprep.subr.mxu0 0.0
    %437 = vmatpush1.msra.mxu0 0.0
    %438 = vmatprep.subr.mxu0 0.0
    %439 = vmatpush1.msra.mxu0 0.0
    %440 = vmatprep.subr.mxu0 0.0
    %441 = vmatpush1.msra.mxu0 0.0
    %442 = vmatprep.subr.mxu0 0.0
    %443 = vmatpush1.msra.mxu0 0.0
    %444 = vmatprep.subr.mxu0 0.0
    %445 = vmatpush1.msra.mxu0 0.0
    %446 = vmatprep.subr.mxu0 0.0
    %447 = vmatpush1.msra.mxu0 0.0
    %448 = vmatprep.subr.mxu0 0.0
    %449 = vmatpush1.msra.mxu0 0.0
    %450 = vmatprep.subr.mxu0 0.0
    %451 = vmatpush1.msra.mxu0 0.0
    %452 = vmatprep.subr.mxu0 0.0
    %453 = vmatpush1.msra.mxu0 0.0
    %454 = vmatprep.mubr.f32.mxu0 0.0
    %455 = vmatmul.mubr.f32.gmra.mrb[0].mxu0 %v278
    %v456 = vpop.f32.mrb[0].mxu0
    %v457 = vadd.f32 %v388, %v456
    %v458 = vpop.f32.mrb[0].mxu0
    %459 = vdwg.mxu0
    %v460 = vmul.f32 %v457, 1.442695
    %v461 = vpow.pop %v460
    %v462 = vrsqrt.pop %v461
    %v463 = vmul.f32 %v461, %v462
    %vm464 = vcmp.eq.f32.partialorder %v461, inf
    %v465 = vsel %vm464, %v461, %v463
    %vm466 = vcmp.eq.f32.partialorder %v461, 0.0
    %v467 = vand.u32 %v461, 2147483648
    %v468 = vsel %vm466, %v467, %v465
    %v469 = vld [vmem:[%s21] sm:$0x3]
    %471 = vrot.lane.b32.xlu0 %v469, 16
    %v472 = vpop.permute.xlu0 %471
    %v474 = vmul.f32 %v468, %v472
    %476 = vrot.lane.b32.xlu0 %v474, 112
    %v477 = vpop.permute.xlu0 %476
    %v479 = vadd.f32 %v457, %v477
    %v480 = vld [vmem:[%s15] sm:$0xff]
    %v481 = vld [vmem:[%s15 + $0x8] sm:$0xff]
    %v482 = vld [vmem:[%s17] sm:$0x1]
    %v484 = vlaneseq
    %v485 = vshrl.u32 %v484, 7
    %v486 = vsub.s32 0, %v485
    %v487 = vrot.slane %v482, %v486
    %vm489 = vcmask 130048
    %v491 = vsel %vm489, %v479, 0
    %493 = vmatprep.subr.mxu0 0.0
    %494 = vmatpush1.msra.mxu0 %v480
    %495 = vmatprep.subr.mxu0 0.0
    %496 = vmatpush1.msra.mxu0 %v481
    %497 = vmatprep.subr.mxu0 0.0
    %498 = vmatpush1.msra.mxu0 0.0
    %499 = vmatprep.subr.mxu0 0.0
    %500 = vmatpush1.msra.mxu0 0.0
    %501 = vmatprep.subr.mxu0 0.0
    %502 = vmatpush1.msra.mxu0 0.0
    %503 = vmatprep.subr.mxu0 0.0
    %504 = vmatpush1.msra.mxu0 0.0
    %505 = vmatprep.subr.mxu0 0.0
    %506 = vmatpush1.msra.mxu0 0.0
    %507 = vmatprep.subr.mxu0 0.0
    %508 = vmatpush1.msra.mxu0 0.0
    %509 = vmatprep.subr.mxu0 0.0
    %510 = vmatpush1.msra.mxu0 0.0
    %511 = vmatprep.subr.mxu0 0.0
    %512 = vmatpush1.msra.mxu0 0.0
    %513 = vmatprep.subr.mxu0 0.0
    %514 = vmatpush1.msra.mxu0 0.0
    %515 = vmatprep.subr.mxu0 0.0
    %516 = vmatpush1.msra.mxu0 0.0
    %517 = vmatprep.subr.mxu0 0.0
    %518 = vmatpush1.msra.mxu0 0.0
    %519 = vmatprep.subr.mxu0 0.0
    %520 = vmatpush1.msra.mxu0 0.0
    %521 = vmatprep.subr.mxu0 0.0
    %522 = vmatpush1.msra.mxu0 0.0
    %523 = vmatprep.subr.mxu0 0.0
    %524 = vmatpush1.msra.mxu0 0.0
    %525 = vmatprep.subr.mxu0 0.0
    %526 = vmatpush1.msra.mxu0 0.0
    %527 = vmatprep.subr.mxu0 0.0
    %528 = vmatpush1.msra.mxu0 0.0
    %529 = vmatprep.subr.mxu0 0.0
    %530 = vmatpush1.msra.mxu0 0.0
    %531 = vmatprep.subr.mxu0 0.0
    %532 = vmatpush1.msra.mxu0 0.0
    %533 = vmatprep.subr.mxu0 0.0
    %534 = vmatpush1.msra.mxu0 0.0
    %535 = vmatprep.subr.mxu0 0.0
    %536 = vmatpush1.msra.mxu0 0.0
    %537 = vmatprep.subr.mxu0 0.0
    %538 = vmatpush1.msra.mxu0 0.0
    %539 = vmatprep.subr.mxu0 0.0
    %540 = vmatpush1.msra.mxu0 0.0
    %541 = vmatprep.subr.mxu0 0.0
    %542 = vmatpush1.msra.mxu0 0.0
    %543 = vmatprep.subr.mxu0 0.0
    %544 = vmatpush1.msra.mxu0 0.0
    %545 = vmatprep.subr.mxu0 0.0
    %546 = vmatpush1.msra.mxu0 0.0
    %547 = vmatprep.subr.mxu0 0.0
    %548 = vmatpush1.msra.mxu0 0.0
    %549 = vmatprep.subr.mxu0 0.0
    %550 = vmatpush1.msra.mxu0 0.0
    %551 = vmatprep.subr.mxu0 0.0
    %552 = vmatpush1.msra.mxu0 0.0
    %553 = vmatprep.subr.mxu0 0.0
    %554 = vmatpush1.msra.mxu0 0.0
    %555 = vmatprep.subr.mxu0 0.0
    %556 = vmatpush1.msra.mxu0 0.0
    %557 = vmatprep.mubr.f32.mxu0 0.0
    %558 = vmatmul.mubr.f32.gmra.mrb[0].mxu0 %v491
    %v559 = vpop.f32.mrb[0].mxu0
    %v560 = vadd.f32 %v487, %v559
    %v561 = vpop.f32.mrb[0].mxu0
    %562 = vdwg.mxu0
    %v563 = vtanh.pop %v560
    %564 = vst.msk [vmem:[#allocation12] sm:$0x3] %vm263, %v563
    %v565 = vadd.f32 %v457, 1.0
    %v566 = vmul.f32 %v457, %v457
    %568 = vrot.lane.b32.xlu0 %v566, 16
    %v569 = vpop.permute.xlu0 %568
    %v571 = vsub.f32 %v565, %v569
    %v572 = vsub.f32 %v571, %v461
    %574 = vrot.lane.b32.xlu0 %v572, 112
    %v575 = vpop.permute.xlu0 %574
    %vm577 = vcmask 123904
    %v578 = vsel %vm577, %v575, 0.0
    %579 = vadd.xlane.f32.xlu0 %v578
    %v580 = vpop.xlane.xlu0 %579
    %v581 = vsel %vm368, %v580, 0.0
    %v582 = vrot.slane %v581, 4
    %v583 = vadd.f32 %v581, %v582
    %v584 = vrot.slane %v583, 2
    %v585 = vadd.f32 %v583, %v584
    %v586 = vrot.slane %v585, 1
    %v587 = vadd.f32 %v585, %v586
    %v588 = vmul.f32 %v587, -0.0078125
    %589 = vst.msk [vmem:[#allocation13] sm:$0x1] %vm377, %v588
    %v590 = vsub.f32 0.0, %v479
    %v591 = vmul.f32 %v590, 1.442695
    %v592 = vpow.pop %v591
    %v593 = vadd.f32 %v592, 1.0
    %v594 = vrcp.pop %v593
    %595 = vst.msk [vmem:[#allocation10] sm:$0x3] %vm577, %v594
    %v596 = vld [vmem:[%s23] sm:$0xff]
    %v597 = vld [vmem:[%s23 + $0x8] sm:$0xff]
    %v598 = vld [vmem:[%s23 + $0x10] sm:$0xff]
    %v599 = vld [vmem:[%s23 + $0x18] sm:$0xff]
    %v600 = vld [vmem:[%s23 + $0x20] sm:$0xff]
    %v601 = vld [vmem:[%s23 + $0x28] sm:$0xff]
    %v602 = vld [vmem:[%s23 + $0x30] sm:$0x3]
    %v603 = vld [vmem:[%s27] sm:$0x3f]
    %v604 = vld [vmem:[%s29] sm:$0x1]
    %v606 = vlaneseq
    %v607 = vshrl.u32 %v606, 7
    %v608 = vsub.s32 0, %v607
    %v609 = vrot.slane %v604, %v608
    %v612 = vsel %vm165, %v596, 0
    %v615 = vsel %vm165, %v597, 0
    %v618 = vsel %vm165, %v598, 0
    %v621 = vsel %vm165, %v599, 0
    %v624 = vsel %vm165, %v600, 0
    %v627 = vsel %vm165, %v601, 0
    %v630 = vsel %vm165, %v602, 0
    %v633 = vsel %vm169, %v603, 0
    %635 = vmatprep.subr.mxu0 0.0
    %636 = vmatpush1.msra.mxu0 %v633
    %637 = vmatprep.subr.mxu0 0.0
    %638 = vmatpush1.msra.mxu0 0.0
    %639 = vmatprep.subr.mxu0 0.0
    %640 = vmatpush1.msra.mxu0 0.0
    %641 = vmatprep.subr.mxu0 0.0
    %642 = vmatpush1.msra.mxu0 0.0
    %643 = vmatprep.subr.mxu0 0.0
    %644 = vmatpush1.msra.mxu0 0.0
    %645 = vmatprep.subr.mxu0 0.0
    %646 = vmatpush1.msra.mxu0 0.0
    %647 = vmatprep.subr.mxu0 0.0
    %648 = vmatpush1.msra.mxu0 0.0
    %649 = vmatprep.subr.mxu0 0.0
    %650 = vmatpush1.msra.mxu0 0.0
    %651 = vmatprep.subr.mxu0 0.0
    %652 = vmatpush1.msra.mxu0 0.0
    %653 = vmatprep.subr.mxu0 0.0
    %654 = vmatpush1.msra.mxu0 0.0
    %655 = vmatprep.subr.mxu0 0.0
    %656 = vmatpush1.msra.mxu0 0.0
    %657 = vmatprep.subr.mxu0 0.0
    %658 = vmatpush1.msra.mxu0 0.0
    %659 = vmatprep.subr.mxu0 0.0
    %660 = vmatpush1.msra.mxu0 0.0
    %661 = vmatprep.subr.mxu0 0.0
    %662 = vmatpush1.msra.mxu0 0.0
    %663 = vmatprep.subr.mxu0 0.0
    %664 = vmatpush1.msra.mxu0 0.0
    %665 = vmatprep.subr.mxu0 0.0
    %666 = vmatpush1.msra.mxu0 0.0
    %667 = vmatprep.subr.mxu0 0.0
    %668 = vmatpush1.msra.mxu0 0.0
    %669 = vmatprep.subr.mxu0 0.0
    %670 = vmatpush1.msra.mxu0 0.0
    %671 = vmatprep.subr.mxu0 0.0
    %672 = vmatpush1.msra.mxu0 0.0
    %673 = vmatprep.subr.mxu0 0.0
    %674 = vmatpush1.msra.mxu0 0.0
    %675 = vmatprep.subr.mxu0 0.0
    %676 = vmatpush1.msra.mxu0 0.0
    %677 = vmatprep.subr.mxu0 0.0
    %678 = vmatpush1.msra.mxu0 0.0
    %679 = vmatprep.subr.mxu0 0.0
    %680 = vmatpush1.msra.mxu0 0.0
    %681 = vmatprep.subr.mxu0 0.0
    %682 = vmatpush1.msra.mxu0 0.0
    %683 = vmatprep.subr.mxu0 0.0
    %684 = vmatpush1.msra.mxu0 0.0
    %685 = vmatprep.subr.mxu0 0.0
    %686 = vmatpush1.msra.mxu0 0.0
    %687 = vmatprep.subr.mxu0 0.0
    %688 = vmatpush1.msra.mxu0 0.0
    %689 = vmatprep.subr.mxu0 0.0
    %690 = vmatpush1.msra.mxu0 0.0
    %691 = vmatprep.subr.mxu0 0.0
    %692 = vmatpush1.msra.mxu0 0.0
    %693 = vmatprep.subr.mxu0 0.0
    %694 = vmatpush1.msra.mxu0 0.0
    %695 = vmatprep.subr.mxu0 0.0
    %696 = vmatpush1.msra.mxu0 0.0
    %697 = vmatprep.subr.mxu0 0.0
    %698 = vmatpush1.msra.mxu0 0.0
    %699 = vmatprep.mubr.f32.mxu0 0.0
    %700 = vmatmul.mubr.f32.gmra.mrb[0].mxu0 %v612
    %v701 = vpop.f32.mrb[0].mxu0
    %v702 = vadd.f32 %v609, %v701
    %v703 = vpop.f32.mrb[0].mxu0
    %704 = vmatprep.mubr.f32.mxu0 0.0
    %705 = vmatmul.mubr.f32.gmra.mrb[0].mxu0 %v615
    %v706 = vpop.f32.mrb[0].mxu0
    %v707 = vadd.f32 %v609, %v706
    %v708 = vpop.f32.mrb[0].mxu0
    %709 = vmatprep.mubr.f32.mxu0 0.0
    %710 = vmatmul.mubr.f32.gmra.mrb[0].mxu0 %v618
    %v711 = vpop.f32.mrb[0].mxu0
    %v712 = vadd.f32 %v609, %v711
    %v713 = vpop.f32.mrb[0].mxu0
    %714 = vmatprep.mubr.f32.mxu0 0.0
    %715 = vmatmul.mubr.f32.gmra.mrb[0].mxu0 %v621
    %v716 = vpop.f32.mrb[0].mxu0
    %v717 = vadd.f32 %v609, %v716
    %v718 = vpop.f32.mrb[0].mxu0
    %719 = vmatprep.mubr.f32.mxu0 0.0
    %720 = vmatmul.mubr.f32.gmra.mrb[0].mxu0 %v624
    %v721 = vpop.f32.mrb[0].mxu0
    %v722 = vadd.f32 %v609, %v721
    %v723 = vpop.f32.mrb[0].mxu0
    %724 = vmatprep.mubr.f32.mxu0 0.0
    %725 = vmatmul.mubr.f32.gmra.mrb[0].mxu0 %v627
    %v726 = vpop.f32.mrb[0].mxu0
    %v727 = vadd.f32 %v609, %v726
    %v728 = vpop.f32.mrb[0].mxu0
    %729 = vmatprep.mubr.f32.mxu0 0.0
    %730 = vmatmul.mubr.f32.gmra.mrb[0].mxu0 %v630
    %v731 = vpop.f32.mrb[0].mxu0
    %v732 = vadd.f32 %v609, %v731
    %v733 = vpop.f32.mrb[0].mxu0
    %734 = vdwg.mxu0
    %vm735 = vcmask 244736
    %v736 = vsel %vm735, %v702, 0.0
    %v737 = vsel %vm735, %v707, 0.0
    %v738 = vadd.f32 %v736, %v737
    %v739 = vsel %vm735, %v712, 0.0
    %v740 = vadd.f32 %v738, %v739
    %v741 = vsel %vm735, %v717, 0.0
    %v742 = vadd.f32 %v740, %v741
    %v743 = vsel %vm735, %v722, 0.0
    %v744 = vadd.f32 %v742, %v743
    %v745 = vsel %vm735, %v727, 0.0
    %v746 = vadd.f32 %v744, %v745
    %vm747 = vcmask 238592
    %v748 = vsel %vm747, %v732, 0.0
    %v749 = vadd.f32 %v746, %v748
    %v750 = vrot.slane %v749, 4
    %v751 = vadd.f32 %v749, %v750
    %v752 = vrot.slane %v751, 2
    %v753 = vadd.f32 %v751, %v752
    %v754 = vrot.slane %v753, 1
    %v755 = vadd.f32 %v753, %v754
    %v756 = vrcp.pop 50.0
    %v757 = vmul.f32 %v755, %v756
    %v758 = vsub.f32 %v702, %v757
    %v759 = vsub.f32 %v707, %v757
    %v760 = vsub.f32 %v712, %v757
    %v761 = vsub.f32 %v717, %v757
    %v762 = vsub.f32 %v722, %v757
    %v763 = vsub.f32 %v727, %v757
    %v764 = vsub.f32 %v732, %v757
    %v765 = vmul.f32 %v758, %v758
    %v766 = vmul.f32 %v759, %v759
    %v767 = vmul.f32 %v760, %v760
    %v768 = vmul.f32 %v761, %v761
    %v769 = vmul.f32 %v762, %v762
    %v770 = vmul.f32 %v763, %v763
    %v771 = vmul.f32 %v764, %v764
    %v772 = vsel %vm735, %v765, 0.0
    %v773 = vsel %vm735, %v766, 0.0
    %v774 = vadd.f32 %v772, %v773
    %v775 = vsel %vm735, %v767, 0.0
    %v776 = vadd.f32 %v774, %v775
    %v777 = vsel %vm735, %v768, 0.0
    %v778 = vadd.f32 %v776, %v777
    %v779 = vsel %vm735, %v769, 0.0
    %v780 = vadd.f32 %v778, %v779
    %v781 = vsel %vm735, %v770, 0.0
    %v782 = vadd.f32 %v780, %v781
    %v783 = vsel %vm747, %v771, 0.0
    %v784 = vadd.f32 %v782, %v783
    %v785 = vrot.slane %v784, 4
    %v786 = vadd.f32 %v784, %v785
    %v787 = vrot.slane %v786, 2
    %v788 = vadd.f32 %v786, %v787
    %v789 = vrot.slane %v788, 1
    %v790 = vadd.f32 %v788, %v789
    %v791 = vmul.f32 %v790, %v756
    %v792 = vld [vmem:[%s31] sm:$0x1]
    %v793 = vadd.f32 %v791, 1e-05
    %v794 = vrsqrt.pop %v793
    %v795 = vmul.f32 %v792, %v794
    %v796 = vld [vmem:[%s33] sm:$0x1]
    %v797 = vmul.f32 %v757, %v795
    %v798 = vsub.f32 %v796, %v797
    %v799 = vmul.f32 %v604, %v795
    %v800 = vadd.f32 %v798, %v799
    %v801 = vld [vmem:[%s37] sm:$0xff]
    %v802 = vld [vmem:[%s37 + $0x8] sm:$0xff]
    %v803 = vld [vmem:[%s37 + $0x10] sm:$0xff]
    %v804 = vld [vmem:[%s37 + $0x18] sm:$0xff]
    %v805 = vld [vmem:[%s37 + $0x20] sm:$0xff]
    %v806 = vld [vmem:[%s37 + $0x28] sm:$0xff]
    %v807 = vld [vmem:[%s37 + $0x30] sm:$0xff]
    %v808 = vld [vmem:[%s37 + $0x38] sm:$0xff]
    %v809 = vld [vmem:[%s37 + $0x40] sm:$0xff]
    %v810 = vld [vmem:[%s37 + $0x48] sm:$0x3f]
    %v811 = vld [vmem:[%s37 + $0x50] sm:$0x3f]
    %v812 = vld [vmem:[%s37 + $0x58] sm:$0x3f]
    %v814 = vsel %vm735, %v795, 0
    %v817 = vsel %vm169, %v810, 0
    %v820 = vsel %vm169, %v811, 0
    %v823 = vsel %vm169, %v812, 0
    %825 = vmatprep.subr.mxu0 %v802
    %826 = vmatpush1.msra.mxu0 %v801
    %827 = vmatprep.subr.mxu0 %v805
    %828 = vmatpush1.msra.mxu0 %v804
    %829 = vmatprep.subr.mxu0 %v808
    %830 = vmatpush1.msra.mxu0 %v807
    %831 = vmatprep.subr.mxu0 %v820
    %832 = vmatpush1.msra.mxu0 %v817
    %833 = vmatprep.subr.mxu0 0.0
    %834 = vmatpush1.msra.mxu0 0.0
    %835 = vmatprep.subr.mxu0 0.0
    %836 = vmatpush1.msra.mxu0 0.0
    %837 = vmatprep.subr.mxu0 0.0
    %838 = vmatpush1.msra.mxu0 0.0
    %839 = vmatprep.subr.mxu0 0.0
    %840 = vmatpush1.msra.mxu0 0.0
    %841 = vmatprep.subr.mxu0 0.0
    %842 = vmatpush1.msra.mxu0 0.0
    %843 = vmatprep.subr.mxu0 0.0
    %844 = vmatpush1.msra.mxu0 0.0
    %845 = vmatprep.subr.mxu0 0.0
    %846 = vmatpush1.msra.mxu0 0.0
    %847 = vmatprep.subr.mxu0 0.0
    %848 = vmatpush1.msra.mxu0 0.0
    %849 = vmatprep.subr.mxu0 0.0
    %850 = vmatpush1.msra.mxu0 0.0
    %851 = vmatprep.subr.mxu0 0.0
    %852 = vmatpush1.msra.mxu0 0.0
    %853 = vmatprep.subr.mxu0 0.0
    %854 = vmatpush1.msra.mxu0 0.0
    %855 = vmatprep.subr.mxu0 0.0
    %856 = vmatpush1.msra.mxu0 0.0
    %857 = vmatprep.subr.mxu0 0.0
    %858 = vmatpush1.msra.mxu0 0.0
    %859 = vmatprep.subr.mxu0 0.0
    %860 = vmatpush1.msra.mxu0 0.0
    %861 = vmatprep.subr.mxu0 0.0
    %862 = vmatpush1.msra.mxu0 0.0
    %863 = vmatprep.subr.mxu0 0.0
    %864 = vmatpush1.msra.mxu0 0.0
    %865 = vmatprep.subr.mxu0 0.0
    %866 = vmatpush1.msra.mxu0 0.0
    %867 = vmatprep.subr.mxu0 0.0
    %868 = vmatpush1.msra.mxu0 0.0
    %869 = vmatprep.subr.mxu0 0.0
    %870 = vmatpush1.msra.mxu0 0.0
    %871 = vmatprep.subr.mxu0 0.0
    %872 = vmatpush1.msra.mxu0 0.0
    %873 = vmatprep.subr.mxu0 0.0
    %874 = vmatpush1.msra.mxu0 0.0
    %875 = vmatprep.subr.mxu0 0.0
    %876 = vmatpush1.msra.mxu0 0.0
    %877 = vmatprep.subr.mxu0 0.0
    %878 = vmatpush1.msra.mxu0 0.0
    %879 = vmatprep.subr.mxu0 0.0
    %880 = vmatpush1.msra.mxu0 0.0
    %881 = vmatprep.subr.mxu0 0.0
    %882 = vmatpush1.msra.mxu0 0.0
    %883 = vmatprep.subr.mxu0 0.0
    %884 = vmatpush1.msra.mxu0 0.0
    %885 = vmatprep.subr.mxu0 0.0
    %886 = vmatpush1.msra.mxu0 0.0
    %887 = vmatprep.subr.mxu0 0.0
    %888 = vmatpush1.msra.mxu0 0.0
    %889 = vmatprep.mubr.f32.mxu0 0.0
    %890 = vmatmul.mubr.f32.gmra.mrb[0].mxu0 %v814
    %v891 = vpop.f32.mrb[0].mxu0
    %v892 = vadd.f32 0.0, %v891
    %v893 = vpop.f32.mrb[0].mxu0
    %v894 = vadd.f32 0.0, %v893
    %895 = vdwg.mxu0
    %896 = vmatprep.subr.mxu0 0.0
    %897 = vmatpush1.msra.mxu0 %v803
    %898 = vmatprep.subr.mxu0 0.0
    %899 = vmatpush1.msra.mxu0 %v806
    %900 = vmatprep.subr.mxu0 0.0
    %901 = vmatpush1.msra.mxu0 %v809
    %902 = vmatprep.subr.mxu0 0.0
    %903 = vmatpush1.msra.mxu0 %v823
    %904 = vmatprep.subr.mxu0 0.0
    %905 = vmatpush1.msra.mxu0 0.0
    %906 = vmatprep.subr.mxu0 0.0
    %907 = vmatpush1.msra.mxu0 0.0
    %908 = vmatprep.subr.mxu0 0.0
    %909 = vmatpush1.msra.mxu0 0.0
    %910 = vmatprep.subr.mxu0 0.0
    %911 = vmatpush1.msra.mxu0 0.0
    %912 = vmatprep.subr.mxu0 0.0
    %913 = vmatpush1.msra.mxu0 0.0
    %914 = vmatprep.subr.mxu0 0.0
    %915 = vmatpush1.msra.mxu0 0.0
    %916 = vmatprep.subr.mxu0 0.0
    %917 = vmatpush1.msra.mxu0 0.0
    %918 = vmatprep.subr.mxu0 0.0
    %919 = vmatpush1.msra.mxu0 0.0
    %920 = vmatprep.subr.mxu0 0.0
    %921 = vmatpush1.msra.mxu0 0.0
    %922 = vmatprep.subr.mxu0 0.0
    %923 = vmatpush1.msra.mxu0 0.0
    %924 = vmatprep.subr.mxu0 0.0
    %925 = vmatpush1.msra.mxu0 0.0
    %926 = vmatprep.subr.mxu0 0.0
    %927 = vmatpush1.msra.mxu0 0.0
    %928 = vmatprep.subr.mxu0 0.0
    %929 = vmatpush1.msra.mxu0 0.0
    %930 = vmatprep.subr.mxu0 0.0
    %931 = vmatpush1.msra.mxu0 0.0
    %932 = vmatprep.subr.mxu0 0.0
    %933 = vmatpush1.msra.mxu0 0.0
    %934 = vmatprep.subr.mxu0 0.0
    %935 = vmatpush1.msra.mxu0 0.0
    %936 = vmatprep.subr.mxu0 0.0
    %937 = vmatpush1.msra.mxu0 0.0
    %938 = vmatprep.subr.mxu0 0.0
    %939 = vmatpush1.msra.mxu0 0.0
    %940 = vmatprep.subr.mxu0 0.0
    %941 = vmatpush1.msra.mxu0 0.0
    %942 = vmatprep.subr.mxu0 0.0
    %943 = vmatpush1.msra.mxu0 0.0
    %944 = vmatprep.subr.mxu0 0.0
    %945 = vmatpush1.msra.mxu0 0.0
    %946 = vmatprep.subr.mxu0 0.0
    %947 = vmatpush1.msra.mxu0 0.0
    %948 = vmatprep.subr.mxu0 0.0
    %949 = vmatpush1.msra.mxu0 0.0
    %950 = vmatprep.subr.mxu0 0.0
    %951 = vmatpush1.msra.mxu0 0.0
    %952 = vmatprep.subr.mxu0 0.0
    %953 = vmatpush1.msra.mxu0 0.0
    %954 = vmatprep.subr.mxu0 0.0
    %955 = vmatpush1.msra.mxu0 0.0
    %956 = vmatprep.subr.mxu0 0.0
    %957 = vmatpush1.msra.mxu0 0.0
    %958 = vmatprep.subr.mxu0 0.0
    %959 = vmatpush1.msra.mxu0 0.0
    %960 = vmatprep.mubr.f32.mxu0 0.0
    %961 = vmatmul.mubr.f32.gmra.mrb[0].mxu0 %v814
    %v962 = vpop.f32.mrb[0].mxu0
    %v963 = vadd.f32 0.0, %v962
    %v964 = vpop.f32.mrb[0].mxu0
    %965 = vdwg.mxu0
    %v967 = vsel %vm735, %v800, 0
    %969 = vmatprep.subr.mxu0 %v802
    %970 = vmatpush1.msra.mxu0 %v801
    %971 = vmatprep.subr.mxu0 %v805
    %972 = vmatpush1.msra.mxu0 %v804
    %973 = vmatprep.subr.mxu0 %v808
    %974 = vmatpush1.msra.mxu0 %v807
    %975 = vmatprep.subr.mxu0 %v820
    %976 = vmatpush1.msra.mxu0 %v817
    %977 = vmatprep.subr.mxu0 0.0
    %978 = vmatpush1.msra.mxu0 0.0
    %979 = vmatprep.subr.mxu0 0.0
    %980 = vmatpush1.msra.mxu0 0.0
    %981 = vmatprep.subr.mxu0 0.0
    %982 = vmatpush1.msra.mxu0 0.0
    %983 = vmatprep.subr.mxu0 0.0
    %984 = vmatpush1.msra.mxu0 0.0
    %985 = vmatprep.subr.mxu0 0.0
    %986 = vmatpush1.msra.mxu0 0.0
    %987 = vmatprep.subr.mxu0 0.0
    %988 = vmatpush1.msra.mxu0 0.0
    %989 = vmatprep.subr.mxu0 0.0
    %990 = vmatpush1.msra.mxu0 0.0
    %991 = vmatprep.subr.mxu0 0.0
    %992 = vmatpush1.msra.mxu0 0.0
    %993 = vmatprep.subr.mxu0 0.0
    %994 = vmatpush1.msra.mxu0 0.0
    %995 = vmatprep.subr.mxu0 0.0
    %996 = vmatpush1.msra.mxu0 0.0
    %997 = vmatprep.subr.mxu0 0.0
    %998 = vmatpush1.msra.mxu0 0.0
    %999 = vmatprep.subr.mxu0 0.0
    %1000 = vmatpush1.msra.mxu0 0.0
    %1001 = vmatprep.subr.mxu0 0.0
    %1002 = vmatpush1.msra.mxu0 0.0
    %1003 = vmatprep.subr.mxu0 0.0
    %1004 = vmatpush1.msra.mxu0 0.0
    %1005 = vmatprep.subr.mxu0 0.0
    %1006 = vmatpush1.msra.mxu0 0.0
    %1007 = vmatprep.subr.mxu0 0.0
    %1008 = vmatpush1.msra.mxu0 0.0
    %1009 = vmatprep.subr.mxu0 0.0
    %1010 = vmatpush1.msra.mxu0 0.0
    %1011 = vmatprep.subr.mxu0 0.0
    %1012 = vmatpush1.msra.mxu0 0.0
    %1013 = vmatprep.subr.mxu0 0.0
    %1014 = vmatpush1.msra.mxu0 0.0
    %1015 = vmatprep.subr.mxu0 0.0
    %1016 = vmatpush1.msra.mxu0 0.0
    %1017 = vmatprep.subr.mxu0 0.0
    %1018 = vmatpush1.msra.mxu0 0.0
    %1019 = vmatprep.subr.mxu0 0.0
    %1020 = vmatpush1.msra.mxu0 0.0
    %1021 = vmatprep.subr.mxu0 0.0
    %1022 = vmatpush1.msra.mxu0 0.0
    %1023 = vmatprep.subr.mxu0 0.0
    %1024 = vmatpush1.msra.mxu0 0.0
    %1025 = vmatprep.subr.mxu0 0.0
    %1026 = vmatpush1.msra.mxu0 0.0
    %1027 = vmatprep.subr.mxu0 0.0
    %1028 = vmatpush1.msra.mxu0 0.0
    %1029 = vmatprep.subr.mxu0 0.0
    %1030 = vmatpush1.msra.mxu0 0.0
    %1031 = vmatprep.subr.mxu0 0.0
    %1032 = vmatpush1.msra.mxu0 0.0
    %1033 = vmatprep.mubr.f32.mxu0 0.0
    %1034 = vmatmul.mubr.f32.gmra.mrb[0].mxu0 %v967
    %v1035 = vpop.f32.mrb[0].mxu0
    %v1036 = vadd.f32 0.0, %v1035
    %v1037 = vpop.f32.mrb[0].mxu0
    %v1038 = vadd.f32 0.0, %v1037
    %1039 = vdwg.mxu0
    %1040 = vmatprep.subr.mxu0 0.0
    %1041 = vmatpush1.msra.mxu0 %v803
    %1042 = vmatprep.subr.mxu0 0.0
    %1043 = vmatpush1.msra.mxu0 %v806
    %1044 = vmatprep.subr.mxu0 0.0
    %1045 = vmatpush1.msra.mxu0 %v809
    %1046 = vmatprep.subr.mxu0 0.0
    %1047 = vmatpush1.msra.mxu0 %v823
    %1048 = vmatprep.subr.mxu0 0.0
    %1049 = vmatpush1.msra.mxu0 0.0
    %1050 = vmatprep.subr.mxu0 0.0
    %1051 = vmatpush1.msra.mxu0 0.0
    %1052 = vmatprep.subr.mxu0 0.0
    %1053 = vmatpush1.msra.mxu0 0.0
    %1054 = vmatprep.subr.mxu0 0.0
    %1055 = vmatpush1.msra.mxu0 0.0
    %1056 = vmatprep.subr.mxu0 0.0
    %1057 = vmatpush1.msra.mxu0 0.0
    %1058 = vmatprep.subr.mxu0 0.0
    %1059 = vmatpush1.msra.mxu0 0.0
    %1060 = vmatprep.subr.mxu0 0.0
    %1061 = vmatpush1.msra.mxu0 0.0
    %1062 = vmatprep.subr.mxu0 0.0
    %1063 = vmatpush1.msra.mxu0 0.0
    %1064 = vmatprep.subr.mxu0 0.0
    %1065 = vmatpush1.msra.mxu0 0.0
    %1066 = vmatprep.subr.mxu0 0.0
    %1067 = vmatpush1.msra.mxu0 0.0
    %1068 = vmatprep.subr.mxu0 0.0
    %1069 = vmatpush1.msra.mxu0 0.0
    %1070 = vmatprep.subr.mxu0 0.0
    %1071 = vmatpush1.msra.mxu0 0.0
    %1072 = vmatprep.subr.mxu0 0.0
    %1073 = vmatpush1.msra.mxu0 0.0
    %1074 = vmatprep.subr.mxu0 0.0
    %1075 = vmatpush1.msra.mxu0 0.0
    %1076 = vmatprep.subr.mxu0 0.0
    %1077 = vmatpush1.msra.mxu0 0.0
    %1078 = vmatprep.subr.mxu0 0.0
    %1079 = vmatpush1.msra.mxu0 0.0
    %1080 = vmatprep.subr.mxu0 0.0
    %1081 = vmatpush1.msra.mxu0 0.0
    %1082 = vmatprep.subr.mxu0 0.0
    %1083 = vmatpush1.msra.mxu0 0.0
    %1084 = vmatprep.subr.mxu0 0.0
    %1085 = vmatpush1.msra.mxu0 0.0
    %1086 = vmatprep.subr.mxu0 0.0
    %1087 = vmatpush1.msra.mxu0 0.0
    %1088 = vmatprep.subr.mxu0 0.0
    %1089 = vmatpush1.msra.mxu0 0.0
    %1090 = vmatprep.subr.mxu0 0.0
    %1091 = vmatpush1.msra.mxu0 0.0
    %1092 = vmatprep.subr.mxu0 0.0
    %1093 = vmatpush1.msra.mxu0 0.0
    %1094 = vmatprep.subr.mxu0 0.0
    %1095 = vmatpush1.msra.mxu0 0.0
    %1096 = vmatprep.subr.mxu0 0.0
    %1097 = vmatpush1.msra.mxu0 0.0
    %1098 = vmatprep.subr.mxu0 0.0
    %1099 = vmatpush1.msra.mxu0 0.0
    %1100 = vmatprep.subr.mxu0 0.0
    %1101 = vmatpush1.msra.mxu0 0.0
    %1102 = vmatprep.subr.mxu0 0.0
    %1103 = vmatpush1.msra.mxu0 0.0
    %1104 = vmatprep.mubr.f32.mxu0 0.0
    %1105 = vmatmul.mubr.f32.gmra.mrb[0].mxu0 %v967
    %v1106 = vpop.f32.mrb[0].mxu0
    %v1107 = vadd.f32 0.0, %v1106
    %v1108 = vpop.f32.mrb[0].mxu0
    %1109 = vdwg.mxu0
    %v1110 = vld [vmem:[%s25] sm:$0xff]
    %v1111 = vld [vmem:[%s25 + $0x8] sm:$0xff]
    %v1112 = vld [vmem:[%s25 + $0x10] sm:$0x3]
    %v1113 = vld [vmem:[%s35] sm:$0xff]
    %v1114 = vld [vmem:[%s35 + $0x8] sm:$0xff]
    %v1115 = vld [vmem:[%s35 + $0x10] sm:$0xff]
    %v1116 = vld [vmem:[%s35 + $0x18] sm:$0xff]
    %v1117 = vld [vmem:[%s35 + $0x20] sm:$0xff]
    %v1118 = vld [vmem:[%s35 + $0x28] sm:$0xff]
    %v1119 = vld [vmem:[%s35 + $0x30] sm:$0xff]
    %v1120 = vld [vmem:[%s35 + $0x38] sm:$0xff]
    %v1121 = vld [vmem:[%s35 + $0x40] sm:$0xff]
    %v1122 = vld [vmem:[%s35 + $0x48] sm:$0xff]
    %v1123 = vld [vmem:[%s35 + $0x50] sm:$0xff]
    %v1124 = vld [vmem:[%s35 + $0x58] sm:$0xff]
    %v1125 = vld [vmem:[%s35 + $0x60] sm:$0xff]
    %v1126 = vld [vmem:[%s35 + $0x68] sm:$0xff]
    %v1127 = vld [vmem:[%s35 + $0x70] sm:$0xff]
    %v1128 = vld [vmem:[%s35 + $0x78] sm:$0xff]
    %v1129 = vld [vmem:[%s35 + $0x80] sm:$0xff]
    %v1130 = vld [vmem:[%s35 + $0x88] sm:$0xff]
    %v1131 = vld [vmem:[%s35 + $0x90] sm:$0x3f]
    %v1132 = vld [vmem:[%s35 + $0x98] sm:$0x3f]
    %v1133 = vld [vmem:[%s35 + $0xa0] sm:$0x3f]
    %vm1134 = vcmask 441344
    %v1136 = vsel %vm1134, %v1110, 0
    %v1139 = vsel %vm1134, %v1111, 0
    %v1142 = vsel %vm1134, %v1112, 0
    %v1145 = vsel %vm169, %v1131, 0
    %v1148 = vsel %vm169, %v1132, 0
    %v1151 = vsel %vm169, %v1133, 0
    %1153 = vmatprep.subr.mxu0 %v1114
    %1154 = vmatpush1.msra.mxu0 %v1113
    %1155 = vmatprep.subr.mxu0 %v1117
    %1156 = vmatpush1.msra.mxu0 %v1116
    %1157 = vmatprep.subr.mxu0 %v1120
    %1158 = vmatpush1.msra.mxu0 %v1119
    %1159 = vmatprep.subr.mxu0 %v1123
    %1160 = vmatpush1.msra.mxu0 %v1122
    %1161 = vmatprep.subr.mxu0 %v1126
    %1162 = vmatpush1.msra.mxu0 %v1125
    %1163 = vmatprep.subr.mxu0 %v1129
    %1164 = vmatpush1.msra.mxu0 %v1128
    %1165 = vmatprep.subr.mxu0 %v1148
    %1166 = vmatpush1.msra.mxu0 %v1145
    %1167 = vmatprep.subr.mxu0 0.0
    %1168 = vmatpush1.msra.mxu0 0.0
    %1169 = vmatprep.subr.mxu0 0.0
    %1170 = vmatpush1.msra.mxu0 0.0
    %1171 = vmatprep.subr.mxu0 0.0
    %1172 = vmatpush1.msra.mxu0 0.0
    %1173 = vmatprep.subr.mxu0 0.0
    %1174 = vmatpush1.msra.mxu0 0.0
    %1175 = vmatprep.subr.mxu0 0.0
    %1176 = vmatpush1.msra.mxu0 0.0
    %1177 = vmatprep.subr.mxu0 0.0
    %1178 = vmatpush1.msra.mxu0 0.0
    %1179 = vmatprep.subr.mxu0 0.0
    %1180 = vmatpush1.msra.mxu0 0.0
    %1181 = vmatprep.subr.mxu0 0.0
    %1182 = vmatpush1.msra.mxu0 0.0
    %1183 = vmatprep.subr.mxu0 0.0
    %1184 = vmatpush1.msra.mxu0 0.0
    %1185 = vmatprep.subr.mxu0 0.0
    %1186 = vmatpush1.msra.mxu0 0.0
    %1187 = vmatprep.subr.mxu0 0.0
    %1188 = vmatpush1.msra.mxu0 0.0
    %1189 = vmatprep.subr.mxu0 0.0
    %1190 = vmatpush1.msra.mxu0 0.0
    %1191 = vmatprep.subr.mxu0 0.0
    %1192 = vmatpush1.msra.mxu0 0.0
    %1193 = vmatprep.subr.mxu0 0.0
    %1194 = vmatpush1.msra.mxu0 0.0
    %1195 = vmatprep.subr.mxu0 0.0
    %1196 = vmatpush1.msra.mxu0 0.0
    %1197 = vmatprep.subr.mxu0 0.0
    %1198 = vmatpush1.msra.mxu0 0.0
    %1199 = vmatprep.subr.mxu0 0.0
    %1200 = vmatpush1.msra.mxu0 0.0
    %1201 = vmatprep.subr.mxu0 0.0
    %1202 = vmatpush1.msra.mxu0 0.0
    %1203 = vmatprep.subr.mxu0 0.0
    %1204 = vmatpush1.msra.mxu0 0.0
    %1205 = vmatprep.subr.mxu0 0.0
    %1206 = vmatpush1.msra.mxu0 0.0
    %1207 = vmatprep.subr.mxu0 0.0
    %1208 = vmatpush1.msra.mxu0 0.0
    %1209 = vmatprep.subr.mxu0 0.0
    %1210 = vmatpush1.msra.mxu0 0.0
    %1211 = vmatprep.subr.mxu0 0.0
    %1212 = vmatpush1.msra.mxu0 0.0
    %1213 = vmatprep.subr.mxu0 0.0
    %1214 = vmatpush1.msra.mxu0 0.0
    %1215 = vmatprep.subr.mxu0 0.0
    %1216 = vmatpush1.msra.mxu0 0.0
    %1217 = vmatprep.mubr.f32.mxu0 0.0
    %1218 = vmatmul.mubr.f32.gmra.mrb[0].mxu0 %v1136
    %v1219 = vpop.f32.mrb[0].mxu0
    %v1220 = vadd.f32 0.0, %v1219
    %v1221 = vpop.f32.mrb[0].mxu0
    %v1222 = vadd.f32 0.0, %v1221
    %1223 = vmatprep.mubr.f32.mxu0 0.0
    %1224 = vmatmul.mubr.f32.gmra.mrb[0].mxu0 %v1139
    %v1225 = vpop.f32.mrb[0].mxu0
    %v1226 = vadd.f32 0.0, %v1225
    %v1227 = vpop.f32.mrb[0].mxu0
    %v1228 = vadd.f32 0.0, %v1227
    %1229 = vmatprep.mubr.f32.mxu0 0.0
    %1230 = vmatmul.mubr.f32.gmra.mrb[0].mxu0 %v1142
    %v1231 = vpop.f32.mrb[0].mxu0
    %v1232 = vadd.f32 0.0, %v1231
    %v1233 = vpop.f32.mrb[0].mxu0
    %v1234 = vadd.f32 0.0, %v1233
    %1235 = vdwg.mxu0
    %1236 = vmatprep.subr.mxu0 0.0
    %1237 = vmatpush1.msra.mxu0 %v1115
    %1238 = vmatprep.subr.mxu0 0.0
    %1239 = vmatpush1.msra.mxu0 %v1118
    %1240 = vmatprep.subr.mxu0 0.0
    %1241 = vmatpush1.msra.mxu0 %v1121
    %1242 = vmatprep.subr.mxu0 0.0
    %1243 = vmatpush1.msra.mxu0 %v1124
    %1244 = vmatprep.subr.mxu0 0.0
    %1245 = vmatpush1.msra.mxu0 %v1127
    %1246 = vmatprep.subr.mxu0 0.0
    %1247 = vmatpush1.msra.mxu0 %v1130
    %1248 = vmatprep.subr.mxu0 0.0
    %1249 = vmatpush1.msra.mxu0 %v1151
    %1250 = vmatprep.subr.mxu0 0.0
    %1251 = vmatpush1.msra.mxu0 0.0
    %1252 = vmatprep.subr.mxu0 0.0
    %1253 = vmatpush1.msra.mxu0 0.0
    %1254 = vmatprep.subr.mxu0 0.0
    %1255 = vmatpush1.msra.mxu0 0.0
    %1256 = vmatprep.subr.mxu0 0.0
    %1257 = vmatpush1.msra.mxu0 0.0
    %1258 = vmatprep.subr.mxu0 0.0
    %1259 = vmatpush1.msra.mxu0 0.0
    %1260 = vmatprep.subr.mxu0 0.0
    %1261 = vmatpush1.msra.mxu0 0.0
    %1262 = vmatprep.subr.mxu0 0.0
    %1263 = vmatpush1.msra.mxu0 0.0
    %1264 = vmatprep.subr.mxu0 0.0
    %1265 = vmatpush1.msra.mxu0 0.0
    %1266 = vmatprep.subr.mxu0 0.0
    %1267 = vmatpush1.msra.mxu0 0.0
    %1268 = vmatprep.subr.mxu0 0.0
    %1269 = vmatpush1.msra.mxu0 0.0
    %1270 = vmatprep.subr.mxu0 0.0
    %1271 = vmatpush1.msra.mxu0 0.0
    %1272 = vmatprep.subr.mxu0 0.0
    %1273 = vmatpush1.msra.mxu0 0.0
    %1274 = vmatprep.subr.mxu0 0.0
    %1275 = vmatpush1.msra.mxu0 0.0
    %1276 = vmatprep.subr.mxu0 0.0
    %1277 = vmatpush1.msra.mxu0 0.0
    %1278 = vmatprep.subr.mxu0 0.0
    %1279 = vmatpush1.msra.mxu0 0.0
    %1280 = vmatprep.subr.mxu0 0.0
    %1281 = vmatpush1.msra.mxu0 0.0
    %1282 = vmatprep.subr.mxu0 0.0
    %1283 = vmatpush1.msra.mxu0 0.0
    %1284 = vmatprep.subr.mxu0 0.0
    %1285 = vmatpush1.msra.mxu0 0.0
    %1286 = vmatprep.subr.mxu0 0.0
    %1287 = vmatpush1.msra.mxu0 0.0
    %1288 = vmatprep.subr.mxu0 0.0
    %1289 = vmatpush1.msra.mxu0 0.0
    %1290 = vmatprep.subr.mxu0 0.0
    %1291 = vmatpush1.msra.mxu0 0.0
    %1292 = vmatprep.subr.mxu0 0.0
    %1293 = vmatpush1.msra.mxu0 0.0
    %1294 = vmatprep.subr.mxu0 0.0
    %1295 = vmatpush1.msra.mxu0 0.0
    %1296 = vmatprep.subr.mxu0 0.0
    %1297 = vmatpush1.msra.mxu0 0.0
    %1298 = vmatprep.subr.mxu0 0.0
    %1299 = vmatpush1.msra.mxu0 0.0
    %1300 = vmatprep.mubr.f32.mxu0 0.0
    %1301 = vmatmul.mubr.f32.gmra.mrb[0].mxu0 %v1136
    %v1302 = vpop.f32.mrb[0].mxu0
    %v1303 = vadd.f32 0.0, %v1302
    %v1304 = vpop.f32.mrb[0].mxu0
    %1305 = vmatprep.mubr.f32.mxu0 0.0
    %1306 = vmatmul.mubr.f32.gmra.mrb[0].mxu0 %v1139
    %v1307 = vpop.f32.mrb[0].mxu0
    %v1308 = vadd.f32 0.0, %v1307
    %v1309 = vpop.f32.mrb[0].mxu0
    %1310 = vmatprep.mubr.f32.mxu0 0.0
    %1311 = vmatmul.mubr.f32.gmra.mrb[0].mxu0 %v1142
    %v1312 = vpop.f32.mrb[0].mxu0
    %v1313 = vadd.f32 0.0, %v1312
    %v1314 = vpop.f32.mrb[0].mxu0
    %1315 = vdwg.mxu0
    %v1316 = vlaneseq
    %v1317 = vshrl.u32 %v1316, 7
    %v1318 = vsub.s32 0, %v1317
    %v1319 = vrot.slane %v892, %v1318
    %v1320 = vlaneseq
    %v1321 = vshrl.u32 %v1320, 7
    %v1322 = vsub.s32 0, %v1321
    %v1323 = vrot.slane %v894, %v1322
    %v1324 = vlaneseq
    %v1325 = vshrl.u32 %v1324, 7
    %v1326 = vsub.s32 0, %v1325
    %v1327 = vrot.slane %v963, %v1326
    %v1328 = vmul.f32 %v1220, %v1319
    %v1329 = vmul.f32 %v1222, %v1323
    %v1330 = vmul.f32 %v1303, %v1327
    %v1331 = vmul.f32 %v1226, %v1319
    %v1332 = vmul.f32 %v1228, %v1323
    %v1333 = vmul.f32 %v1308, %v1327
    %v1334 = vmul.f32 %v1232, %v1319
    %v1335 = vmul.f32 %v1234, %v1323
    %v1336 = vmul.f32 %v1313, %v1327
    %v1337 = vlaneseq
    %v1338 = vshrl.u32 %v1337, 7
    %v1339 = vsub.s32 0, %v1338
    %v1340 = vrot.slane %v1036, %v1339
    %v1341 = vlaneseq
    %v1342 = vshrl.u32 %v1341, 7
    %v1343 = vsub.s32 0, %v1342
    %v1344 = vrot.slane %v1038, %v1343
    %v1345 = vlaneseq
    %v1346 = vshrl.u32 %v1345, 7
    %v1347 = vsub.s32 0, %v1346
    %v1348 = vrot.slane %v1107, %v1347
    %v1349 = vadd.f32 %v1328, %v1340
    %v1350 = vadd.f32 %v1329, %v1344
    %v1351 = vadd.f32 %v1330, %v1348
    %v1352 = vadd.f32 %v1331, %v1340
    %v1353 = vadd.f32 %v1332, %v1344
    %v1354 = vadd.f32 %v1333, %v1348
    %v1355 = vadd.f32 %v1334, %v1340
    %v1356 = vadd.f32 %v1335, %v1344
    %v1357 = vadd.f32 %v1336, %v1348
    %v1358 = vmax.f32 %v1349, 0.0
    %v1359 = vmax.f32 %v1350, 0.0
    %v1360 = vmax.f32 %v1351, 0.0
    %v1361 = vmax.f32 %v1352, 0.0
    %v1362 = vmax.f32 %v1353, 0.0
    %v1363 = vmax.f32 %v1354, 0.0
    %v1364 = vmax.f32 %v1355, 0.0
    %v1365 = vmax.f32 %v1356, 0.0
    %v1366 = vmax.f32 %v1357, 0.0
    %v1367 = vld [vmem:[%s39] sm:$0xff]
    %v1368 = vld [vmem:[%s39 + $0x8] sm:$0xff]
    %v1369 = vld [vmem:[%s39 + $0x10] sm:$0xff]
    %v1370 = vld [vmem:[%s39 + $0x18] sm:$0xff]
    %v1371 = vld [vmem:[%s39 + $0x20] sm:$0xff]
    %v1372 = vld [vmem:[%s39 + $0x28] sm:$0xff]
    %v1373 = vld [vmem:[%s39 + $0x30] sm:$0xff]
    %v1374 = vld [vmem:[%s39 + $0x38] sm:$0xff]
    %v1375 = vld [vmem:[%s39 + $0x40] sm:$0xff]
    %v1376 = vld [vmem:[%s39 + $0x48] sm:$0xff]
    %v1377 = vld [vmem:[%s39 + $0x50] sm:$0xff]
    %v1378 = vld [vmem:[%s39 + $0x58] sm:$0xff]
    %v1379 = vld [vmem:[%s39 + $0x60] sm:$0xff]
    %v1380 = vld [vmem:[%s39 + $0x68] sm:$0xff]
    %v1381 = vld [vmem:[%s39 + $0x70] sm:$0xff]
    %v1382 = vld [vmem:[%s39 + $0x78] sm:$0xff]
    %v1383 = vld [vmem:[%s39 + $0x80] sm:$0xff]
    %v1384 = vld [vmem:[%s39 + $0x88] sm:$0xff]
    %v1385 = vld [vmem:[%s39 + $0x90] sm:$0xff]
    %v1386 = vld [vmem:[%s39 + $0x98] sm:$0xff]
    %v1387 = vld [vmem:[%s39 + $0xa0] sm:$0xff]
    %v1388 = vld [vmem:[%s39 + $0xa8] sm:$0xff]
    %v1389 = vld [vmem:[%s39 + $0xb0] sm:$0xff]
    %v1390 = vld [vmem:[%s39 + $0xb8] sm:$0xff]
    %v1391 = vld [vmem:[%s39 + $0xc0] sm:$0xff]
    %v1392 = vld [vmem:[%s39 + $0xc8] sm:$0xff]
    %v1393 = vld [vmem:[%s39 + $0xd0] sm:$0xff]
    %v1394 = vld [vmem:[%s39 + $0xd8] sm:$0xff]
    %v1395 = vld [vmem:[%s39 + $0xe0] sm:$0xff]
    %v1396 = vld [vmem:[%s39 + $0xe8] sm:$0xff]
    %v1397 = vld [vmem:[%s39 + $0xf0] sm:$0xff]
    %v1398 = vld [vmem:[%s39 + $0xf8] sm:$0xff]
    %v1399 = vld [vmem:[%s39 + $0x100] sm:$0xff]
    %v1400 = vld [vmem:[%s39 + $0x108] sm:$0x3f]
    %v1401 = vld [vmem:[%s41] sm:$0x1]
    %v1403 = vlaneseq
    %v1404 = vshrl.u32 %v1403, 7
    %v1405 = vsub.s32 0, %v1404
    %v1406 = vrot.slane %v1401, %v1405
    %vm1408 = vcmask 113664
    %v1410 = vsel %vm1408, %v1360, 0
    %v1413 = vsel %vm1408, %v1363, 0
    %v1416 = vsel %vm1408, %v1366, 0
    %v1419 = vsel %vm169, %v1400, 0
    %1421 = vmatprep.subr.mxu0 0.0
    %1422 = vmatpush1.msra.mxu0 %v1367
    %1423 = vmatprep.subr.mxu0 0.0
    %1424 = vmatpush1.msra.mxu0 %v1368
    %1425 = vmatprep.subr.mxu0 0.0
    %1426 = vmatpush1.msra.mxu0 %v1369
    %1427 = vmatprep.subr.mxu0 0.0
    %1428 = vmatpush1.msra.mxu0 %v1370
    %1429 = vmatprep.subr.mxu0 0.0
    %1430 = vmatpush1.msra.mxu0 %v1371
    %1431 = vmatprep.subr.mxu0 0.0
    %1432 = vmatpush1.msra.mxu0 %v1372
    %1433 = vmatprep.subr.mxu0 0.0
    %1434 = vmatpush1.msra.mxu0 %v1373
    %1435 = vmatprep.subr.mxu0 0.0
    %1436 = vmatpush1.msra.mxu0 %v1374
    %1437 = vmatprep.subr.mxu0 0.0
    %1438 = vmatpush1.msra.mxu0 %v1375
    %1439 = vmatprep.subr.mxu0 0.0
    %1440 = vmatpush1.msra.mxu0 %v1376
    %1441 = vmatprep.subr.mxu0 0.0
    %1442 = vmatpush1.msra.mxu0 %v1377
    %1443 = vmatprep.subr.mxu0 0.0
    %1444 = vmatpush1.msra.mxu0 %v1378
    %1445 = vmatprep.subr.mxu0 0.0
    %1446 = vmatpush1.msra.mxu0 %v1379
    %1447 = vmatprep.subr.mxu0 0.0
    %1448 = vmatpush1.msra.mxu0 %v1380
    %1449 = vmatprep.subr.mxu0 0.0
    %1450 = vmatpush1.msra.mxu0 %v1381
    %1451 = vmatprep.subr.mxu0 0.0
    %1452 = vmatpush1.msra.mxu0 %v1382
    %1453 = vmatprep.subr.mxu0 0.0
    %1454 = vmatpush1.msra.mxu0 %v1383
    %1455 = vmatprep.subr.mxu0 0.0
    %1456 = vmatpush1.msra.mxu0 %v1384
    %1457 = vmatprep.subr.mxu0 0.0
    %1458 = vmatpush1.msra.mxu0 %v1385
    %1459 = vmatprep.subr.mxu0 0.0
    %1460 = vmatpush1.msra.mxu0 %v1386
    %1461 = vmatprep.subr.mxu0 0.0
    %1462 = vmatpush1.msra.mxu0 %v1387
    %1463 = vmatprep.subr.mxu0 0.0
    %1464 = vmatpush1.msra.mxu0 %v1388
    %1465 = vmatprep.subr.mxu0 0.0
    %1466 = vmatpush1.msra.mxu0 %v1389
    %1467 = vmatprep.subr.mxu0 0.0
    %1468 = vmatpush1.msra.mxu0 %v1390
    %1469 = vmatprep.subr.mxu0 0.0
    %1470 = vmatpush1.msra.mxu0 %v1391
    %1471 = vmatprep.subr.mxu0 0.0
    %1472 = vmatpush1.msra.mxu0 %v1392
    %1473 = vmatprep.subr.mxu0 0.0
    %1474 = vmatpush1.msra.mxu0 %v1393
    %1475 = vmatprep.subr.mxu0 0.0
    %1476 = vmatpush1.msra.mxu0 %v1394
    %1477 = vmatprep.subr.mxu0 0.0
    %1478 = vmatpush1.msra.mxu0 %v1395
    %1479 = vmatprep.subr.mxu0 0.0
    %1480 = vmatpush1.msra.mxu0 %v1396
    %1481 = vmatprep.subr.mxu0 0.0
    %1482 = vmatpush1.msra.mxu0 %v1397
    %1483 = vmatprep.subr.mxu0 0.0
    %1484 = vmatpush1.msra.mxu0 %v1398
    %1485 = vmatprep.mubr.f32.mxu0 %v1359
    %1486 = vmatmul.mubr.f32.gmra.mrb[0].mxu0 %v1358
    %v1487 = vpop.f32.mrb[0].mxu0
    %v1488 = vadd.f32 %v1406, %v1487
    %v1489 = vpop.f32.mrb[0].mxu0
    %1490 = vmatprep.mubr.f32.mxu0 %v1362
    %1491 = vmatmul.mubr.f32.gmra.mrb[0].mxu0 %v1361
    %v1492 = vpop.f32.mrb[0].mxu0
    %v1493 = vadd.f32 %v1406, %v1492
    %v1494 = vpop.f32.mrb[0].mxu0
    %1495 = vmatprep.mubr.f32.mxu0 %v1365
    %1496 = vmatmul.mubr.f32.gmra.mrb[0].mxu0 %v1364
    %v1497 = vpop.f32.mrb[0].mxu0
    %v1498 = vadd.f32 %v1406, %v1497
    %v1499 = vpop.f32.mrb[0].mxu0
    %1500 = vdwg.mxu0
    %1501 = vmatprep.subr.mxu0 0.0
    %1502 = vmatpush1.msra.mxu0 %v1399
    %1503 = vmatprep.subr.mxu0 0.0
    %1504 = vmatpush1.msra.mxu0 %v1419
    %1505 = vmatprep.subr.mxu0 0.0
    %1506 = vmatpush1.msra.mxu0 0.0
    %1507 = vmatprep.subr.mxu0 0.0
    %1508 = vmatpush1.msra.mxu0 0.0
    %1509 = vmatprep.subr.mxu0 0.0
    %1510 = vmatpush1.msra.mxu0 0.0
    %1511 = vmatprep.subr.mxu0 0.0
    %1512 = vmatpush1.msra.mxu0 0.0
    %1513 = vmatprep.subr.mxu0 0.0
    %1514 = vmatpush1.msra.mxu0 0.0
    %1515 = vmatprep.subr.mxu0 0.0
    %1516 = vmatpush1.msra.mxu0 0.0
    %1517 = vmatprep.subr.mxu0 0.0
    %1518 = vmatpush1.msra.mxu0 0.0
    %1519 = vmatprep.subr.mxu0 0.0
    %1520 = vmatpush1.msra.mxu0 0.0
    %1521 = vmatprep.subr.mxu0 0.0
    %1522 = vmatpush1.msra.mxu0 0.0
    %1523 = vmatprep.subr.mxu0 0.0
    %1524 = vmatpush1.msra.mxu0 0.0
    %1525 = vmatprep.subr.mxu0 0.0
    %1526 = vmatpush1.msra.mxu0 0.0
    %1527 = vmatprep.subr.mxu0 0.0
    %1528 = vmatpush1.msra.mxu0 0.0
    %1529 = vmatprep.subr.mxu0 0.0
    %1530 = vmatpush1.msra.mxu0 0.0
    %1531 = vmatprep.subr.mxu0 0.0
    %1532 = vmatpush1.msra.mxu0 0.0
    %1533 = vmatprep.subr.mxu0 0.0
    %1534 = vmatpush1.msra.mxu0 0.0
    %1535 = vmatprep.subr.mxu0 0.0
    %1536 = vmatpush1.msra.mxu0 0.0
    %1537 = vmatprep.subr.mxu0 0.0
    %1538 = vmatpush1.msra.mxu0 0.0
    %1539 = vmatprep.subr.mxu0 0.0
    %1540 = vmatpush1.msra.mxu0 0.0
    %1541 = vmatprep.subr.mxu0 0.0
    %1542 = vmatpush1.msra.mxu0 0.0
    %1543 = vmatprep.subr.mxu0 0.0
    %1544 = vmatpush1.msra.mxu0 0.0
    %1545 = vmatprep.subr.mxu0 0.0
    %1546 = vmatpush1.msra.mxu0 0.0
    %1547 = vmatprep.subr.mxu0 0.0
    %1548 = vmatpush1.msra.mxu0 0.0
    %1549 = vmatprep.subr.mxu0 0.0
    %1550 = vmatpush1.msra.mxu0 0.0
    %1551 = vmatprep.subr.mxu0 0.0
    %1552 = vmatpush1.msra.mxu0 0.0
    %1553 = vmatprep.subr.mxu0 0.0
    %1554 = vmatpush1.msra.mxu0 0.0
    %1555 = vmatprep.subr.mxu0 0.0
    %1556 = vmatpush1.msra.mxu0 0.0
    %1557 = vmatprep.subr.mxu0 0.0
    %1558 = vmatpush1.msra.mxu0 0.0
    %1559 = vmatprep.subr.mxu0 0.0
    %1560 = vmatpush1.msra.mxu0 0.0
    %1561 = vmatprep.subr.mxu0 0.0
    %1562 = vmatpush1.msra.mxu0 0.0
    %1563 = vmatprep.subr.mxu0 0.0
    %1564 = vmatpush1.msra.mxu0 0.0
    %1565 = vmatprep.mubr.f32.mxu0 0.0
    %1566 = vmatmul.mubr.f32.gmra.mrb[0].mxu0 %v1410
    %v1567 = vpop.f32.mrb[0].mxu0
    %v1568 = vadd.f32 %v1488, %v1567
    %v1569 = vpop.f32.mrb[0].mxu0
    %1570 = vmatprep.mubr.f32.mxu0 0.0
    %1571 = vmatmul.mubr.f32.gmra.mrb[0].mxu0 %v1413
    %v1572 = vpop.f32.mrb[0].mxu0
    %v1573 = vadd.f32 %v1493, %v1572
    %v1574 = vpop.f32.mrb[0].mxu0
    %1575 = vmatprep.mubr.f32.mxu0 0.0
    %1576 = vmatmul.mubr.f32.gmra.mrb[0].mxu0 %v1416
    %v1577 = vpop.f32.mrb[0].mxu0
    %v1578 = vadd.f32 %v1498, %v1577
    %v1579 = vpop.f32.mrb[0].mxu0
    %1580 = vdwg.mxu0
    %vm1581 = vcmask 80896
    %v1582 = vsel %vm1581, %v1568, 0.0
    %v1583 = vsel %vm1581, %v1573, 0.0
    %v1584 = vadd.f32 %v1582, %v1583
    %vm1585 = vcmask 74752
    %v1586 = vsel %vm1585, %v1578, 0.0
    %v1587 = vadd.f32 %v1584, %v1586
    %v1588 = vrot.slane %v1587, 4
    %v1589 = vadd.f32 %v1587, %v1588
    %v1590 = vrot.slane %v1589, 2
    %v1591 = vadd.f32 %v1589, %v1590
    %v1592 = vrot.slane %v1591, 1
    %v1593 = vadd.f32 %v1591, %v1592
    %v1594 = vrcp.pop 18.0
    %v1595 = vmul.f32 %v1593, %v1594
    %v1596 = vsub.f32 %v1568, %v1595
    %v1597 = vsub.f32 %v1573, %v1595
    %v1598 = vsub.f32 %v1578, %v1595
    %v1599 = vmul.f32 %v1596, %v1596
    %v1600 = vmul.f32 %v1597, %v1597
    %v1601 = vmul.f32 %v1598, %v1598
    %v1602 = vsel %vm1581, %v1599, 0.0
    %v1603 = vsel %vm1581, %v1600, 0.0
    %v1604 = vadd.f32 %v1602, %v1603
    %v1605 = vsel %vm1585, %v1601, 0.0
    %v1606 = vadd.f32 %v1604, %v1605
    %v1607 = vrot.slane %v1606, 4
    %v1608 = vadd.f32 %v1606, %v1607
    %v1609 = vrot.slane %v1608, 2
    %v1610 = vadd.f32 %v1608, %v1609
    %v1611 = vrot.slane %v1610, 1
    %v1612 = vadd.f32 %v1610, %v1611
    %v1613 = vmul.f32 %v1612, %v1594
    %v1614 = vadd.f32 %v1613, 1e-05
    %v1615 = vrsqrt.pop %v1614
    %v1616 = vmul.f32 %v1596, %v1615
    %v1617 = vmul.f32 %v1597, %v1615
    %v1618 = vmul.f32 %v1598, %v1615
    %v1619 = vld [vmem:[%s43] sm:$0x1]
    %v1621 = vlaneseq
    %v1622 = vshrl.u32 %v1621, 7
    %v1623 = vsub.s32 0, %v1622
    %v1624 = vrot.slane %v1619, %v1623
    %v1626 = vmul.f32 %v1616, %v1624
    %v1627 = vmul.f32 %v1617, %v1624
    %v1628 = vmul.f32 %v1618, %v1624
    %v1629 = vld [vmem:[%s45] sm:$0x1]
    %v1631 = vlaneseq
    %v1632 = vshrl.u32 %v1631, 7
    %v1633 = vsub.s32 0, %v1632
    %v1634 = vrot.slane %v1629, %v1633
    %v1636 = vadd.f32 %v1626, %v1634
    %v1637 = vadd.f32 %v1627, %v1634
    %v1638 = vadd.f32 %v1628, %v1634
    %v1639 = vmax.f32 %v1636, 0.0
    %v1640 = vmax.f32 %v1637, 0.0
    %v1641 = vmax.f32 %v1638, 0.0
    %v1642 = vld [vmem:[%s47] sm:$0xff]
    %v1643 = vld [vmem:[%s47 + $0x8] sm:$0xff]
    %v1644 = vld [vmem:[%s47 + $0x10] sm:$0x3]
    %v1645 = vld [vmem:[%s47 + $0x18] sm:$0x3]
    %v1647 = vsel %vm1581, %v1639, 0
    %v1650 = vsel %vm1581, %v1640, 0
    %v1653 = vsel %vm1581, %v1641, 0
    %v1656 = vsel %vm368, %v1644, 0
    %v1659 = vsel %vm368, %v1645, 0
    %1661 = vmatprep.subr.mxu0 %v1643
    %1662 = vmatpush1.msra.mxu0 %v1642
    %1663 = vmatprep.subr.mxu0 %v1659
    %1664 = vmatpush1.msra.mxu0 %v1656
    %1665 = vmatprep.subr.mxu0 0.0
    %1666 = vmatpush1.msra.mxu0 0.0
    %1667 = vmatprep.subr.mxu0 0.0
    %1668 = vmatpush1.msra.mxu0 0.0
    %1669 = vmatprep.subr.mxu0 0.0
    %1670 = vmatpush1.msra.mxu0 0.0
    %1671 = vmatprep.subr.mxu0 0.0
    %1672 = vmatpush1.msra.mxu0 0.0
    %1673 = vmatprep.subr.mxu0 0.0
    %1674 = vmatpush1.msra.mxu0 0.0
    %1675 = vmatprep.subr.mxu0 0.0
    %1676 = vmatpush1.msra.mxu0 0.0
    %1677 = vmatprep.subr.mxu0 0.0
    %1678 = vmatpush1.msra.mxu0 0.0
    %1679 = vmatprep.subr.mxu0 0.0
    %1680 = vmatpush1.msra.mxu0 0.0
    %1681 = vmatprep.subr.mxu0 0.0
    %1682 = vmatpush1.msra.mxu0 0.0
    %1683 = vmatprep.subr.mxu0 0.0
    %1684 = vmatpush1.msra.mxu0 0.0
    %1685 = vmatprep.subr.mxu0 0.0
    %1686 = vmatpush1.msra.mxu0 0.0
    %1687 = vmatprep.subr.mxu0 0.0
    %1688 = vmatpush1.msra.mxu0 0.0
    %1689 = vmatprep.subr.mxu0 0.0
    %1690 = vmatpush1.msra.mxu0 0.0
    %1691 = vmatprep.subr.mxu0 0.0
    %1692 = vmatpush1.msra.mxu0 0.0
    %1693 = vmatprep.subr.mxu0 0.0
    %1694 = vmatpush1.msra.mxu0 0.0
    %1695 = vmatprep.subr.mxu0 0.0
    %1696 = vmatpush1.msra.mxu0 0.0
    %1697 = vmatprep.subr.mxu0 0.0
    %1698 = vmatpush1.msra.mxu0 0.0
    %1699 = vmatprep.subr.mxu0 0.0
    %1700 = vmatpush1.msra.mxu0 0.0
    %1701 = vmatprep.subr.mxu0 0.0
    %1702 = vmatpush1.msra.mxu0 0.0
    %1703 = vmatprep.subr.mxu0 0.0
    %1704 = vmatpush1.msra.mxu0 0.0
    %1705 = vmatprep.subr.mxu0 0.0
    %1706 = vmatpush1.msra.mxu0 0.0
    %1707 = vmatprep.subr.mxu0 0.0
    %1708 = vmatpush1.msra.mxu0 0.0
    %1709 = vmatprep.subr.mxu0 0.0
    %1710 = vmatpush1.msra.mxu0 0.0
    %1711 = vmatprep.subr.mxu0 0.0
    %1712 = vmatpush1.msra.mxu0 0.0
    %1713 = vmatprep.subr.mxu0 0.0
    %1714 = vmatpush1.msra.mxu0 0.0
    %1715 = vmatprep.subr.mxu0 0.0
    %1716 = vmatpush1.msra.mxu0 0.0
    %1717 = vmatprep.subr.mxu0 0.0
    %1718 = vmatpush1.msra.mxu0 0.0
    %1719 = vmatprep.subr.mxu0 0.0
    %1720 = vmatpush1.msra.mxu0 0.0
    %1721 = vmatprep.subr.mxu0 0.0
    %1722 = vmatpush1.msra.mxu0 0.0
    %1723 = vmatprep.subr.mxu0 0.0
    %1724 = vmatpush1.msra.mxu0 0.0
    %1725 = vmatprep.mubr.f32.mxu0 0.0
    %1726 = vmatmul.mubr.f32.gmra.mrb[0].mxu0 %v1647
    %v1727 = vpop.f32.mrb[0].mxu0
    %v1728 = vadd.f32 0.0, %v1727
    %v1729 = vpop.f32.mrb[0].mxu0
    %v1730 = vadd.f32 0.0, %v1729
    %1731 = vmatprep.mubr.f32.mxu0 0.0
    %1732 = vmatmul.mubr.f32.gmra.mrb[0].mxu0 %v1650
    %v1733 = vpop.f32.mrb[0].mxu0
    %v1734 = vadd.f32 0.0, %v1733
    %v1735 = vpop.f32.mrb[0].mxu0
    %v1736 = vadd.f32 0.0, %v1735
    %1737 = vmatprep.mubr.f32.mxu0 0.0
    %1738 = vmatmul.mubr.f32.gmra.mrb[0].mxu0 %v1653
    %v1739 = vpop.f32.mrb[0].mxu0
    %v1740 = vadd.f32 0.0, %v1739
    %v1741 = vpop.f32.mrb[0].mxu0
    %v1742 = vadd.f32 0.0, %v1741
    %1743 = vdwg.mxu0
    %v1744 = vld [vmem:[%s51] sm:$0xff]
    %v1745 = vld [vmem:[%s51 + $0x8] sm:$0xff]
    %v1746 = vld [vmem:[%s51 + $0x10] sm:$0xff]
    %v1747 = vld [vmem:[%s51 + $0x18] sm:$0xff]
    %v1748 = vld [vmem:[%s51 + $0x20] sm:$0x3]
    %v1749 = vld [vmem:[%s51 + $0x28] sm:$0x3]
    %v1750 = vmul.f32 %v1728, %v1744
    %v1751 = vmul.f32 %v1730, %v1745
    %v1752 = vmul.f32 %v1734, %v1746
    %v1753 = vmul.f32 %v1736, %v1747
    %v1754 = vmul.f32 %v1740, %v1748
    %v1755 = vmul.f32 %v1742, %v1749
    %v1756 = vld [vmem:[%s55] sm:$0xff]
    %v1757 = vld [vmem:[%s55 + $0x8] sm:$0xff]
    %v1758 = vld [vmem:[%s55 + $0x10] sm:$0xff]
    %v1759 = vld [vmem:[%s55 + $0x18] sm:$0xff]
    %v1760 = vld [vmem:[%s55 + $0x20] sm:$0xff]
    %v1761 = vld [vmem:[%s55 + $0x28] sm:$0xff]
    %v1762 = vld [vmem:[%s55 + $0x30] sm:$0xff]
    %v1763 = vld [vmem:[%s55 + $0x38] sm:$0xff]
    %v1764 = vld [vmem:[%s55 + $0x40] sm:$0xff]
    %v1765 = vld [vmem:[%s55 + $0x48] sm:$0xff]
    %v1766 = vld [vmem:[%s55 + $0x50] sm:$0xff]
    %v1767 = vld [vmem:[%s55 + $0x58] sm:$0xff]
    %v1768 = vld [vmem:[%s55 + $0x60] sm:$0xff]
    %v1769 = vld [vmem:[%s55 + $0x68] sm:$0xff]
    %v1770 = vld [vmem:[%s55 + $0x70] sm:$0xff]
    %v1771 = vld [vmem:[%s55 + $0x78] sm:$0xff]
    %v1772 = vld [vmem:[%s55 + $0x80] sm:$0xff]
    %v1773 = vld [vmem:[%s55 + $0x88] sm:$0xff]
    %v1775 = vsel %vm489, %v1751, 0
    %v1778 = vsel %vm489, %v1753, 0
    %v1781 = vsel %vm489, %v1755, 0
    %1783 = vmatprep.subr.mxu0 0.0
    %1784 = vmatpush1.msra.mxu0 %v1756
    %1785 = vmatprep.subr.mxu0 0.0
    %1786 = vmatpush1.msra.mxu0 %v1757
    %1787 = vmatprep.subr.mxu0 0.0
    %1788 = vmatpush1.msra.mxu0 %v1758
    %1789 = vmatprep.subr.mxu0 0.0
    %1790 = vmatpush1.msra.mxu0 %v1759
    %1791 = vmatprep.subr.mxu0 0.0
    %1792 = vmatpush1.msra.mxu0 %v1760
    %1793 = vmatprep.subr.mxu0 0.0
    %1794 = vmatpush1.msra.mxu0 %v1761
    %1795 = vmatprep.subr.mxu0 0.0
    %1796 = vmatpush1.msra.mxu0 %v1762
    %1797 = vmatprep.subr.mxu0 0.0
    %1798 = vmatpush1.msra.mxu0 %v1763
    %1799 = vmatprep.subr.mxu0 0.0
    %1800 = vmatpush1.msra.mxu0 %v1764
    %1801 = vmatprep.subr.mxu0 0.0
    %1802 = vmatpush1.msra.mxu0 %v1765
    %1803 = vmatprep.subr.mxu0 0.0
    %1804 = vmatpush1.msra.mxu0 %v1766
    %1805 = vmatprep.subr.mxu0 0.0
    %1806 = vmatpush1.msra.mxu0 %v1767
    %1807 = vmatprep.subr.mxu0 0.0
    %1808 = vmatpush1.msra.mxu0 %v1768
    %1809 = vmatprep.subr.mxu0 0.0
    %1810 = vmatpush1.msra.mxu0 %v1769
    %1811 = vmatprep.subr.mxu0 0.0
    %1812 = vmatpush1.msra.mxu0 %v1770
    %1813 = vmatprep.subr.mxu0 0.0
    %1814 = vmatpush1.msra.mxu0 %v1771
    %1815 = vmatprep.subr.mxu0 0.0
    %1816 = vmatpush1.msra.mxu0 %v1772
    %1817 = vmatprep.subr.mxu0 0.0
    %1818 = vmatpush1.msra.mxu0 %v1773
    %1819 = vmatprep.subr.mxu0 0.0
    %1820 = vmatpush1.msra.mxu0 0.0
    %1821 = vmatprep.subr.mxu0 0.0
    %1822 = vmatpush1.msra.mxu0 0.0
    %1823 = vmatprep.subr.mxu0 0.0
    %1824 = vmatpush1.msra.mxu0 0.0
    %1825 = vmatprep.subr.mxu0 0.0
    %1826 = vmatpush1.msra.mxu0 0.0
    %1827 = vmatprep.subr.mxu0 0.0
    %1828 = vmatpush1.msra.mxu0 0.0
    %1829 = vmatprep.subr.mxu0 0.0
    %1830 = vmatpush1.msra.mxu0 0.0
    %1831 = vmatprep.subr.mxu0 0.0
    %1832 = vmatpush1.msra.mxu0 0.0
    %1833 = vmatprep.subr.mxu0 0.0
    %1834 = vmatpush1.msra.mxu0 0.0
    %1835 = vmatprep.subr.mxu0 0.0
    %1836 = vmatpush1.msra.mxu0 0.0
    %1837 = vmatprep.subr.mxu0 0.0
    %1838 = vmatpush1.msra.mxu0 0.0
    %1839 = vmatprep.subr.mxu0 0.0
    %1840 = vmatpush1.msra.mxu0 0.0
    %1841 = vmatprep.subr.mxu0 0.0
    %1842 = vmatpush1.msra.mxu0 0.0
    %1843 = vmatprep.subr.mxu0 0.0
    %1844 = vmatpush1.msra.mxu0 0.0
    %1845 = vmatprep.subr.mxu0 0.0
    %1846 = vmatpush1.msra.mxu0 0.0
    %1847 = vmatprep.mubr.f32.mxu0 %v1775
    %1848 = vmatmul.mubr.f32.gmra.mrb[0].mxu0 %v1750
    %v1849 = vpop.f32.mrb[0].mxu0
    %v1850 = vadd.f32 0.0, %v1849
    %v1851 = vpop.f32.mrb[0].mxu0
    %1852 = vmatprep.mubr.f32.mxu0 %v1778
    %1853 = vmatmul.mubr.f32.gmra.mrb[0].mxu0 %v1752
    %v1854 = vpop.f32.mrb[0].mxu0
    %v1855 = vadd.f32 0.0, %v1854
    %v1856 = vpop.f32.mrb[0].mxu0
    %1857 = vmatprep.mubr.f32.mxu0 %v1781
    %1858 = vmatmul.mubr.f32.gmra.mrb[0].mxu0 %v1754
    %v1859 = vpop.f32.mrb[0].mxu0
    %v1860 = vadd.f32 0.0, %v1859
    %v1861 = vpop.f32.mrb[0].mxu0
    %1862 = vdwg.mxu0
    %v1863 = vld [vmem:[%s53] sm:$0x3]
    %v1864 = vld [vmem:[%s49] sm:$0x1]
    %v1866 = vlaneseq
    %v1867 = vshrl.u32 %v1866, 7
    %v1868 = vsub.s32 0, %v1867
    %v1869 = vrot.slane %v1864, %v1868
    %vm1871 = vcmask 146432
    %v1873 = vsel %vm1871, %v1863, 0
    %v1876 = vsel %vm368, %v1860, 0
    %1878 = vmatprep.subr.mxu0 0.0
    %1879 = vmatpush1.msra.mxu0 %v1850
    %1880 = vmatprep.subr.mxu0 0.0
    %1881 = vmatpush1.msra.mxu0 %v1855
    %1882 = vmatprep.subr.mxu0 0.0
    %1883 = vmatpush1.msra.mxu0 %v1876
    %1884 = vmatprep.subr.mxu0 0.0
    %1885 = vmatpush1.msra.mxu0 0.0
    %1886 = vmatprep.subr.mxu0 0.0
    %1887 = vmatpush1.msra.mxu0 0.0
    %1888 = vmatprep.subr.mxu0 0.0
    %1889 = vmatpush1.msra.mxu0 0.0
    %1890 = vmatprep.subr.mxu0 0.0
    %1891 = vmatpush1.msra.mxu0 0.0
    %1892 = vmatprep.subr.mxu0 0.0
    %1893 = vmatpush1.msra.mxu0 0.0
    %1894 = vmatprep.subr.mxu0 0.0
    %1895 = vmatpush1.msra.mxu0 0.0
    %1896 = vmatprep.subr.mxu0 0.0
    %1897 = vmatpush1.msra.mxu0 0.0
    %1898 = vmatprep.subr.mxu0 0.0
    %1899 = vmatpush1.msra.mxu0 0.0
    %1900 = vmatprep.subr.mxu0 0.0
    %1901 = vmatpush1.msra.mxu0 0.0
    %1902 = vmatprep.subr.mxu0 0.0
    %1903 = vmatpush1.msra.mxu0 0.0
    %1904 = vmatprep.subr.mxu0 0.0
    %1905 = vmatpush1.msra.mxu0 0.0
    %1906 = vmatprep.subr.mxu0 0.0
    %1907 = vmatpush1.msra.mxu0 0.0
    %1908 = vmatprep.subr.mxu0 0.0
    %1909 = vmatpush1.msra.mxu0 0.0
    %1910 = vmatprep.subr.mxu0 0.0
    %1911 = vmatpush1.msra.mxu0 0.0
    %1912 = vmatprep.subr.mxu0 0.0
    %1913 = vmatpush1.msra.mxu0 0.0
    %1914 = vmatprep.subr.mxu0 0.0
    %1915 = vmatpush1.msra.mxu0 0.0
    %1916 = vmatprep.subr.mxu0 0.0
    %1917 = vmatpush1.msra.mxu0 0.0
    %1918 = vmatprep.subr.mxu0 0.0
    %1919 = vmatpush1.msra.mxu0 0.0
    %1920 = vmatprep.subr.mxu0 0.0
    %1921 = vmatpush1.msra.mxu0 0.0
    %1922 = vmatprep.subr.mxu0 0.0
    %1923 = vmatpush1.msra.mxu0 0.0
    %1924 = vmatprep.subr.mxu0 0.0
    %1925 = vmatpush1.msra.mxu0 0.0
    %1926 = vmatprep.subr.mxu0 0.0
    %1927 = vmatpush1.msra.mxu0 0.0
    %1928 = vmatprep.subr.mxu0 0.0
    %1929 = vmatpush1.msra.mxu0 0.0
    %1930 = vmatprep.subr.mxu0 0.0
    %1931 = vmatpush1.msra.mxu0 0.0
    %1932 = vmatprep.subr.mxu0 0.0
    %1933 = vmatpush1.msra.mxu0 0.0
    %1934 = vmatprep.subr.mxu0 0.0
    %1935 = vmatpush1.msra.mxu0 0.0
    %1936 = vmatprep.subr.mxu0 0.0
    %1937 = vmatpush1.msra.mxu0 0.0
    %1938 = vmatprep.subr.mxu0 0.0
    %1939 = vmatpush1.msra.mxu0 0.0
    %1940 = vmatprep.subr.mxu0 0.0
    %1941 = vmatpush1.msra.mxu0 0.0
    %1942 = vmatprep.mubr.f32.mxu0 0.0
    %1943 = vmatmul.mubr.f32.gmra.mrb[0].mxu0 %v1873
    %v1944 = vpop.f32.mrb[0].mxu0
    %v1945 = vadd.f32 %v1869, %v1944
    %v1946 = vpop.f32.mrb[0].mxu0
    %1947 = vdwg.mxu0
    %v1948 = vsub.f32 0.0, %v1945
    %v1949 = vmul.f32 %v1948, 1.442695
    %v1950 = vpow.pop %v1949
    %v1951 = vadd.f32 %v1950, 1.0
    %v1952 = vrcp.pop %v1951
    %1953 = vst.msk [vmem:[#allocation9] sm:$0x3] %vm577, %v1952
    %v1954 = vld [vmem:[%s57] sm:$0xff]
    %v1955 = vld [vmem:[%s57 + $0x8] sm:$0xff]
    %v1956 = vld [vmem:[%s59] sm:$0xff]
    %v1957 = vld [vmem:[%s59 + $0x8] sm:$0xff]
    %v1959 = vsel %vm489, %v1952, 0
    %1961 = vmatprep.subr.mxu0 0.0
    %1962 = vmatpush1.msra.mxu0 %v1956
    %1963 = vmatprep.subr.mxu0 0.0
    %1964 = vmatpush1.msra.mxu0 %v1957
    %1965 = vmatprep.subr.mxu0 0.0
    %1966 = vmatpush1.msra.mxu0 0.0
    %1967 = vmatprep.subr.mxu0 0.0
    %1968 = vmatpush1.msra.mxu0 0.0
    %1969 = vmatprep.subr.mxu0 0.0
    %1970 = vmatpush1.msra.mxu0 0.0
    %1971 = vmatprep.subr.mxu0 0.0
    %1972 = vmatpush1.msra.mxu0 0.0
    %1973 = vmatprep.subr.mxu0 0.0
    %1974 = vmatpush1.msra.mxu0 0.0
    %1975 = vmatprep.subr.mxu0 0.0
    %1976 = vmatpush1.msra.mxu0 0.0
    %1977 = vmatprep.subr.mxu0 0.0
    %1978 = vmatpush1.msra.mxu0 0.0
    %1979 = vmatprep.subr.mxu0 0.0
    %1980 = vmatpush1.msra.mxu0 0.0
    %1981 = vmatprep.subr.mxu0 0.0
    %1982 = vmatpush1.msra.mxu0 0.0
    %1983 = vmatprep.subr.mxu0 0.0
    %1984 = vmatpush1.msra.mxu0 0.0
    %1985 = vmatprep.subr.mxu0 0.0
    %1986 = vmatpush1.msra.mxu0 0.0
    %1987 = vmatprep.subr.mxu0 0.0
    %1988 = vmatpush1.msra.mxu0 0.0
    %1989 = vmatprep.subr.mxu0 0.0
    %1990 = vmatpush1.msra.mxu0 0.0
    %1991 = vmatprep.subr.mxu0 0.0
    %1992 = vmatpush1.msra.mxu0 0.0
    %1993 = vmatprep.subr.mxu0 0.0
    %1994 = vmatpush1.msra.mxu0 0.0
    %1995 = vmatprep.subr.mxu0 0.0
    %1996 = vmatpush1.msra.mxu0 0.0
    %1997 = vmatprep.subr.mxu0 0.0
    %1998 = vmatpush1.msra.mxu0 0.0
    %1999 = vmatprep.subr.mxu0 0.0
    %2000 = vmatpush1.msra.mxu0 0.0
    %2001 = vmatprep.subr.mxu0 0.0
    %2002 = vmatpush1.msra.mxu0 0.0
    %2003 = vmatprep.subr.mxu0 0.0
    %2004 = vmatpush1.msra.mxu0 0.0
    %2005 = vmatprep.subr.mxu0 0.0
    %2006 = vmatpush1.msra.mxu0 0.0
    %2007 = vmatprep.subr.mxu0 0.0
    %2008 = vmatpush1.msra.mxu0 0.0
    %2009 = vmatprep.subr.mxu0 0.0
    %2010 = vmatpush1.msra.mxu0 0.0
    %2011 = vmatprep.subr.mxu0 0.0
    %2012 = vmatpush1.msra.mxu0 0.0
    %2013 = vmatprep.subr.mxu0 0.0
    %2014 = vmatpush1.msra.mxu0 0.0
    %2015 = vmatprep.subr.mxu0 0.0
    %2016 = vmatpush1.msra.mxu0 0.0
    %2017 = vmatprep.subr.mxu0 0.0
    %2018 = vmatpush1.msra.mxu0 0.0
    %2019 = vmatprep.subr.mxu0 0.0
    %2020 = vmatpush1.msra.mxu0 0.0
    %2021 = vmatprep.subr.mxu0 0.0
    %2022 = vmatpush1.msra.mxu0 0.0
    %2023 = vmatprep.subr.mxu0 0.0
    %2024 = vmatpush1.msra.mxu0 0.0
    %2025 = vmatprep.mubr.f32.mxu0 0.0
    %2026 = vmatmul.mubr.f32.gmra.mrb[0].mxu0 %v1959
    %v2027 = vpop.f32.mrb[0].mxu0
    %v2028 = vadd.f32 0.0, %v2027
    %v2029 = vpop.f32.mrb[0].mxu0
    %2030 = vdwg.mxu0
    %v2032 = vsel %vm489, %v594, 0
    %2034 = vmatprep.subr.mxu0 0.0
    %2035 = vmatpush1.msra.mxu0 %v1954
    %2036 = vmatprep.subr.mxu0 0.0
    %2037 = vmatpush1.msra.mxu0 %v1955
    %2038 = vmatprep.subr.mxu0 0.0
    %2039 = vmatpush1.msra.mxu0 0.0
    %2040 = vmatprep.subr.mxu0 0.0
    %2041 = vmatpush1.msra.mxu0 0.0
    %2042 = vmatprep.subr.mxu0 0.0
    %2043 = vmatpush1.msra.mxu0 0.0
    %2044 = vmatprep.subr.mxu0 0.0
    %2045 = vmatpush1.msra.mxu0 0.0
    %2046 = vmatprep.subr.mxu0 0.0
    %2047 = vmatpush1.msra.mxu0 0.0
    %2048 = vmatprep.subr.mxu0 0.0
    %2049 = vmatpush1.msra.mxu0 0.0
    %2050 = vmatprep.subr.mxu0 0.0
    %2051 = vmatpush1.msra.mxu0 0.0
    %2052 = vmatprep.subr.mxu0 0.0
    %2053 = vmatpush1.msra.mxu0 0.0
    %2054 = vmatprep.subr.mxu0 0.0
    %2055 = vmatpush1.msra.mxu0 0.0
    %2056 = vmatprep.subr.mxu0 0.0
    %2057 = vmatpush1.msra.mxu0 0.0
    %2058 = vmatprep.subr.mxu0 0.0
    %2059 = vmatpush1.msra.mxu0 0.0
    %2060 = vmatprep.subr.mxu0 0.0
    %2061 = vmatpush1.msra.mxu0 0.0
    %2062 = vmatprep.subr.mxu0 0.0
    %2063 = vmatpush1.msra.mxu0 0.0
    %2064 = vmatprep.subr.mxu0 0.0
    %2065 = vmatpush1.msra.mxu0 0.0
    %2066 = vmatprep.subr.mxu0 0.0
    %2067 = vmatpush1.msra.mxu0 0.0
    %2068 = vmatprep.subr.mxu0 0.0
    %2069 = vmatpush1.msra.mxu0 0.0
    %2070 = vmatprep.subr.mxu0 0.0
    %2071 = vmatpush1.msra.mxu0 0.0
    %2072 = vmatprep.subr.mxu0 0.0
    %2073 = vmatpush1.msra.mxu0 0.0
    %2074 = vmatprep.subr.mxu0 0.0
    %2075 = vmatpush1.msra.mxu0 0.0
    %2076 = vmatprep.subr.mxu0 0.0
    %2077 = vmatpush1.msra.mxu0 0.0
    %2078 = vmatprep.subr.mxu0 0.0
    %2079 = vmatpush1.msra.mxu0 0.0
    %2080 = vmatprep.subr.mxu0 0.0
    %2081 = vmatpush1.msra.mxu0 0.0
    %2082 = vmatprep.subr.mxu0 0.0
    %2083 = vmatpush1.msra.mxu0 0.0
    %2084 = vmatprep.subr.mxu0 0.0
    %2085 = vmatpush1.msra.mxu0 0.0
    %2086 = vmatprep.subr.mxu0 0.0
    %2087 = vmatpush1.msra.mxu0 0.0
    %2088 = vmatprep.subr.mxu0 0.0
    %2089 = vmatpush1.msra.mxu0 0.0
    %2090 = vmatprep.subr.mxu0 0.0
    %2091 = vmatpush1.msra.mxu0 0.0
    %2092 = vmatprep.subr.mxu0 0.0
    %2093 = vmatpush1.msra.mxu0 0.0
    %2094 = vmatprep.subr.mxu0 0.0
    %2095 = vmatpush1.msra.mxu0 0.0
    %2096 = vmatprep.subr.mxu0 0.0
    %2097 = vmatpush1.msra.mxu0 0.0
    %2098 = vmatprep.mubr.f32.mxu0 0.0
    %2099 = vmatmul.mubr.f32.gmra.mrb[0].mxu0 %v2032
    %v2100 = vpop.f32.mrb[0].mxu0
    %v2101 = vadd.f32 %v2028, %v2100
    %v2102 = vpop.f32.mrb[0].mxu0
    %2103 = vdwg.mxu0
    %2104 = vst.msk [vmem:[#allocation7] sm:$0x3] %vm263, %v2101
    %v2105 = vld [vmem:[%s61] sm:$0xff]
    %v2106 = vld [vmem:[%s61 + $0x8] sm:$0xff]
    %v2107 = vld [vmem:[%s61 + $0x10] sm:$0xff]
    %v2108 = vld [vmem:[%s61 + $0x18] sm:$0xff]
    %v2109 = vld [vmem:[%s63] sm:$0x1]
    %v2111 = vlaneseq
    %v2112 = vshrl.u32 %v2111, 7
    %v2113 = vsub.s32 0, %v2112
    %v2114 = vrot.slane %v2109, %v2113
    %v2117 = vsel %vm276, %v2101, 0
    %2119 = vmatprep.subr.mxu0 0.0
    %2120 = vmatpush1.msra.mxu0 %v2105
    %2121 = vmatprep.subr.mxu0 0.0
    %2122 = vmatpush1.msra.mxu0 %v2106
    %2123 = vmatprep.subr.mxu0 0.0
    %2124 = vmatpush1.msra.mxu0 %v2107
    %2125 = vmatprep.subr.mxu0 0.0
    %2126 = vmatpush1.msra.mxu0 %v2108
    %2127 = vmatprep.subr.mxu0 0.0
    %2128 = vmatpush1.msra.mxu0 0.0
    %2129 = vmatprep.subr.mxu0 0.0
    %2130 = vmatpush1.msra.mxu0 0.0
    %2131 = vmatprep.subr.mxu0 0.0
    %2132 = vmatpush1.msra.mxu0 0.0
    %2133 = vmatprep.subr.mxu0 0.0
    %2134 = vmatpush1.msra.mxu0 0.0
    %2135 = vmatprep.subr.mxu0 0.0
    %2136 = vmatpush1.msra.mxu0 0.0
    %2137 = vmatprep.subr.mxu0 0.0
    %2138 = vmatpush1.msra.mxu0 0.0
    %2139 = vmatprep.subr.mxu0 0.0
    %2140 = vmatpush1.msra.mxu0 0.0
    %2141 = vmatprep.subr.mxu0 0.0
    %2142 = vmatpush1.msra.mxu0 0.0
    %2143 = vmatprep.subr.mxu0 0.0
    %2144 = vmatpush1.msra.mxu0 0.0
    %2145 = vmatprep.subr.mxu0 0.0
    %2146 = vmatpush1.msra.mxu0 0.0
    %2147 = vmatprep.subr.mxu0 0.0
    %2148 = vmatpush1.msra.mxu0 0.0
    %2149 = vmatprep.subr.mxu0 0.0
    %2150 = vmatpush1.msra.mxu0 0.0
    %2151 = vmatprep.subr.mxu0 0.0
    %2152 = vmatpush1.msra.mxu0 0.0
    %2153 = vmatprep.subr.mxu0 0.0
    %2154 = vmatpush1.msra.mxu0 0.0
    %2155 = vmatprep.subr.mxu0 0.0
    %2156 = vmatpush1.msra.mxu0 0.0
    %2157 = vmatprep.subr.mxu0 0.0
    %2158 = vmatpush1.msra.mxu0 0.0
    %2159 = vmatprep.subr.mxu0 0.0
    %2160 = vmatpush1.msra.mxu0 0.0
    %2161 = vmatprep.subr.mxu0 0.0
    %2162 = vmatpush1.msra.mxu0 0.0
    %2163 = vmatprep.subr.mxu0 0.0
    %2164 = vmatpush1.msra.mxu0 0.0
    %2165 = vmatprep.subr.mxu0 0.0
    %2166 = vmatpush1.msra.mxu0 0.0
    %2167 = vmatprep.subr.mxu0 0.0
    %2168 = vmatpush1.msra.mxu0 0.0
    %2169 = vmatprep.subr.mxu0 0.0
    %2170 = vmatpush1.msra.mxu0 0.0
    %2171 = vmatprep.subr.mxu0 0.0
    %2172 = vmatpush1.msra.mxu0 0.0
    %2173 = vmatprep.subr.mxu0 0.0
    %2174 = vmatpush1.msra.mxu0 0.0
    %2175 = vmatprep.subr.mxu0 0.0
    %2176 = vmatpush1.msra.mxu0 0.0
    %2177 = vmatprep.subr.mxu0 0.0
    %2178 = vmatpush1.msra.mxu0 0.0
    %2179 = vmatprep.subr.mxu0 0.0
    %2180 = vmatpush1.msra.mxu0 0.0
    %2181 = vmatprep.subr.mxu0 0.0
    %2182 = vmatpush1.msra.mxu0 0.0
    %2183 = vmatprep.mubr.f32.mxu0 0.0
    %2184 = vmatmul.mubr.f32.gmra.mrb[0].mxu0 %v2117
    %v2185 = vpop.f32.mrb[0].mxu0
    %v2186 = vadd.f32 %v2114, %v2185
    %v2187 = vpop.f32.mrb[0].mxu0
    %2188 = vdwg.mxu0
    %vm2189 = vcmask 17408
    %2190 = vst.msk [vmem:[#allocation15] sm:$0x3] %vm2189, %v2186
    // Predicated region
    $region130: #{cdssnet_forward.2} parent=1 // pred_check
      _
    $region131: #{cdssnet_forward.2} parent=1 // pred_check_branch
      %2192 = sbr.rel (0) target = $region133
    $region132: #{cdssnet_forward.2} parent=1 // pred_region
      %s2194 = ssub.s32 32, 32
      %2195 = vsyncadd [#allocation3], %s2194
      %s2197 = sshll.u32 [#allocation2], 4
      %s2198 = int_to_ptr.vmem [resolvable:$true] %s2197
      %2200 = dma.vmem_to_hbm [thread:$0]  %s2198, 32, %s65, [#allocation3]
    $region133: #{cdssnet_forward.2} parent=1 // pred_fallthru
      _
    // Predicated region
    $region134: #{cdssnet_forward.2} parent=1 // pred_check
      _
    $region135: #{cdssnet_forward.2} parent=1 // pred_check_branch
      %2202 = sbr.rel (0) target = $region137
    $region136: #{cdssnet_forward.2} parent=1 // pred_region
      %s2204 = ssub.s32 32, 32
      %2205 = vsyncadd [#allocation5], %s2204
      %s2207 = sshll.u32 [#allocation4], 4
      %s2208 = int_to_ptr.vmem [resolvable:$true] %s2207
      %2210 = dma.vmem_to_hbm [thread:$0]  %s2208, 32, %s67, [#allocation5]
    $region137: #{cdssnet_forward.2} parent=1 // pred_fallthru
      _
    // Predicated region
    $region138: #{cdssnet_forward.2} parent=1 // pred_check
      _
    $region139: #{cdssnet_forward.2} parent=1 // pred_check_branch
      %2212 = sbr.rel (0) target = $region141
    $region140: #{cdssnet_forward.2} parent=1 // pred_region
      %s2214 = ssub.s32 16, 16
      %2215 = vsyncadd [#allocation5], %s2214
      %s2217 = sshll.u32 [#allocation6], 4
      %s2218 = int_to_ptr.vmem [resolvable:$true] %s2217
      %2220 = dma.vmem_to_hbm [thread:$0]  %s2218, 16, %s69, [#allocation5]
    $region141: #{cdssnet_forward.2} parent=1 // pred_fallthru
      _
    // Predicated region
    $region142: #{cdssnet_forward.2} parent=1 // pred_check
      _
    $region143: #{cdssnet_forward.2} parent=1 // pred_check_branch
      %2222 = sbr.rel (0) target = $region145
    $region144: #{cdssnet_forward.2} parent=1 // pred_region
      %s2224 = ssub.s32 32, 32
      %2225 = vsyncadd [#allocation8], %s2224
      %s2227 = sshll.u32 [#allocation7], 4
      %s2228 = int_to_ptr.vmem [resolvable:$true] %s2227
      %2230 = dma.vmem_to_hbm [thread:$0]  %s2228, 32, %s71, [#allocation8]
    $region145: #{cdssnet_forward.2} parent=1 // pred_fallthru
      _
    // Predicated region
    $region146: #{cdssnet_forward.2} parent=1 // pred_check
      _
    $region147: #{cdssnet_forward.2} parent=1 // pred_check_branch
      %2232 = sbr.rel (0) target = $region149
    $region148: #{cdssnet_forward.2} parent=1 // pred_region
      %s2234 = ssub.s32 32, 32
      %2235 = vsyncadd [#allocation8], %s2234
      %s2237 = sshll.u32 [#allocation9], 4
      %s2238 = int_to_ptr.vmem [resolvable:$true] %s2237
      %2240 = dma.vmem_to_hbm [thread:$0]  %s2238, 32, %s73, [#allocation8]
    $region149: #{cdssnet_forward.2} parent=1 // pred_fallthru
      _
    // Predicated region
    $region150: #{cdssnet_forward.2} parent=1 // pred_check
      _
    $region151: #{cdssnet_forward.2} parent=1 // pred_check_branch
      %2242 = sbr.rel (0) target = $region153
    $region152: #{cdssnet_forward.2} parent=1 // pred_region
      %s2244 = ssub.s32 32, 32
      %2245 = vsyncadd [#allocation11], %s2244
      %s2247 = sshll.u32 [#allocation10], 4
      %s2248 = int_to_ptr.vmem [resolvable:$true] %s2247
      %2250 = dma.vmem_to_hbm [thread:$0]  %s2248, 32, %s75, [#allocation11]
    $region153: #{cdssnet_forward.2} parent=1 // pred_fallthru
      _
    // Predicated region
    $region154: #{cdssnet_forward.2} parent=1 // pred_check
      _
    $region155: #{cdssnet_forward.2} parent=1 // pred_check_branch
      %2252 = sbr.rel (0) target = $region157
    $region156: #{cdssnet_forward.2} parent=1 // pred_region
      %s2254 = ssub.s32 32, 32
      %2255 = vsyncadd [#allocation11], %s2254
      %s2257 = sshll.u32 [#allocation12], 4
      %s2258 = int_to_ptr.vmem [resolvable:$true] %s2257
      %2260 = dma.vmem_to_hbm [thread:$0]  %s2258, 32, %s77, [#allocation11]
    $region157: #{cdssnet_forward.2} parent=1 // pred_fallthru
      _
    // Predicated region
    $region158: #{cdssnet_forward.2} parent=1 // pred_check
      _
    $region159: #{cdssnet_forward.2} parent=1 // pred_check_branch
      %2262 = sbr.rel (0) target = $region161
    $region160: #{cdssnet_forward.2} parent=1 // pred_region
      %s2264 = ssub.s32 16, 16
      %2265 = vsyncadd [#allocation14], %s2264
      %s2267 = sshll.u32 [#allocation13], 4
      %s2268 = int_to_ptr.vmem [resolvable:$true] %s2267
      %2270 = dma.vmem_to_hbm [thread:$0]  %s2268, 16, %s79, [#allocation14]
    $region161: #{cdssnet_forward.2} parent=1 // pred_fallthru
      _
    // Predicated region
    $region162: #{cdssnet_forward.2} parent=1 // pred_check
      _
    $region163: #{cdssnet_forward.2} parent=1 // pred_check_branch
      %2272 = sbr.rel (0) target = $region165
    $region164: #{cdssnet_forward.2} parent=1 // pred_region
      %s2274 = ssub.s32 32, 32
      %2275 = vsyncadd [#allocation14], %s2274
      %s2277 = sshll.u32 [#allocation15], 4
      %s2278 = int_to_ptr.vmem [resolvable:$true] %s2277
      %2280 = dma.vmem_to_hbm [thread:$0]  %s2278, 32, %s81, [#allocation14]
    $region165: #{cdssnet_forward.2} parent=1 // pred_fallthru
      _
    // Predicated region
    $region166: #{cdssnet_forward.2} parent=1 // pred_check
      _
    $region167: #{cdssnet_forward.2} parent=1 // pred_check_branch
      %2282 = sbr.rel (0) target = $region169
    $region168: #{cdssnet_forward.2} parent=1 // pred_region
      %2283 = dma.done [#allocation3], 32
    $region169: #{cdssnet_forward.2} parent=1 // pred_fallthru
      _
    // Predicated region
    $region170: #{cdssnet_forward.2} parent=1 // pred_check
      _
    $region171: #{cdssnet_forward.2} parent=1 // pred_check_branch
      %2285 = sbr.rel (0) target = $region173
    $region172: #{cdssnet_forward.2} parent=1 // pred_region
      %2286 = dma.done [#allocation5], 32
    $region173: #{cdssnet_forward.2} parent=1 // pred_fallthru
      _
    // Predicated region
    $region174: #{cdssnet_forward.2} parent=1 // pred_check
      _
    $region175: #{cdssnet_forward.2} parent=1 // pred_check_branch
      %2288 = sbr.rel (0) target = $region177
    $region176: #{cdssnet_forward.2} parent=1 // pred_region
      %2289 = dma.done [#allocation5], 16
    $region177: #{cdssnet_forward.2} parent=1 // pred_fallthru
      _
    // Predicated region
    $region178: #{cdssnet_forward.2} parent=1 // pred_check
      _
    $region179: #{cdssnet_forward.2} parent=1 // pred_check_branch
      %2291 = sbr.rel (0) target = $region181
    $region180: #{cdssnet_forward.2} parent=1 // pred_region
      %2292 = dma.done [#allocation8], 32
    $region181: #{cdssnet_forward.2} parent=1 // pred_fallthru
      _
    // Predicated region
    $region182: #{cdssnet_forward.2} parent=1 // pred_check
      _
    $region183: #{cdssnet_forward.2} parent=1 // pred_check_branch
      %2294 = sbr.rel (0) target = $region185
    $region184: #{cdssnet_forward.2} parent=1 // pred_region
      %2295 = dma.done [#allocation8], 32
    $region185: #{cdssnet_forward.2} parent=1 // pred_fallthru
      _
    // Predicated region
    $region186: #{cdssnet_forward.2} parent=1 // pred_check
      _
    $region187: #{cdssnet_forward.2} parent=1 // pred_check_branch
      %2297 = sbr.rel (0) target = $region189
    $region188: #{cdssnet_forward.2} parent=1 // pred_region
      %2298 = dma.done [#allocation11], 32
    $region189: #{cdssnet_forward.2} parent=1 // pred_fallthru
      _
    // Predicated region
    $region190: #{cdssnet_forward.2} parent=1 // pred_check
      _
    $region191: #{cdssnet_forward.2} parent=1 // pred_check_branch
      %2300 = sbr.rel (0) target = $region193
    $region192: #{cdssnet_forward.2} parent=1 // pred_region
      %2301 = dma.done [#allocation11], 32
    $region193: #{cdssnet_forward.2} parent=1 // pred_fallthru
      _
    // Predicated region
    $region194: #{cdssnet_forward.2} parent=1 // pred_check
      _
    $region195: #{cdssnet_forward.2} parent=1 // pred_check_branch
      %2303 = sbr.rel (0) target = $region197
    $region196: #{cdssnet_forward.2} parent=1 // pred_region
      %2304 = dma.done [#allocation14], 16
    $region197: #{cdssnet_forward.2} parent=1 // pred_fallthru
      _
    // Predicated region
    $region198: #{cdssnet_forward.2} parent=1 // pred_check
      _
    $region199: #{cdssnet_forward.2} parent=1 // pred_check_branch
      %2306 = sbr.rel (0) target = $region201
    $region200: #{cdssnet_forward.2} parent=1 // pred_region
      %2307 = dma.done [#allocation14], 32
    $region201: #{cdssnet_forward.2} parent=1 // pred_fallthru
      _
    %2308 = vsyncpa [#allocation3], 1
    %2309 = vsyncpa [#allocation5], 1
    %2310 = vsyncpa [#allocation8], 1
    %2311 = vsyncpa [#allocation11], 1
    %2312 = vsyncpa [#allocation14], 1

// kernel: cdssnet_forward.3
$region0: #{cdssnet_forward.3}
  #allocation0 [shape = 'u32[]', space=smem, size = 0x4, offset = 0x4, fixed_abs, tag = 'smem constant byte address 0x4 - core index']
  #allocation1 [shape = 'u32[144,128]{1,0:T(1,128)}', space=vmem, size = 0x12000, scoped, tag = 'internal scratch']
  %s0 = inlined_call_operand.smem [shape: u32[41], index: -1, kind: input, shape index: {}]
  %s1 = sld [smem:[%s0]]
  %s2 = scalar_lea.smem %s0, 1
  %s3 = sld [smem:[%s2]]
  %s4 = scalar_lea.smem %s0, 2
  %s5 = sld [smem:[%s4]]
  %s6 = scalar_lea.smem %s0, 3
  %s7 = sld [smem:[%s6]]
  %s8 = scalar_lea.smem %s0, 4
  %s9 = sld [smem:[%s8]]
  %s10 = scalar_lea.smem %s0, 5
  %s11 = sld [smem:[%s10]]
  %s12 = scalar_lea.smem %s0, 6
  %s13 = sld [smem:[%s12]]
  %s14 = scalar_lea.smem %s0, 7
  %s15 = sld [smem:[%s14]]
  %s16 = scalar_lea.smem %s0, 8
  %s17 = sld [smem:[%s16]]
  %s18 = scalar_lea.smem %s0, 9
  %s19 = sld [smem:[%s18]]
  %s20 = scalar_lea.smem %s0, 10
  %s21 = sld [smem:[%s20]]
  %s22 = scalar_lea.smem %s0, 11
  %s23 = sld [smem:[%s22]]
  %s24 = scalar_lea.smem %s0, 12
  %s25 = sld [smem:[%s24]]
  %s26 = scalar_lea.smem %s0, 13
  %s27 = sld [smem:[%s26]]
  %s28 = scalar_lea.smem %s0, 14
  %s29 = sld [smem:[%s28]]
  %s30 = scalar_lea.smem %s0, 15
  %s31 = sld [smem:[%s30]]
  %s32 = scalar_lea.smem %s0, 16
  %s33 = sld [smem:[%s32]]
  %s34 = scalar_lea.smem %s0, 17
  %s35 = sld [smem:[%s34]]
  %s36 = scalar_lea.smem %s0, 18
  %s37 = sld [smem:[%s36]]
  %s38 = scalar_lea.smem %s0, 19
  %s39 = sld [smem:[%s38]]
  %s40 = scalar_lea.smem %s0, 20
  %s41 = sld [smem:[%s40]]
  %s42 = scalar_lea.smem %s0, 21
  %s43 = sld [smem:[%s42]]
  %s44 = scalar_lea.smem %s0, 22
  %s45 = sld [smem:[%s44]]
  %s46 = scalar_lea.smem %s0, 23
  %s47 = sld [smem:[%s46]]
  %s48 = scalar_lea.smem %s0, 24
  %s49 = sld [smem:[%s48]]
  %s50 = scalar_lea.smem %s0, 25
  %s51 = sld [smem:[%s50]]
  %s52 = scalar_lea.smem %s0, 26
  %s53 = sld [smem:[%s52]]
  %s54 = scalar_lea.smem %s0, 27
  %s55 = sld [smem:[%s54]]
  %s56 = scalar_lea.smem %s0, 28
  %s57 = sld [smem:[%s56]]
  %s58 = scalar_lea.smem %s0, 29
  %s59 = sld [smem:[%s58]]
  %s60 = scalar_lea.smem %s0, 30
  %s61 = sld [smem:[%s60]]
  %s62 = scalar_lea.smem %s0, 31
  %s63 = sld [smem:[%s62]]
  %s64 = scalar_lea.smem %s0, 32
  %s65 = sld [smem:[%s64]]
  %s66 = scalar_lea.smem %s0, 33
  %s67 = sld [smem:[%s66]]
  %s68 = scalar_lea.smem %s0, 34
  %s69 = sld [smem:[%s68]]
  %s70 = scalar_lea.smem %s0, 35
  %s71 = sld [smem:[%s70]]
  %s72 = scalar_lea.smem %s0, 36
  %s73 = sld [smem:[%s72]]
  %s74 = scalar_lea.smem %s0, 37
  %s75 = sld [smem:[%s74]]
  %s76 = scalar_lea.smem %s0, 38
  %s77 = sld [smem:[%s76]]
  %s78 = scalar_lea.smem %s0, 39
  %s79 = sld [smem:[%s78]]
  %s80 = scalar_lea.smem %s0, 40
  %s81 = sld [smem:[%s80]]
  %82 = xla_tuple %s65, %s67, %s69, %s71, %s73, %s75, %s77, %s79, %s81
  %s83 = sld [smem:[#allocation0]]
  $region202: #{cdssnet_forward.3} parent=0
    _
  %s85 = ssub.s32 1, %s83
  %s86 = scalar_select 0, %s85, %s83
  $region1: #{cdssnet_forward.3} parent=0
    #allocation2 [shape = 'u8[1024]{0}', space=vmem, size = 0x400, scoped, tag = 'output window, operand 0, single buffered']
    #allocation3 [shape = 's32[1]{0}', space=sflag, size = 0x4, scoped, tag = 'scoped memory for cdssnet_forward.3']
    #allocation4 [shape = 'u8[1024]{0}', space=vmem, size = 0x400, scoped, tag = 'output window, operand 1, single buffered']
    #allocation5 [shape = 's32[1]{0}', space=sflag, size = 0x4, scoped, tag = 'scoped memory for cdssnet_forward.3']
    #allocation6 [shape = 'u8[512]{0}', space=vmem, size = 0x400, scoped, tag = 'output window, operand 2, single buffered']
    #allocation7 [shape = 'u8[1024]{0}', space=vmem, size = 0x400, scoped, tag = 'output window, operand 3, single buffered']
    #allocation8 [shape = 's32[1]{0}', space=sflag, size = 0x4, scoped, tag = 'scoped memory for cdssnet_forward.3']
    #allocation9 [shape = 'u8[1024]{0}', space=vmem, size = 0x400, scoped, tag = 'output window, operand 4, single buffered']
    #allocation10 [shape = 'u8[1024]{0}', space=vmem, size = 0x400, scoped, tag = 'output window, operand 5, single buffered']
    #allocation11 [shape = 's32[1]{0}', space=sflag, size = 0x4, scoped, tag = 'scoped memory for cdssnet_forward.3']
    #allocation12 [shape = 'u8[1024]{0}', space=vmem, size = 0x400, scoped, tag = 'output window, operand 6, single buffered']
    #allocation13 [shape = 'u8[512]{0}', space=vmem, size = 0x400, scoped, tag = 'output window, operand 7, single buffered']
    #allocation14 [shape = 's32[1]{0}', space=sflag, size = 0x4, scoped, tag = 'scoped memory for cdssnet_forward.3']
    #allocation15 [shape = 'u8[1024]{0}', space=vmem, size = 0x400, scoped, tag = 'output window, operand 8, single buffered']
    %87 = vsyncpa [#allocation3], 0
    %88 = vsyncpa [#allocation5], 0
    %89 = vsyncpa [#allocation8], 0
    %90 = vsyncpa [#allocation11], 0
    %91 = vsyncpa [#allocation14], 0
    // Predicated region
    $region2: #{cdssnet_forward.3} parent=1 // pred_check
      _
    $region3: #{cdssnet_forward.3} parent=1 // pred_check_branch
      %93 = sbr.rel (0) target = $region5
    $region4: #{cdssnet_forward.3} parent=1 // pred_region
      _
    $region5: #{cdssnet_forward.3} parent=1 // pred_fallthru
      _
    // Predicated region
    $region6: #{cdssnet_forward.3} parent=1 // pred_check
      _
    $region7: #{cdssnet_forward.3} parent=1 // pred_check_branch
      %95 = sbr.rel (0) target = $region9
    $region8: #{cdssnet_forward.3} parent=1 // pred_region
      _
    $region9: #{cdssnet_forward.3} parent=1 // pred_fallthru
      _
    // Predicated region
    $region10: #{cdssnet_forward.3} parent=1 // pred_check
      _
    $region11: #{cdssnet_forward.3} parent=1 // pred_check_branch
      %97 = sbr.rel (0) target = $region13
    $region12: #{cdssnet_forward.3} parent=1 // pred_region
      _
    $region13: #{cdssnet_forward.3} parent=1 // pred_fallthru
      _
    // Predicated region
    $region14: #{cdssnet_forward.3} parent=1 // pred_check
      _
    $region15: #{cdssnet_forward.3} parent=1 // pred_check_branch
      %99 = sbr.rel (0) target = $region17
    $region16: #{cdssnet_forward.3} parent=1 // pred_region
      _
    $region17: #{cdssnet_forward.3} parent=1 // pred_fallthru
      _
    // Predicated region
    $region18: #{cdssnet_forward.3} parent=1 // pred_check
      _
    $region19: #{cdssnet_forward.3} parent=1 // pred_check_branch
      %101 = sbr.rel (0) target = $region21
    $region20: #{cdssnet_forward.3} parent=1 // pred_region
      _
    $region21: #{cdssnet_forward.3} parent=1 // pred_fallthru
      _
    // Predicated region
    $region22: #{cdssnet_forward.3} parent=1 // pred_check
      _
    $region23: #{cdssnet_forward.3} parent=1 // pred_check_branch
      %103 = sbr.rel (0) target = $region25
    $region24: #{cdssnet_forward.3} parent=1 // pred_region
      _
    $region25: #{cdssnet_forward.3} parent=1 // pred_fallthru
      _
    // Predicated region
    $region26: #{cdssnet_forward.3} parent=1 // pred_check
      _
    $region27: #{cdssnet_forward.3} parent=1 // pred_check_branch
      %105 = sbr.rel (0) target = $region29
    $region28: #{cdssnet_forward.3} parent=1 // pred_region
      _
    $region29: #{cdssnet_forward.3} parent=1 // pred_fallthru
      _
    // Predicated region
    $region30: #{cdssnet_forward.3} parent=1 // pred_check
      _
    $region31: #{cdssnet_forward.3} parent=1 // pred_check_branch
      %107 = sbr.rel (0) target = $region33
    $region32: #{cdssnet_forward.3} parent=1 // pred_region
      _
    $region33: #{cdssnet_forward.3} parent=1 // pred_fallthru
      _
    // Predicated region
    $region34: #{cdssnet_forward.3} parent=1 // pred_check
      _
    $region35: #{cdssnet_forward.3} parent=1 // pred_check_branch
      %109 = sbr.rel (0) target = $region37
    $region36: #{cdssnet_forward.3} parent=1 // pred_region
      _
    $region37: #{cdssnet_forward.3} parent=1 // pred_fallthru
      _
    // Predicated region
    $region38: #{cdssnet_forward.3} parent=1 // pred_check
      _
    $region39: #{cdssnet_forward.3} parent=1 // pred_check_branch
      %111 = sbr.rel (0) target = $region41
    $region40: #{cdssnet_forward.3} parent=1 // pred_region
      _
    $region41: #{cdssnet_forward.3} parent=1 // pred_fallthru
      _
    // Predicated region
    $region42: #{cdssnet_forward.3} parent=1 // pred_check
      _
    $region43: #{cdssnet_forward.3} parent=1 // pred_check_branch
      %113 = sbr.rel (0) target = $region45
    $region44: #{cdssnet_forward.3} parent=1 // pred_region
      _
    $region45: #{cdssnet_forward.3} parent=1 // pred_fallthru
      _
    // Predicated region
    $region46: #{cdssnet_forward.3} parent=1 // pred_check
      _
    $region47: #{cdssnet_forward.3} parent=1 // pred_check_branch
      %115 = sbr.rel (0) target = $region49
    $region48: #{cdssnet_forward.3} parent=1 // pred_region
      _
    $region49: #{cdssnet_forward.3} parent=1 // pred_fallthru
      _
    // Predicated region
    $region50: #{cdssnet_forward.3} parent=1 // pred_check
      _
    $region51: #{cdssnet_forward.3} parent=1 // pred_check_branch
      %117 = sbr.rel (0) target = $region53
    $region52: #{cdssnet_forward.3} parent=1 // pred_region
      _
    $region53: #{cdssnet_forward.3} parent=1 // pred_fallthru
      _
    // Predicated region
    $region54: #{cdssnet_forward.3} parent=1 // pred_check
      _
    $region55: #{cdssnet_forward.3} parent=1 // pred_check_branch
      %119 = sbr.rel (0) target = $region57
    $region56: #{cdssnet_forward.3} parent=1 // pred_region
      _
    $region57: #{cdssnet_forward.3} parent=1 // pred_fallthru
      _
    // Predicated region
    $region58: #{cdssnet_forward.3} parent=1 // pred_check
      _
    $region59: #{cdssnet_forward.3} parent=1 // pred_check_branch
      %121 = sbr.rel (0) target = $region61
    $region60: #{cdssnet_forward.3} parent=1 // pred_region
      _
    $region61: #{cdssnet_forward.3} parent=1 // pred_fallthru
      _
    // Predicated region
    $region62: #{cdssnet_forward.3} parent=1 // pred_check
      _
    $region63: #{cdssnet_forward.3} parent=1 // pred_check_branch
      %123 = sbr.rel (0) target = $region65
    $region64: #{cdssnet_forward.3} parent=1 // pred_region
      _
    $region65: #{cdssnet_forward.3} parent=1 // pred_fallthru
      _
    // Predicated region
    $region66: #{cdssnet_forward.3} parent=1 // pred_check
      _
    $region67: #{cdssnet_forward.3} parent=1 // pred_check_branch
      %125 = sbr.rel (0) target = $region69
    $region68: #{cdssnet_forward.3} parent=1 // pred_region
      _
    $region69: #{cdssnet_forward.3} parent=1 // pred_fallthru
      _
    // Predicated region
    $region70: #{cdssnet_forward.3} parent=1 // pred_check
      _
    $region71: #{cdssnet_forward.3} parent=1 // pred_check_branch
      %127 = sbr.rel (0) target = $region73
    $region72: #{cdssnet_forward.3} parent=1 // pred_region
      _
    $region73: #{cdssnet_forward.3} parent=1 // pred_fallthru
      _
    // Predicated region
    $region74: #{cdssnet_forward.3} parent=1 // pred_check
      _
    $region75: #{cdssnet_forward.3} parent=1 // pred_check_branch
      %129 = sbr.rel (0) target = $region77
    $region76: #{cdssnet_forward.3} parent=1 // pred_region
      _
    $region77: #{cdssnet_forward.3} parent=1 // pred_fallthru
      _
    // Predicated region
    $region78: #{cdssnet_forward.3} parent=1 // pred_check
      _
    $region79: #{cdssnet_forward.3} parent=1 // pred_check_branch
      %131 = sbr.rel (0) target = $region81
    $region80: #{cdssnet_forward.3} parent=1 // pred_region
      _
    $region81: #{cdssnet_forward.3} parent=1 // pred_fallthru
      _
    // Predicated region
    $region82: #{cdssnet_forward.3} parent=1 // pred_check
      _
    $region83: #{cdssnet_forward.3} parent=1 // pred_check_branch
      %133 = sbr.rel (0) target = $region85
    $region84: #{cdssnet_forward.3} parent=1 // pred_region
      _
    $region85: #{cdssnet_forward.3} parent=1 // pred_fallthru
      _
    // Predicated region
    $region86: #{cdssnet_forward.3} parent=1 // pred_check
      _
    $region87: #{cdssnet_forward.3} parent=1 // pred_check_branch
      %135 = sbr.rel (0) target = $region89
    $region88: #{cdssnet_forward.3} parent=1 // pred_region
      _
    $region89: #{cdssnet_forward.3} parent=1 // pred_fallthru
      _
    // Predicated region
    $region90: #{cdssnet_forward.3} parent=1 // pred_check
      _
    $region91: #{cdssnet_forward.3} parent=1 // pred_check_branch
      %137 = sbr.rel (0) target = $region93
    $region92: #{cdssnet_forward.3} parent=1 // pred_region
      _
    $region93: #{cdssnet_forward.3} parent=1 // pred_fallthru
      _
    // Predicated region
    $region94: #{cdssnet_forward.3} parent=1 // pred_check
      _
    $region95: #{cdssnet_forward.3} parent=1 // pred_check_branch
      %139 = sbr.rel (0) target = $region97
    $region96: #{cdssnet_forward.3} parent=1 // pred_region
      _
    $region97: #{cdssnet_forward.3} parent=1 // pred_fallthru
      _
    // Predicated region
    $region98: #{cdssnet_forward.3} parent=1 // pred_check
      _
    $region99: #{cdssnet_forward.3} parent=1 // pred_check_branch
      %141 = sbr.rel (0) target = $region101
    $region100: #{cdssnet_forward.3} parent=1 // pred_region
      _
    $region101: #{cdssnet_forward.3} parent=1 // pred_fallthru
      _
    // Predicated region
    $region102: #{cdssnet_forward.3} parent=1 // pred_check
      _
    $region103: #{cdssnet_forward.3} parent=1 // pred_check_branch
      %143 = sbr.rel (0) target = $region105
    $region104: #{cdssnet_forward.3} parent=1 // pred_region
      _
    $region105: #{cdssnet_forward.3} parent=1 // pred_fallthru
      _
    // Predicated region
    $region106: #{cdssnet_forward.3} parent=1 // pred_check
      _
    $region107: #{cdssnet_forward.3} parent=1 // pred_check_branch
      %145 = sbr.rel (0) target = $region109
    $region108: #{cdssnet_forward.3} parent=1 // pred_region
      _
    $region109: #{cdssnet_forward.3} parent=1 // pred_fallthru
      _
    // Predicated region
    $region110: #{cdssnet_forward.3} parent=1 // pred_check
      _
    $region111: #{cdssnet_forward.3} parent=1 // pred_check_branch
      %147 = sbr.rel (0) target = $region113
    $region112: #{cdssnet_forward.3} parent=1 // pred_region
      _
    $region113: #{cdssnet_forward.3} parent=1 // pred_fallthru
      _
    // Predicated region
    $region114: #{cdssnet_forward.3} parent=1 // pred_check
      _
    $region115: #{cdssnet_forward.3} parent=1 // pred_check_branch
      %149 = sbr.rel (0) target = $region117
    $region116: #{cdssnet_forward.3} parent=1 // pred_region
      _
    $region117: #{cdssnet_forward.3} parent=1 // pred_fallthru
      _
    // Predicated region
    $region118: #{cdssnet_forward.3} parent=1 // pred_check
      _
    $region119: #{cdssnet_forward.3} parent=1 // pred_check_branch
      %151 = sbr.rel (0) target = $region121
    $region120: #{cdssnet_forward.3} parent=1 // pred_region
      _
    $region121: #{cdssnet_forward.3} parent=1 // pred_fallthru
      _
    // Predicated region
    $region122: #{cdssnet_forward.3} parent=1 // pred_check
      _
    $region123: #{cdssnet_forward.3} parent=1 // pred_check_branch
      %153 = sbr.rel (0) target = $region125
    $region124: #{cdssnet_forward.3} parent=1 // pred_region
      _
    $region125: #{cdssnet_forward.3} parent=1 // pred_fallthru
      _
    // Predicated region
    $region126: #{cdssnet_forward.3} parent=1 // pred_check
      _
    $region127: #{cdssnet_forward.3} parent=1 // pred_check_branch
      %155 = sbr.rel (0) target = $region129
    $region128: #{cdssnet_forward.3} parent=1 // pred_region
      _
    $region129: #{cdssnet_forward.3} parent=1 // pred_fallthru
      _
    %v156 = vld [vmem:[%s1] sm:$0x3]
    %v157 = vld [vmem:[%s3] sm:$0xf]
    %v158 = vld [vmem:[%s5] sm:$0x1]
    %v160 = vlaneseq
    %v161 = vshrl.u32 %v160, 7
    %v162 = vsub.s32 0, %v161
    %v163 = vrot.slane %v158, %v162
    %vm165 = vcmask 31744
    %v167 = vsel %vm165, %v156, 0
    %vm169 = vcmask 1043456
    %v171 = vsel %vm169, %v157, 0
    %173 = vmatprep.subr.mxu0 0.0
    %174 = vmatpush1.msra.mxu0 %v171
    %175 = vmatprep.subr.mxu0 0.0
    %176 = vmatpush1.msra.mxu0 0.0
    %177 = vmatprep.subr.mxu0 0.0
    %178 = vmatpush1.msra.mxu0 0.0
    %179 = vmatprep.subr.mxu0 0.0
    %180 = vmatpush1.msra.mxu0 0.0
    %181 = vmatprep.subr.mxu0 0.0
    %182 = vmatpush1.msra.mxu0 0.0
    %183 = vmatprep.subr.mxu0 0.0
    %184 = vmatpush1.msra.mxu0 0.0
    %185 = vmatprep.subr.mxu0 0.0
    %186 = vmatpush1.msra.mxu0 0.0
    %187 = vmatprep.subr.mxu0 0.0
    %188 = vmatpush1.msra.mxu0 0.0
    %189 = vmatprep.subr.mxu0 0.0
    %190 = vmatpush1.msra.mxu0 0.0
    %191 = vmatprep.subr.mxu0 0.0
    %192 = vmatpush1.msra.mxu0 0.0
    %193 = vmatprep.subr.mxu0 0.0
    %194 = vmatpush1.msra.mxu0 0.0
    %195 = vmatprep.subr.mxu0 0.0
    %196 = vmatpush1.msra.mxu0 0.0
    %197 = vmatprep.subr.mxu0 0.0
    %198 = vmatpush1.msra.mxu0 0.0
    %199 = vmatprep.subr.mxu0 0.0
    %200 = vmatpush1.msra.mxu0 0.0
    %201 = vmatprep.subr.mxu0 0.0
    %202 = vmatpush1.msra.mxu0 0.0
    %203 = vmatprep.subr.mxu0 0.0
    %204 = vmatpush1.msra.mxu0 0.0
    %205 = vmatprep.subr.mxu0 0.0
    %206 = vmatpush1.msra.mxu0 0.0
    %207 = vmatprep.subr.mxu0 0.0
    %208 = vmatpush1.msra.mxu0 0.0
    %209 = vmatprep.subr.mxu0 0.0
    %210 = vmatpush1.msra.mxu0 0.0
    %211 = vmatprep.subr.mxu0 0.0
    %212 = vmatpush1.msra.mxu0 0.0
    %213 = vmatprep.subr.mxu0 0.0
    %214 = vmatpush1.msra.mxu0 0.0
    %215 = vmatprep.subr.mxu0 0.0
    %216 = vmatpush1.msra.mxu0 0.0
    %217 = vmatprep.subr.mxu0 0.0
    %218 = vmatpush1.msra.mxu0 0.0
    %219 = vmatprep.subr.mxu0 0.0
    %220 = vmatpush1.msra.mxu0 0.0
    %221 = vmatprep.subr.mxu0 0.0
    %222 = vmatpush1.msra.mxu0 0.0
    %223 = vmatprep.subr.mxu0 0.0
    %224 = vmatpush1.msra.mxu0 0.0
    %225 = vmatprep.subr.mxu0 0.0
    %226 = vmatpush1.msra.mxu0 0.0
    %227 = vmatprep.subr.mxu0 0.0
    %228 = vmatpush1.msra.mxu0 0.0
    %229 = vmatprep.subr.mxu0 0.0
    %230 = vmatpush1.msra.mxu0 0.0
    %231 = vmatprep.subr.mxu0 0.0
    %232 = vmatpush1.msra.mxu0 0.0
    %233 = vmatprep.subr.mxu0 0.0
    %234 = vmatpush1.msra.mxu0 0.0
    %235 = vmatprep.subr.mxu0 0.0
    %236 = vmatpush1.msra.mxu0 0.0
    %237 = vmatprep.mubr.f32.mxu0 0.0
    %238 = vmatmul.mubr.f32.gmra.mrb[0].mxu0 %v167
    %v239 = vpop.f32.mrb[0].mxu0
    %v240 = vadd.f32 %v163, %v239
    %v241 = vpop.f32.mrb[0].mxu0
    %242 = vdwg.mxu0
    %v243 = vmul.f32 %v240, 1.442695
    %v244 = vpow.pop %v243
    %v245 = vrsqrt.pop %v244
    %v246 = vmul.f32 %v244, %v245
    %vm247 = vcmp.eq.f32.partialorder %v244, inf
    %v248 = vsel %vm247, %v244, %v246
    %vm249 = vcmp.eq.f32.partialorder %v244, 0.0
    %v250 = vand.u32 %v244, 2147483648
    %v251 = vsel %vm249, %v250, %v248
    %v252 = vld [vmem:[%s19] sm:$0x3]
    %254 = vrot.lane.b32.xlu0 %v252, 32
    %v255 = vpop.permute.xlu0 %254
    %v257 = vmul.f32 %v251, %v255
    %259 = vrot.lane.b32.xlu0 %v257, 96
    %v260 = vpop.permute.xlu0 %259
    %v262 = vadd.f32 %v240, %v260
    %vm263 = vcmask 254976
    %264 = vst.msk [vmem:[#allocation2] sm:$0x3] %vm263, %v262
    %v265 = vld [vmem:[%s7] sm:$0xff]
    %v266 = vld [vmem:[%s7 + $0x8] sm:$0xff]
    %v267 = vld [vmem:[%s7 + $0x10] sm:$0xff]
    %v268 = vld [vmem:[%s7 + $0x18] sm:$0xff]
    %v269 = vld [vmem:[%s9] sm:$0x1]
    %v271 = vlaneseq
    %v272 = vshrl.u32 %v271, 7
    %v273 = vsub.s32 0, %v272
    %v274 = vrot.slane %v269, %v273
    %vm276 = vcmask 261120
    %v278 = vsel %vm276, %v262, 0
    %280 = vmatprep.subr.mxu0 0.0
    %281 = vmatpush1.msra.mxu0 %v265
    %282 = vmatprep.subr.mxu0 0.0
    %283 = vmatpush1.msra.mxu0 %v266
    %284 = vmatprep.subr.mxu0 0.0
    %285 = vmatpush1.msra.mxu0 %v267
    %286 = vmatprep.subr.mxu0 0.0
    %287 = vmatpush1.msra.mxu0 %v268
    %288 = vmatprep.subr.mxu0 0.0
    %289 = vmatpush1.msra.mxu0 0.0
    %290 = vmatprep.subr.mxu0 0.0
    %291 = vmatpush1.msra.mxu0 0.0
    %292 = vmatprep.subr.mxu0 0.0
    %293 = vmatpush1.msra.mxu0 0.0
    %294 = vmatprep.subr.mxu0 0.0
    %295 = vmatpush1.msra.mxu0 0.0
    %296 = vmatprep.subr.mxu0 0.0
    %297 = vmatpush1.msra.mxu0 0.0
    %298 = vmatprep.subr.mxu0 0.0
    %299 = vmatpush1.msra.mxu0 0.0
    %300 = vmatprep.subr.mxu0 0.0
    %301 = vmatpush1.msra.mxu0 0.0
    %302 = vmatprep.subr.mxu0 0.0
    %303 = vmatpush1.msra.mxu0 0.0
    %304 = vmatprep.subr.mxu0 0.0
    %305 = vmatpush1.msra.mxu0 0.0
    %306 = vmatprep.subr.mxu0 0.0
    %307 = vmatpush1.msra.mxu0 0.0
    %308 = vmatprep.subr.mxu0 0.0
    %309 = vmatpush1.msra.mxu0 0.0
    %310 = vmatprep.subr.mxu0 0.0
    %311 = vmatpush1.msra.mxu0 0.0
    %312 = vmatprep.subr.mxu0 0.0
    %313 = vmatpush1.msra.mxu0 0.0
    %314 = vmatprep.subr.mxu0 0.0
    %315 = vmatpush1.msra.mxu0 0.0
    %316 = vmatprep.subr.mxu0 0.0
    %317 = vmatpush1.msra.mxu0 0.0
    %318 = vmatprep.subr.mxu0 0.0
    %319 = vmatpush1.msra.mxu0 0.0
    %320 = vmatprep.subr.mxu0 0.0
    %321 = vmatpush1.msra.mxu0 0.0
    %322 = vmatprep.subr.mxu0 0.0
    %323 = vmatpush1.msra.mxu0 0.0
    %324 = vmatprep.subr.mxu0 0.0
    %325 = vmatpush1.msra.mxu0 0.0
    %326 = vmatprep.subr.mxu0 0.0
    %327 = vmatpush1.msra.mxu0 0.0
    %328 = vmatprep.subr.mxu0 0.0
    %329 = vmatpush1.msra.mxu0 0.0
    %330 = vmatprep.subr.mxu0 0.0
    %331 = vmatpush1.msra.mxu0 0.0
    %332 = vmatprep.subr.mxu0 0.0
    %333 = vmatpush1.msra.mxu0 0.0
    %334 = vmatprep.subr.mxu0 0.0
    %335 = vmatpush1.msra.mxu0 0.0
    %336 = vmatprep.subr.mxu0 0.0
    %337 = vmatpush1.msra.mxu0 0.0
    %338 = vmatprep.subr.mxu0 0.0
    %339 = vmatpush1.msra.mxu0 0.0
    %340 = vmatprep.subr.mxu0 0.0
    %341 = vmatpush1.msra.mxu0 0.0
    %342 = vmatprep.subr.mxu0 0.0
    %343 = vmatpush1.msra.mxu0 0.0
    %344 = vmatprep.mubr.f32.mxu0 0.0
    %345 = vmatmul.mubr.f32.gmra.mrb[0].mxu0 %v278
    %v346 = vpop.f32.mrb[0].mxu0
    %v347 = vadd.f32 %v274, %v346
    %v348 = vpop.f32.mrb[0].mxu0
    %349 = vdwg.mxu0
    %v350 = vtanh.pop %v347
    %vm351 = vcmask 25600
    %352 = vst.msk [vmem:[#allocation4] sm:$0x3] %vm351, %v350
    %v353 = vadd.f32 %v240, 1.0
    %v354 = vmul.f32 %v240, %v240
    %356 = vrot.lane.b32.xlu0 %v354, 32
    %v357 = vpop.permute.xlu0 %356
    %v359 = vsub.f32 %v353, %v357
    %v360 = vsub.f32 %v359, %v244
    %362 = vrot.lane.b32.xlu0 %v360, 96
    %v363 = vpop.permute.xlu0 %362
    %v365 = vsel %vm263, %v363, 0.0
    %366 = vadd.xlane.f32.xlu0 %v365
    %v367 = vpop.xlane.xlu0 %366
    %vm368 = vcmask 1041408
    %v369 = vsel %vm368, %v367, 0.0
    %v370 = vrot.slane %v369, 4
    %v371 = vadd.f32 %v369, %v370
    %v372 = vrot.slane %v371, 2
    %v373 = vadd.f32 %v371, %v372
    %v374 = vrot.slane %v373, 1
    %v375 = vadd.f32 %v373, %v374
    %v376 = vmul.f32 %v375, -0.0625
    %vm377 = vcmask 0
    %378 = vst.msk [vmem:[#allocation6] sm:$0x1] %vm377, %v376
    %v379 = vld [vmem:[%s11] sm:$0xff]
    %v380 = vld [vmem:[%s11 + $0x8] sm:$0xff]
    %v381 = vld [vmem:[%s11 + $0x10] sm:$0xff]
    %v382 = vld [vmem:[%s11 + $0x18] sm:$0xff]
    %v383 = vld [vmem:[%s13] sm:$0x1]
    %v385 = vlaneseq
    %v386 = vshrl.u32 %v385, 7
    %v387 = vsub.s32 0, %v386
    %v388 = vrot.slane %v383, %v387
    %390 = vmatprep.subr.mxu0 0.0
    %391 = vmatpush1.msra.mxu0 %v379
    %392 = vmatprep.subr.mxu0 0.0
    %393 = vmatpush1.msra.mxu0 %v380
    %394 = vmatprep.subr.mxu0 0.0
    %395 = vmatpush1.msra.mxu0 %v381
    %396 = vmatprep.subr.mxu0 0.0
    %397 = vmatpush1.msra.mxu0 %v382
    %398 = vmatprep.subr.mxu0 0.0
    %399 = vmatpush1.msra.mxu0 0.0
    %400 = vmatprep.subr.mxu0 0.0
    %401 = vmatpush1.msra.mxu0 0.0
    %402 = vmatprep.subr.mxu0 0.0
    %403 = vmatpush1.msra.mxu0 0.0
    %404 = vmatprep.subr.mxu0 0.0
    %405 = vmatpush1.msra.mxu0 0.0
    %406 = vmatprep.subr.mxu0 0.0
    %407 = vmatpush1.msra.mxu0 0.0
    %408 = vmatprep.subr.mxu0 0.0
    %409 = vmatpush1.msra.mxu0 0.0
    %410 = vmatprep.subr.mxu0 0.0
    %411 = vmatpush1.msra.mxu0 0.0
    %412 = vmatprep.subr.mxu0 0.0
    %413 = vmatpush1.msra.mxu0 0.0
    %414 = vmatprep.subr.mxu0 0.0
    %415 = vmatpush1.msra.mxu0 0.0
    %416 = vmatprep.subr.mxu0 0.0
    %417 = vmatpush1.msra.mxu0 0.0
    %418 = vmatprep.subr.mxu0 0.0
    %419 = vmatpush1.msra.mxu0 0.0
    %420 = vmatprep.subr.mxu0 0.0
    %421 = vmatpush1.msra.mxu0 0.0
    %422 = vmatprep.subr.mxu0 0.0
    %423 = vmatpush1.msra.mxu0 0.0
    %424 = vmatprep.subr.mxu0 0.0
    %425 = vmatpush1.msra.mxu0 0.0
    %426 = vmatprep.subr.mxu0 0.0
    %427 = vmatpush1.msra.mxu0 0.0
    %428 = vmatprep.subr.mxu0 0.0
    %429 = vmatpush1.msra.mxu0 0.0
    %430 = vmatprep.subr.mxu0 0.0
    %431 = vmatpush1.msra.mxu0 0.0
    %432 = vmatprep.subr.mxu0 0.0
    %433 = vmatpush1.msra.mxu0 0.0
    %434 = vmatprep.subr.mxu0 0.0
    %435 = vmatpush1.msra.mxu0 0.0
    %436 = vmatprep.subr.mxu0 0.0
    %437 = vmatpush1.msra.mxu0 0.0
    %438 = vmatprep.subr.mxu0 0.0
    %439 = vmatpush1.msra.mxu0 0.0
    %440 = vmatprep.subr.mxu0 0.0
    %441 = vmatpush1.msra.mxu0 0.0
    %442 = vmatprep.subr.mxu0 0.0
    %443 = vmatpush1.msra.mxu0 0.0
    %444 = vmatprep.subr.mxu0 0.0
    %445 = vmatpush1.msra.mxu0 0.0
    %446 = vmatprep.subr.mxu0 0.0
    %447 = vmatpush1.msra.mxu0 0.0
    %448 = vmatprep.subr.mxu0 0.0
    %449 = vmatpush1.msra.mxu0 0.0
    %450 = vmatprep.subr.mxu0 0.0
    %451 = vmatpush1.msra.mxu0 0.0
    %452 = vmatprep.subr.mxu0 0.0
    %453 = vmatpush1.msra.mxu0 0.0
    %454 = vmatprep.mubr.f32.mxu0 0.0
    %455 = vmatmul.mubr.f32.gmra.mrb[0].mxu0 %v278
    %v456 = vpop.f32.mrb[0].mxu0
    %v457 = vadd.f32 %v388, %v456
    %v458 = vpop.f32.mrb[0].mxu0
    %459 = vdwg.mxu0
    %v460 = vmul.f32 %v457, 1.442695
    %v461 = vpow.pop %v460
    %v462 = vrsqrt.pop %v461
    %v463 = vmul.f32 %v461, %v462
    %vm464 = vcmp.eq.f32.partialorder %v461, inf
    %v465 = vsel %vm464, %v461, %v463
    %vm466 = vcmp.eq.f32.partialorder %v461, 0.0
    %v467 = vand.u32 %v461, 2147483648
    %v468 = vsel %vm466, %v467, %v465
    %v469 = vld [vmem:[%s21] sm:$0x3]
    %471 = vrot.lane.b32.xlu0 %v469, 16
    %v472 = vpop.permute.xlu0 %471
    %v474 = vmul.f32 %v468, %v472
    %476 = vrot.lane.b32.xlu0 %v474, 112
    %v477 = vpop.permute.xlu0 %476
    %v479 = vadd.f32 %v457, %v477
    %v480 = vld [vmem:[%s15] sm:$0xff]
    %v481 = vld [vmem:[%s15 + $0x8] sm:$0xff]
    %v482 = vld [vmem:[%s17] sm:$0x1]
    %v484 = vlaneseq
    %v485 = vshrl.u32 %v484, 7
    %v486 = vsub.s32 0, %v485
    %v487 = vrot.slane %v482, %v486
    %vm489 = vcmask 130048
    %v491 = vsel %vm489, %v479, 0
    %493 = vmatprep.subr.mxu0 0.0
    %494 = vmatpush1.msra.mxu0 %v480
    %495 = vmatprep.subr.mxu0 0.0
    %496 = vmatpush1.msra.mxu0 %v481
    %497 = vmatprep.subr.mxu0 0.0
    %498 = vmatpush1.msra.mxu0 0.0
    %499 = vmatprep.subr.mxu0 0.0
    %500 = vmatpush1.msra.mxu0 0.0
    %501 = vmatprep.subr.mxu0 0.0
    %502 = vmatpush1.msra.mxu0 0.0
    %503 = vmatprep.subr.mxu0 0.0
    %504 = vmatpush1.msra.mxu0 0.0
    %505 = vmatprep.subr.mxu0 0.0
    %506 = vmatpush1.msra.mxu0 0.0
    %507 = vmatprep.subr.mxu0 0.0
    %508 = vmatpush1.msra.mxu0 0.0
    %509 = vmatprep.subr.mxu0 0.0
    %510 = vmatpush1.msra.mxu0 0.0
    %511 = vmatprep.subr.mxu0 0.0
    %512 = vmatpush1.msra.mxu0 0.0
    %513 = vmatprep.subr.mxu0 0.0
    %514 = vmatpush1.msra.mxu0 0.0
    %515 = vmatprep.subr.mxu0 0.0
    %516 = vmatpush1.msra.mxu0 0.0
    %517 = vmatprep.subr.mxu0 0.0
    %518 = vmatpush1.msra.mxu0 0.0
    %519 = vmatprep.subr.mxu0 0.0
    %520 = vmatpush1.msra.mxu0 0.0
    %521 = vmatprep.subr.mxu0 0.0
    %522 = vmatpush1.msra.mxu0 0.0
    %523 = vmatprep.subr.mxu0 0.0
    %524 = vmatpush1.msra.mxu0 0.0
    %525 = vmatprep.subr.mxu0 0.0
    %526 = vmatpush1.msra.mxu0 0.0
    %527 = vmatprep.subr.mxu0 0.0
    %528 = vmatpush1.msra.mxu0 0.0
    %529 = vmatprep.subr.mxu0 0.0
    %530 = vmatpush1.msra.mxu0 0.0
    %531 = vmatprep.subr.mxu0 0.0
    %532 = vmatpush1.msra.mxu0 0.0
    %533 = vmatprep.subr.mxu0 0.0
    %534 = vmatpush1.msra.mxu0 0.0
    %535 = vmatprep.subr.mxu0 0.0
    %536 = vmatpush1.msra.mxu0 0.0
    %537 = vmatprep.subr.mxu0 0.0
    %538 = vmatpush1.msra.mxu0 0.0
    %539 = vmatprep.subr.mxu0 0.0
    %540 = vmatpush1.msra.mxu0 0.0
    %541 = vmatprep.subr.mxu0 0.0
    %542 = vmatpush1.msra.mxu0 0.0
    %543 = vmatprep.subr.mxu0 0.0
    %544 = vmatpush1.msra.mxu0 0.0
    %545 = vmatprep.subr.mxu0 0.0
    %546 = vmatpush1.msra.mxu0 0.0
    %547 = vmatprep.subr.mxu0 0.0
    %548 = vmatpush1.msra.mxu0 0.0
    %549 = vmatprep.subr.mxu0 0.0
    %550 = vmatpush1.msra.mxu0 0.0
    %551 = vmatprep.subr.mxu0 0.0
    %552 = vmatpush1.msra.mxu0 0.0
    %553 = vmatprep.subr.mxu0 0.0
    %554 = vmatpush1.msra.mxu0 0.0
    %555 = vmatprep.subr.mxu0 0.0
    %556 = vmatpush1.msra.mxu0 0.0
    %557 = vmatprep.mubr.f32.mxu0 0.0
    %558 = vmatmul.mubr.f32.gmra.mrb[0].mxu0 %v491
    %v559 = vpop.f32.mrb[0].mxu0
    %v560 = vadd.f32 %v487, %v559
    %v561 = vpop.f32.mrb[0].mxu0
    %562 = vdwg.mxu0
    %v563 = vtanh.pop %v560
    %564 = vst.msk [vmem:[#allocation12] sm:$0x3] %vm263, %v563
    %v565 = vadd.f32 %v457, 1.0
    %v566 = vmul.f32 %v457, %v457
    %568 = vrot.lane.b32.xlu0 %v566, 16
    %v569 = vpop.permute.xlu0 %568
    %v571 = vsub.f32 %v565, %v569
    %v572 = vsub.f32 %v571, %v461
    %574 = vrot.lane.b32.xlu0 %v572, 112
    %v575 = vpop.permute.xlu0 %574
    %vm577 = vcmask 123904
    %v578 = vsel %vm577, %v575, 0.0
    %579 = vadd.xlane.f32.xlu0 %v578
    %v580 = vpop.xlane.xlu0 %579
    %v581 = vsel %vm368, %v580, 0.0
    %v582 = vrot.slane %v581, 4
    %v583 = vadd.f32 %v581, %v582
    %v584 = vrot.slane %v583, 2
    %v585 = vadd.f32 %v583, %v584
    %v586 = vrot.slane %v585, 1
    %v587 = vadd.f32 %v585, %v586
    %v588 = vmul.f32 %v587, -0.0078125
    %589 = vst.msk [vmem:[#allocation13] sm:$0x1] %vm377, %v588
    %v590 = vsub.f32 0.0, %v479
    %v591 = vmul.f32 %v590, 1.442695
    %v592 = vpow.pop %v591
    %v593 = vadd.f32 %v592, 1.0
    %v594 = vrcp.pop %v593
    %595 = vst.msk [vmem:[#allocation10] sm:$0x3] %vm577, %v594
    %v596 = vld [vmem:[%s23] sm:$0xff]
    %v597 = vld [vmem:[%s23 + $0x8] sm:$0xff]
    %v598 = vld [vmem:[%s23 + $0x10] sm:$0xff]
    %v599 = vld [vmem:[%s23 + $0x18] sm:$0xff]
    %v600 = vld [vmem:[%s23 + $0x20] sm:$0xff]
    %v601 = vld [vmem:[%s23 + $0x28] sm:$0xff]
    %v602 = vld [vmem:[%s23 + $0x30] sm:$0x3]
    %v603 = vld [vmem:[%s27] sm:$0xf]
    %v604 = vld [vmem:[%s29] sm:$0x1]
    %v606 = vlaneseq
    %v607 = vshrl.u32 %v606, 7
    %v608 = vsub.s32 0, %v607
    %v609 = vrot.slane %v604, %v608
    %v612 = vsel %vm165, %v596, 0
    %v615 = vsel %vm165, %v597, 0
    %v618 = vsel %vm165, %v598, 0
    %v621 = vsel %vm165, %v599, 0
    %v624 = vsel %vm165, %v600, 0
    %v627 = vsel %vm165, %v601, 0
    %v630 = vsel %vm165, %v602, 0
    %v633 = vsel %vm169, %v603, 0
    %635 = vmatprep.subr.mxu0 0.0
    %636 = vmatpush1.msra.mxu0 %v633
    %637 = vmatprep.subr.mxu0 0.0
    %638 = vmatpush1.msra.mxu0 0.0
    %639 = vmatprep.subr.mxu0 0.0
    %640 = vmatpush1.msra.mxu0 0.0
    %641 = vmatprep.subr.mxu0 0.0
    %642 = vmatpush1.msra.mxu0 0.0
    %643 = vmatprep.subr.mxu0 0.0
    %644 = vmatpush1.msra.mxu0 0.0
    %645 = vmatprep.subr.mxu0 0.0
    %646 = vmatpush1.msra.mxu0 0.0
    %647 = vmatprep.subr.mxu0 0.0
    %648 = vmatpush1.msra.mxu0 0.0
    %649 = vmatprep.subr.mxu0 0.0
    %650 = vmatpush1.msra.mxu0 0.0
    %651 = vmatprep.subr.mxu0 0.0
    %652 = vmatpush1.msra.mxu0 0.0
    %653 = vmatprep.subr.mxu0 0.0
    %654 = vmatpush1.msra.mxu0 0.0
    %655 = vmatprep.subr.mxu0 0.0
    %656 = vmatpush1.msra.mxu0 0.0
    %657 = vmatprep.subr.mxu0 0.0
    %658 = vmatpush1.msra.mxu0 0.0
    %659 = vmatprep.subr.mxu0 0.0
    %660 = vmatpush1.msra.mxu0 0.0
    %661 = vmatprep.subr.mxu0 0.0
    %662 = vmatpush1.msra.mxu0 0.0
    %663 = vmatprep.subr.mxu0 0.0
    %664 = vmatpush1.msra.mxu0 0.0
    %665 = vmatprep.subr.mxu0 0.0
    %666 = vmatpush1.msra.mxu0 0.0
    %667 = vmatprep.subr.mxu0 0.0
    %668 = vmatpush1.msra.mxu0 0.0
    %669 = vmatprep.subr.mxu0 0.0
    %670 = vmatpush1.msra.mxu0 0.0
    %671 = vmatprep.subr.mxu0 0.0
    %672 = vmatpush1.msra.mxu0 0.0
    %673 = vmatprep.subr.mxu0 0.0
    %674 = vmatpush1.msra.mxu0 0.0
    %675 = vmatprep.subr.mxu0 0.0
    %676 = vmatpush1.msra.mxu0 0.0
    %677 = vmatprep.subr.mxu0 0.0
    %678 = vmatpush1.msra.mxu0 0.0
    %679 = vmatprep.subr.mxu0 0.0
    %680 = vmatpush1.msra.mxu0 0.0
    %681 = vmatprep.subr.mxu0 0.0
    %682 = vmatpush1.msra.mxu0 0.0
    %683 = vmatprep.subr.mxu0 0.0
    %684 = vmatpush1.msra.mxu0 0.0
    %685 = vmatprep.subr.mxu0 0.0
    %686 = vmatpush1.msra.mxu0 0.0
    %687 = vmatprep.subr.mxu0 0.0
    %688 = vmatpush1.msra.mxu0 0.0
    %689 = vmatprep.subr.mxu0 0.0
    %690 = vmatpush1.msra.mxu0 0.0
    %691 = vmatprep.subr.mxu0 0.0
    %692 = vmatpush1.msra.mxu0 0.0
    %693 = vmatprep.subr.mxu0 0.0
    %694 = vmatpush1.msra.mxu0 0.0
    %695 = vmatprep.subr.mxu0 0.0
    %696 = vmatpush1.msra.mxu0 0.0
    %697 = vmatprep.subr.mxu0 0.0
    %698 = vmatpush1.msra.mxu0 0.0
    %699 = vmatprep.mubr.f32.mxu0 0.0
    %700 = vmatmul.mubr.f32.gmra.mrb[0].mxu0 %v612
    %v701 = vpop.f32.mrb[0].mxu0
    %v702 = vadd.f32 %v609, %v701
    %v703 = vpop.f32.mrb[0].mxu0
    %704 = vmatprep.mubr.f32.mxu0 0.0
    %705 = vmatmul.mubr.f32.gmra.mrb[0].mxu0 %v615
    %v706 = vpop.f32.mrb[0].mxu0
    %v707 = vadd.f32 %v609, %v706
    %v708 = vpop.f32.mrb[0].mxu0
    %709 = vmatprep.mubr.f32.mxu0 0.0
    %710 = vmatmul.mubr.f32.gmra.mrb[0].mxu0 %v618
    %v711 = vpop.f32.mrb[0].mxu0
    %v712 = vadd.f32 %v609, %v711
    %v713 = vpop.f32.mrb[0].mxu0
    %714 = vmatprep.mubr.f32.mxu0 0.0
    %715 = vmatmul.mubr.f32.gmra.mrb[0].mxu0 %v621
    %v716 = vpop.f32.mrb[0].mxu0
    %v717 = vadd.f32 %v609, %v716
    %v718 = vpop.f32.mrb[0].mxu0
    %719 = vmatprep.mubr.f32.mxu0 0.0
    %720 = vmatmul.mubr.f32.gmra.mrb[0].mxu0 %v624
    %v721 = vpop.f32.mrb[0].mxu0
    %v722 = vadd.f32 %v609, %v721
    %v723 = vpop.f32.mrb[0].mxu0
    %724 = vmatprep.mubr.f32.mxu0 0.0
    %725 = vmatmul.mubr.f32.gmra.mrb[0].mxu0 %v627
    %v726 = vpop.f32.mrb[0].mxu0
    %v727 = vadd.f32 %v609, %v726
    %v728 = vpop.f32.mrb[0].mxu0
    %729 = vmatprep.mubr.f32.mxu0 0.0
    %730 = vmatmul.mubr.f32.gmra.mrb[0].mxu0 %v630
    %v731 = vpop.f32.mrb[0].mxu0
    %v732 = vadd.f32 %v609, %v731
    %v733 = vpop.f32.mrb[0].mxu0
    %734 = vdwg.mxu0
    %vm735 = vcmask 244736
    %v736 = vsel %vm735, %v702, 0.0
    %v737 = vsel %vm735, %v707, 0.0
    %v738 = vadd.f32 %v736, %v737
    %v739 = vsel %vm735, %v712, 0.0
    %v740 = vadd.f32 %v738, %v739
    %v741 = vsel %vm735, %v717, 0.0
    %v742 = vadd.f32 %v740, %v741
    %v743 = vsel %vm735, %v722, 0.0
    %v744 = vadd.f32 %v742, %v743
    %v745 = vsel %vm735, %v727, 0.0
    %v746 = vadd.f32 %v744, %v745
    %vm747 = vcmask 238592
    %v748 = vsel %vm747, %v732, 0.0
    %v749 = vadd.f32 %v746, %v748
    %v750 = vrot.slane %v749, 4
    %v751 = vadd.f32 %v749, %v750
    %v752 = vrot.slane %v751, 2
    %v753 = vadd.f32 %v751, %v752
    %v754 = vrot.slane %v753, 1
    %v755 = vadd.f32 %v753, %v754
    %v756 = vrcp.pop 50.0
    %v757 = vmul.f32 %v755, %v756
    %v758 = vsub.f32 %v702, %v757
    %v759 = vsub.f32 %v707, %v757
    %v760 = vsub.f32 %v712, %v757
    %v761 = vsub.f32 %v717, %v757
    %v762 = vsub.f32 %v722, %v757
    %v763 = vsub.f32 %v727, %v757
    %v764 = vsub.f32 %v732, %v757
    %v765 = vmul.f32 %v758, %v758
    %v766 = vmul.f32 %v759, %v759
    %v767 = vmul.f32 %v760, %v760
    %v768 = vmul.f32 %v761, %v761
    %v769 = vmul.f32 %v762, %v762
    %v770 = vmul.f32 %v763, %v763
    %v771 = vmul.f32 %v764, %v764
    %v772 = vsel %vm735, %v765, 0.0
    %v773 = vsel %vm735, %v766, 0.0
    %v774 = vadd.f32 %v772, %v773
    %v775 = vsel %vm735, %v767, 0.0
    %v776 = vadd.f32 %v774, %v775
    %v777 = vsel %vm735, %v768, 0.0
    %v778 = vadd.f32 %v776, %v777
    %v779 = vsel %vm735, %v769, 0.0
    %v780 = vadd.f32 %v778, %v779
    %v781 = vsel %vm735, %v770, 0.0
    %v782 = vadd.f32 %v780, %v781
    %v783 = vsel %vm747, %v771, 0.0
    %v784 = vadd.f32 %v782, %v783
    %v785 = vrot.slane %v784, 4
    %v786 = vadd.f32 %v784, %v785
    %v787 = vrot.slane %v786, 2
    %v788 = vadd.f32 %v786, %v787
    %v789 = vrot.slane %v788, 1
    %v790 = vadd.f32 %v788, %v789
    %v791 = vmul.f32 %v790, %v756
    %v792 = vld [vmem:[%s31] sm:$0x1]
    %v793 = vadd.f32 %v791, 1e-05
    %v794 = vrsqrt.pop %v793
    %v795 = vmul.f32 %v792, %v794
    %v796 = vld [vmem:[%s33] sm:$0x1]
    %v797 = vmul.f32 %v757, %v795
    %v798 = vsub.f32 %v796, %v797
    %v799 = vmul.f32 %v604, %v795
    %v800 = vadd.f32 %v798, %v799
    %v801 = vld [vmem:[%s37] sm:$0xff]
    %v802 = vld [vmem:[%s37 + $0x8] sm:$0xff]
    %v803 = vld [vmem:[%s37 + $0x10] sm:$0xff]
    %v804 = vld [vmem:[%s37 + $0x18] sm:$0xff]
    %v805 = vld [vmem:[%s37 + $0x20] sm:$0xff]
    %v806 = vld [vmem:[%s37 + $0x28] sm:$0xff]
    %v807 = vld [vmem:[%s37 + $0x30] sm:$0xff]
    %v808 = vld [vmem:[%s37 + $0x38] sm:$0xff]
    %v809 = vld [vmem:[%s37 + $0x40] sm:$0xff]
    %v810 = vld [vmem:[%s37 + $0x48] sm:$0x3f]
    %v811 = vld [vmem:[%s37 + $0x50] sm:$0x3f]
    %v812 = vld [vmem:[%s37 + $0x58] sm:$0x3f]
    %v814 = vsel %vm735, %v795, 0
    %vm816 = vcmask 1045504
    %v818 = vsel %vm816, %v810, 0
    %v821 = vsel %vm816, %v811, 0
    %v824 = vsel %vm816, %v812, 0
    %826 = vmatprep.subr.mxu0 %v802
    %827 = vmatpush1.msra.mxu0 %v801
    %828 = vmatprep.subr.mxu0 %v805
    %829 = vmatpush1.msra.mxu0 %v804
    %830 = vmatprep.subr.mxu0 %v808
    %831 = vmatpush1.msra.mxu0 %v807
    %832 = vmatprep.subr.mxu0 %v821
    %833 = vmatpush1.msra.mxu0 %v818
    %834 = vmatprep.subr.mxu0 0.0
    %835 = vmatpush1.msra.mxu0 0.0
    %836 = vmatprep.subr.mxu0 0.0
    %837 = vmatpush1.msra.mxu0 0.0
    %838 = vmatprep.subr.mxu0 0.0
    %839 = vmatpush1.msra.mxu0 0.0
    %840 = vmatprep.subr.mxu0 0.0
    %841 = vmatpush1.msra.mxu0 0.0
    %842 = vmatprep.subr.mxu0 0.0
    %843 = vmatpush1.msra.mxu0 0.0
    %844 = vmatprep.subr.mxu0 0.0
    %845 = vmatpush1.msra.mxu0 0.0
    %846 = vmatprep.subr.mxu0 0.0
    %847 = vmatpush1.msra.mxu0 0.0
    %848 = vmatprep.subr.mxu0 0.0
    %849 = vmatpush1.msra.mxu0 0.0
    %850 = vmatprep.subr.mxu0 0.0
    %851 = vmatpush1.msra.mxu0 0.0
    %852 = vmatprep.subr.mxu0 0.0
    %853 = vmatpush1.msra.mxu0 0.0
    %854 = vmatprep.subr.mxu0 0.0
    %855 = vmatpush1.msra.mxu0 0.0
    %856 = vmatprep.subr.mxu0 0.0
    %857 = vmatpush1.msra.mxu0 0.0
    %858 = vmatprep.subr.mxu0 0.0
    %859 = vmatpush1.msra.mxu0 0.0
    %860 = vmatprep.subr.mxu0 0.0
    %861 = vmatpush1.msra.mxu0 0.0
    %862 = vmatprep.subr.mxu0 0.0
    %863 = vmatpush1.msra.mxu0 0.0
    %864 = vmatprep.subr.mxu0 0.0
    %865 = vmatpush1.msra.mxu0 0.0
    %866 = vmatprep.subr.mxu0 0.0
    %867 = vmatpush1.msra.mxu0 0.0
    %868 = vmatprep.subr.mxu0 0.0
    %869 = vmatpush1.msra.mxu0 0.0
    %870 = vmatprep.subr.mxu0 0.0
    %871 = vmatpush1.msra.mxu0 0.0
    %872 = vmatprep.subr.mxu0 0.0
    %873 = vmatpush1.msra.mxu0 0.0
    %874 = vmatprep.subr.mxu0 0.0
    %875 = vmatpush1.msra.mxu0 0.0
    %876 = vmatprep.subr.mxu0 0.0
    %877 = vmatpush1.msra.mxu0 0.0
    %878 = vmatprep.subr.mxu0 0.0
    %879 = vmatpush1.msra.mxu0 0.0
    %880 = vmatprep.subr.mxu0 0.0
    %881 = vmatpush1.msra.mxu0 0.0
    %882 = vmatprep.subr.mxu0 0.0
    %883 = vmatpush1.msra.mxu0 0.0
    %884 = vmatprep.subr.mxu0 0.0
    %885 = vmatpush1.msra.mxu0 0.0
    %886 = vmatprep.subr.mxu0 0.0
    %887 = vmatpush1.msra.mxu0 0.0
    %888 = vmatprep.subr.mxu0 0.0
    %889 = vmatpush1.msra.mxu0 0.0
    %890 = vmatprep.mubr.f32.mxu0 0.0
    %891 = vmatmul.mubr.f32.gmra.mrb[0].mxu0 %v814
    %v892 = vpop.f32.mrb[0].mxu0
    %v893 = vadd.f32 0.0, %v892
    %v894 = vpop.f32.mrb[0].mxu0
    %v895 = vadd.f32 0.0, %v894
    %896 = vdwg.mxu0
    %897 = vmatprep.subr.mxu0 0.0
    %898 = vmatpush1.msra.mxu0 %v803
    %899 = vmatprep.subr.mxu0 0.0
    %900 = vmatpush1.msra.mxu0 %v806
    %901 = vmatprep.subr.mxu0 0.0
    %902 = vmatpush1.msra.mxu0 %v809
    %903 = vmatprep.subr.mxu0 0.0
    %904 = vmatpush1.msra.mxu0 %v824
    %905 = vmatprep.subr.mxu0 0.0
    %906 = vmatpush1.msra.mxu0 0.0
    %907 = vmatprep.subr.mxu0 0.0
    %908 = vmatpush1.msra.mxu0 0.0
    %909 = vmatprep.subr.mxu0 0.0
    %910 = vmatpush1.msra.mxu0 0.0
    %911 = vmatprep.subr.mxu0 0.0
    %912 = vmatpush1.msra.mxu0 0.0
    %913 = vmatprep.subr.mxu0 0.0
    %914 = vmatpush1.msra.mxu0 0.0
    %915 = vmatprep.subr.mxu0 0.0
    %916 = vmatpush1.msra.mxu0 0.0
    %917 = vmatprep.subr.mxu0 0.0
    %918 = vmatpush1.msra.mxu0 0.0
    %919 = vmatprep.subr.mxu0 0.0
    %920 = vmatpush1.msra.mxu0 0.0
    %921 = vmatprep.subr.mxu0 0.0
    %922 = vmatpush1.msra.mxu0 0.0
    %923 = vmatprep.subr.mxu0 0.0
    %924 = vmatpush1.msra.mxu0 0.0
    %925 = vmatprep.subr.mxu0 0.0
    %926 = vmatpush1.msra.mxu0 0.0
    %927 = vmatprep.subr.mxu0 0.0
    %928 = vmatpush1.msra.mxu0 0.0
    %929 = vmatprep.subr.mxu0 0.0
    %930 = vmatpush1.msra.mxu0 0.0
    %931 = vmatprep.subr.mxu0 0.0
    %932 = vmatpush1.msra.mxu0 0.0
    %933 = vmatprep.subr.mxu0 0.0
    %934 = vmatpush1.msra.mxu0 0.0
    %935 = vmatprep.subr.mxu0 0.0
    %936 = vmatpush1.msra.mxu0 0.0
    %937 = vmatprep.subr.mxu0 0.0
    %938 = vmatpush1.msra.mxu0 0.0
    %939 = vmatprep.subr.mxu0 0.0
    %940 = vmatpush1.msra.mxu0 0.0
    %941 = vmatprep.subr.mxu0 0.0
    %942 = vmatpush1.msra.mxu0 0.0
    %943 = vmatprep.subr.mxu0 0.0
    %944 = vmatpush1.msra.mxu0 0.0
    %945 = vmatprep.subr.mxu0 0.0
    %946 = vmatpush1.msra.mxu0 0.0
    %947 = vmatprep.subr.mxu0 0.0
    %948 = vmatpush1.msra.mxu0 0.0
    %949 = vmatprep.subr.mxu0 0.0
    %950 = vmatpush1.msra.mxu0 0.0
    %951 = vmatprep.subr.mxu0 0.0
    %952 = vmatpush1.msra.mxu0 0.0
    %953 = vmatprep.subr.mxu0 0.0
    %954 = vmatpush1.msra.mxu0 0.0
    %955 = vmatprep.subr.mxu0 0.0
    %956 = vmatpush1.msra.mxu0 0.0
    %957 = vmatprep.subr.mxu0 0.0
    %958 = vmatpush1.msra.mxu0 0.0
    %959 = vmatprep.subr.mxu0 0.0
    %960 = vmatpush1.msra.mxu0 0.0
    %961 = vmatprep.mubr.f32.mxu0 0.0
    %962 = vmatmul.mubr.f32.gmra.mrb[0].mxu0 %v814
    %v963 = vpop.f32.mrb[0].mxu0
    %v964 = vadd.f32 0.0, %v963
    %v965 = vpop.f32.mrb[0].mxu0
    %966 = vdwg.mxu0
    %v968 = vsel %vm735, %v800, 0
    %970 = vmatprep.subr.mxu0 %v802
    %971 = vmatpush1.msra.mxu0 %v801
    %972 = vmatprep.subr.mxu0 %v805
    %973 = vmatpush1.msra.mxu0 %v804
    %974 = vmatprep.subr.mxu0 %v808
    %975 = vmatpush1.msra.mxu0 %v807
    %976 = vmatprep.subr.mxu0 %v821
    %977 = vmatpush1.msra.mxu0 %v818
    %978 = vmatprep.subr.mxu0 0.0
    %979 = vmatpush1.msra.mxu0 0.0
    %980 = vmatprep.subr.mxu0 0.0
    %981 = vmatpush1.msra.mxu0 0.0
    %982 = vmatprep.subr.mxu0 0.0
    %983 = vmatpush1.msra.mxu0 0.0
    %984 = vmatprep.subr.mxu0 0.0
    %985 = vmatpush1.msra.mxu0 0.0
    %986 = vmatprep.subr.mxu0 0.0
    %987 = vmatpush1.msra.mxu0 0.0
    %988 = vmatprep.subr.mxu0 0.0
    %989 = vmatpush1.msra.mxu0 0.0
    %990 = vmatprep.subr.mxu0 0.0
    %991 = vmatpush1.msra.mxu0 0.0
    %992 = vmatprep.subr.mxu0 0.0
    %993 = vmatpush1.msra.mxu0 0.0
    %994 = vmatprep.subr.mxu0 0.0
    %995 = vmatpush1.msra.mxu0 0.0
    %996 = vmatprep.subr.mxu0 0.0
    %997 = vmatpush1.msra.mxu0 0.0
    %998 = vmatprep.subr.mxu0 0.0
    %999 = vmatpush1.msra.mxu0 0.0
    %1000 = vmatprep.subr.mxu0 0.0
    %1001 = vmatpush1.msra.mxu0 0.0
    %1002 = vmatprep.subr.mxu0 0.0
    %1003 = vmatpush1.msra.mxu0 0.0
    %1004 = vmatprep.subr.mxu0 0.0
    %1005 = vmatpush1.msra.mxu0 0.0
    %1006 = vmatprep.subr.mxu0 0.0
    %1007 = vmatpush1.msra.mxu0 0.0
    %1008 = vmatprep.subr.mxu0 0.0
    %1009 = vmatpush1.msra.mxu0 0.0
    %1010 = vmatprep.subr.mxu0 0.0
    %1011 = vmatpush1.msra.mxu0 0.0
    %1012 = vmatprep.subr.mxu0 0.0
    %1013 = vmatpush1.msra.mxu0 0.0
    %1014 = vmatprep.subr.mxu0 0.0
    %1015 = vmatpush1.msra.mxu0 0.0
    %1016 = vmatprep.subr.mxu0 0.0
    %1017 = vmatpush1.msra.mxu0 0.0
    %1018 = vmatprep.subr.mxu0 0.0
    %1019 = vmatpush1.msra.mxu0 0.0
    %1020 = vmatprep.subr.mxu0 0.0
    %1021 = vmatpush1.msra.mxu0 0.0
    %1022 = vmatprep.subr.mxu0 0.0
    %1023 = vmatpush1.msra.mxu0 0.0
    %1024 = vmatprep.subr.mxu0 0.0
    %1025 = vmatpush1.msra.mxu0 0.0
    %1026 = vmatprep.subr.mxu0 0.0
    %1027 = vmatpush1.msra.mxu0 0.0
    %1028 = vmatprep.subr.mxu0 0.0
    %1029 = vmatpush1.msra.mxu0 0.0
    %1030 = vmatprep.subr.mxu0 0.0
    %1031 = vmatpush1.msra.mxu0 0.0
    %1032 = vmatprep.subr.mxu0 0.0
    %1033 = vmatpush1.msra.mxu0 0.0
    %1034 = vmatprep.mubr.f32.mxu0 0.0
    %1035 = vmatmul.mubr.f32.gmra.mrb[0].mxu0 %v968
    %v1036 = vpop.f32.mrb[0].mxu0
    %v1037 = vadd.f32 0.0, %v1036
    %v1038 = vpop.f32.mrb[0].mxu0
    %v1039 = vadd.f32 0.0, %v1038
    %1040 = vdwg.mxu0
    %1041 = vmatprep.subr.mxu0 0.0
    %1042 = vmatpush1.msra.mxu0 %v803
    %1043 = vmatprep.subr.mxu0 0.0
    %1044 = vmatpush1.msra.mxu0 %v806
    %1045 = vmatprep.subr.mxu0 0.0
    %1046 = vmatpush1.msra.mxu0 %v809
    %1047 = vmatprep.subr.mxu0 0.0
    %1048 = vmatpush1.msra.mxu0 %v824
    %1049 = vmatprep.subr.mxu0 0.0
    %1050 = vmatpush1.msra.mxu0 0.0
    %1051 = vmatprep.subr.mxu0 0.0
    %1052 = vmatpush1.msra.mxu0 0.0
    %1053 = vmatprep.subr.mxu0 0.0
    %1054 = vmatpush1.msra.mxu0 0.0
    %1055 = vmatprep.subr.mxu0 0.0
    %1056 = vmatpush1.msra.mxu0 0.0
    %1057 = vmatprep.subr.mxu0 0.0
    %1058 = vmatpush1.msra.mxu0 0.0
    %1059 = vmatprep.subr.mxu0 0.0
    %1060 = vmatpush1.msra.mxu0 0.0
    %1061 = vmatprep.subr.mxu0 0.0
    %1062 = vmatpush1.msra.mxu0 0.0
    %1063 = vmatprep.subr.mxu0 0.0
    %1064 = vmatpush1.msra.mxu0 0.0
    %1065 = vmatprep.subr.mxu0 0.0
    %1066 = vmatpush1.msra.mxu0 0.0
    %1067 = vmatprep.subr.mxu0 0.0
    %1068 = vmatpush1.msra.mxu0 0.0
    %1069 = vmatprep.subr.mxu0 0.0
    %1070 = vmatpush1.msra.mxu0 0.0
    %1071 = vmatprep.subr.mxu0 0.0
    %1072 = vmatpush1.msra.mxu0 0.0
    %1073 = vmatprep.subr.mxu0 0.0
    %1074 = vmatpush1.msra.mxu0 0.0
    %1075 = vmatprep.subr.mxu0 0.0
    %1076 = vmatpush1.msra.mxu0 0.0
    %1077 = vmatprep.subr.mxu0 0.0
    %1078 = vmatpush1.msra.mxu0 0.0
    %1079 = vmatprep.subr.mxu0 0.0
    %1080 = vmatpush1.msra.mxu0 0.0
    %1081 = vmatprep.subr.mxu0 0.0
    %1082 = vmatpush1.msra.mxu0 0.0
    %1083 = vmatprep.subr.mxu0 0.0
    %1084 = vmatpush1.msra.mxu0 0.0
    %1085 = vmatprep.subr.mxu0 0.0
    %1086 = vmatpush1.msra.mxu0 0.0
    %1087 = vmatprep.subr.mxu0 0.0
    %1088 = vmatpush1.msra.mxu0 0.0
    %1089 = vmatprep.subr.mxu0 0.0
    %1090 = vmatpush1.msra.mxu0 0.0
    %1091 = vmatprep.subr.mxu0 0.0
    %1092 = vmatpush1.msra.mxu0 0.0
    %1093 = vmatprep.subr.mxu0 0.0
    %1094 = vmatpush1.msra.mxu0 0.0
    %1095 = vmatprep.subr.mxu0 0.0
    %1096 = vmatpush1.msra.mxu0 0.0
    %1097 = vmatprep.subr.mxu0 0.0
    %1098 = vmatpush1.msra.mxu0 0.0
    %1099 = vmatprep.subr.mxu0 0.0
    %1100 = vmatpush1.msra.mxu0 0.0
    %1101 = vmatprep.subr.mxu0 0.0
    %1102 = vmatpush1.msra.mxu0 0.0
    %1103 = vmatprep.subr.mxu0 0.0
    %1104 = vmatpush1.msra.mxu0 0.0
    %1105 = vmatprep.mubr.f32.mxu0 0.0
    %1106 = vmatmul.mubr.f32.gmra.mrb[0].mxu0 %v968
    %v1107 = vpop.f32.mrb[0].mxu0
    %v1108 = vadd.f32 0.0, %v1107
    %v1109 = vpop.f32.mrb[0].mxu0
    %1110 = vdwg.mxu0
    %v1111 = vld [vmem:[%s25] sm:$0xff]
    %v1112 = vld [vmem:[%s25 + $0x8] sm:$0xff]
    %v1113 = vld [vmem:[%s25 + $0x10] sm:$0x3]
    %v1114 = vld [vmem:[%s35] sm:$0xff]
    %v1115 = vld [vmem:[%s35 + $0x8] sm:$0xff]
    %v1116 = vld [vmem:[%s35 + $0x10] sm:$0xff]
    %v1117 = vld [vmem:[%s35 + $0x18] sm:$0xff]
    %v1118 = vld [vmem:[%s35 + $0x20] sm:$0xff]
    %v1119 = vld [vmem:[%s35 + $0x28] sm:$0xff]
    %v1120 = vld [vmem:[%s35 + $0x30] sm:$0xff]
    %v1121 = vld [vmem:[%s35 + $0x38] sm:$0xff]
    %v1122 = vld [vmem:[%s35 + $0x40] sm:$0xff]
    %v1123 = vld [vmem:[%s35 + $0x48] sm:$0xff]
    %v1124 = vld [vmem:[%s35 + $0x50] sm:$0xff]
    %v1125 = vld [vmem:[%s35 + $0x58] sm:$0xff]
    %v1126 = vld [vmem:[%s35 + $0x60] sm:$0xf]
    %v1127 = vld [vmem:[%s35 + $0x68] sm:$0xf]
    %v1128 = vld [vmem:[%s35 + $0x70] sm:$0xf]
    %vm1129 = vcmask 293888
    %v1131 = vsel %vm1129, %v1111, 0
    %v1134 = vsel %vm1129, %v1112, 0
    %v1137 = vsel %vm1129, %v1113, 0
    %v1140 = vsel %vm169, %v1126, 0
    %v1143 = vsel %vm169, %v1127, 0
    %v1146 = vsel %vm169, %v1128, 0
    %1148 = vmatprep.subr.mxu0 %v1115
    %1149 = vmatpush1.msra.mxu0 %v1114
    %1150 = vmatprep.subr.mxu0 %v1118
    %1151 = vmatpush1.msra.mxu0 %v1117
    %1152 = vmatprep.subr.mxu0 %v1121
    %1153 = vmatpush1.msra.mxu0 %v1120
    %1154 = vmatprep.subr.mxu0 %v1124
    %1155 = vmatpush1.msra.mxu0 %v1123
    %1156 = vmatprep.subr.mxu0 %v1143
    %1157 = vmatpush1.msra.mxu0 %v1140
    %1158 = vmatprep.subr.mxu0 0.0
    %1159 = vmatpush1.msra.mxu0 0.0
    %1160 = vmatprep.subr.mxu0 0.0
    %1161 = vmatpush1.msra.mxu0 0.0
    %1162 = vmatprep.subr.mxu0 0.0
    %1163 = vmatpush1.msra.mxu0 0.0
    %1164 = vmatprep.subr.mxu0 0.0
    %1165 = vmatpush1.msra.mxu0 0.0
    %1166 = vmatprep.subr.mxu0 0.0
    %1167 = vmatpush1.msra.mxu0 0.0
    %1168 = vmatprep.subr.mxu0 0.0
    %1169 = vmatpush1.msra.mxu0 0.0
    %1170 = vmatprep.subr.mxu0 0.0
    %1171 = vmatpush1.msra.mxu0 0.0
    %1172 = vmatprep.subr.mxu0 0.0
    %1173 = vmatpush1.msra.mxu0 0.0
    %1174 = vmatprep.subr.mxu0 0.0
    %1175 = vmatpush1.msra.mxu0 0.0
    %1176 = vmatprep.subr.mxu0 0.0
    %1177 = vmatpush1.msra.mxu0 0.0
    %1178 = vmatprep.subr.mxu0 0.0
    %1179 = vmatpush1.msra.mxu0 0.0
    %1180 = vmatprep.subr.mxu0 0.0
    %1181 = vmatpush1.msra.mxu0 0.0
    %1182 = vmatprep.subr.mxu0 0.0
    %1183 = vmatpush1.msra.mxu0 0.0
    %1184 = vmatprep.subr.mxu0 0.0
    %1185 = vmatpush1.msra.mxu0 0.0
    %1186 = vmatprep.subr.mxu0 0.0
    %1187 = vmatpush1.msra.mxu0 0.0
    %1188 = vmatprep.subr.mxu0 0.0
    %1189 = vmatpush1.msra.mxu0 0.0
    %1190 = vmatprep.subr.mxu0 0.0
    %1191 = vmatpush1.msra.mxu0 0.0
    %1192 = vmatprep.subr.mxu0 0.0
    %1193 = vmatpush1.msra.mxu0 0.0
    %1194 = vmatprep.subr.mxu0 0.0
    %1195 = vmatpush1.msra.mxu0 0.0
    %1196 = vmatprep.subr.mxu0 0.0
    %1197 = vmatpush1.msra.mxu0 0.0
    %1198 = vmatprep.subr.mxu0 0.0
    %1199 = vmatpush1.msra.mxu0 0.0
    %1200 = vmatprep.subr.mxu0 0.0
    %1201 = vmatpush1.msra.mxu0 0.0
    %1202 = vmatprep.subr.mxu0 0.0
    %1203 = vmatpush1.msra.mxu0 0.0
    %1204 = vmatprep.subr.mxu0 0.0
    %1205 = vmatpush1.msra.mxu0 0.0
    %1206 = vmatprep.subr.mxu0 0.0
    %1207 = vmatpush1.msra.mxu0 0.0
    %1208 = vmatprep.subr.mxu0 0.0
    %1209 = vmatpush1.msra.mxu0 0.0
    %1210 = vmatprep.subr.mxu0 0.0
    %1211 = vmatpush1.msra.mxu0 0.0
    %1212 = vmatprep.mubr.f32.mxu0 0.0
    %1213 = vmatmul.mubr.f32.gmra.mrb[0].mxu0 %v1131
    %v1214 = vpop.f32.mrb[0].mxu0
    %v1215 = vadd.f32 0.0, %v1214
    %v1216 = vpop.f32.mrb[0].mxu0
    %v1217 = vadd.f32 0.0, %v1216
    %1218 = vmatprep.mubr.f32.mxu0 0.0
    %1219 = vmatmul.mubr.f32.gmra.mrb[0].mxu0 %v1134
    %v1220 = vpop.f32.mrb[0].mxu0
    %v1221 = vadd.f32 0.0, %v1220
    %v1222 = vpop.f32.mrb[0].mxu0
    %v1223 = vadd.f32 0.0, %v1222
    %1224 = vmatprep.mubr.f32.mxu0 0.0
    %1225 = vmatmul.mubr.f32.gmra.mrb[0].mxu0 %v1137
    %v1226 = vpop.f32.mrb[0].mxu0
    %v1227 = vadd.f32 0.0, %v1226
    %v1228 = vpop.f32.mrb[0].mxu0
    %v1229 = vadd.f32 0.0, %v1228
    %1230 = vdwg.mxu0
    %1231 = vmatprep.subr.mxu0 0.0
    %1232 = vmatpush1.msra.mxu0 %v1116
    %1233 = vmatprep.subr.mxu0 0.0
    %1234 = vmatpush1.msra.mxu0 %v1119
    %1235 = vmatprep.subr.mxu0 0.0
    %1236 = vmatpush1.msra.mxu0 %v1122
    %1237 = vmatprep.subr.mxu0 0.0
    %1238 = vmatpush1.msra.mxu0 %v1125
    %1239 = vmatprep.subr.mxu0 0.0
    %1240 = vmatpush1.msra.mxu0 %v1146
    %1241 = vmatprep.subr.mxu0 0.0
    %1242 = vmatpush1.msra.mxu0 0.0
    %1243 = vmatprep.subr.mxu0 0.0
    %1244 = vmatpush1.msra.mxu0 0.0
    %1245 = vmatprep.subr.mxu0 0.0
    %1246 = vmatpush1.msra.mxu0 0.0
    %1247 = vmatprep.subr.mxu0 0.0
    %1248 = vmatpush1.msra.mxu0 0.0
    %1249 = vmatprep.subr.mxu0 0.0
    %1250 = vmatpush1.msra.mxu0 0.0
    %1251 = vmatprep.subr.mxu0 0.0
    %1252 = vmatpush1.msra.mxu0 0.0
    %1253 = vmatprep.subr.mxu0 0.0
    %1254 = vmatpush1.msra.mxu0 0.0
    %1255 = vmatprep.subr.mxu0 0.0
    %1256 = vmatpush1.msra.mxu0 0.0
    %1257 = vmatprep.subr.mxu0 0.0
    %1258 = vmatpush1.msra.mxu0 0.0
    %1259 = vmatprep.subr.mxu0 0.0
    %1260 = vmatpush1.msra.mxu0 0.0
    %1261 = vmatprep.subr.mxu0 0.0
    %1262 = vmatpush1.msra.mxu0 0.0
    %1263 = vmatprep.subr.mxu0 0.0
    %1264 = vmatpush1.msra.mxu0 0.0
    %1265 = vmatprep.subr.mxu0 0.0
    %1266 = vmatpush1.msra.mxu0 0.0
    %1267 = vmatprep.subr.mxu0 0.0
    %1268 = vmatpush1.msra.mxu0 0.0
    %1269 = vmatprep.subr.mxu0 0.0
    %1270 = vmatpush1.msra.mxu0 0.0
    %1271 = vmatprep.subr.mxu0 0.0
    %1272 = vmatpush1.msra.mxu0 0.0
    %1273 = vmatprep.subr.mxu0 0.0
    %1274 = vmatpush1.msra.mxu0 0.0
    %1275 = vmatprep.subr.mxu0 0.0
    %1276 = vmatpush1.msra.mxu0 0.0
    %1277 = vmatprep.subr.mxu0 0.0
    %1278 = vmatpush1.msra.mxu0 0.0
    %1279 = vmatprep.subr.mxu0 0.0
    %1280 = vmatpush1.msra.mxu0 0.0
    %1281 = vmatprep.subr.mxu0 0.0
    %1282 = vmatpush1.msra.mxu0 0.0
    %1283 = vmatprep.subr.mxu0 0.0
    %1284 = vmatpush1.msra.mxu0 0.0
    %1285 = vmatprep.subr.mxu0 0.0
    %1286 = vmatpush1.msra.mxu0 0.0
    %1287 = vmatprep.subr.mxu0 0.0
    %1288 = vmatpush1.msra.mxu0 0.0
    %1289 = vmatprep.subr.mxu0 0.0
    %1290 = vmatpush1.msra.mxu0 0.0
    %1291 = vmatprep.subr.mxu0 0.0
    %1292 = vmatpush1.msra.mxu0 0.0
    %1293 = vmatprep.subr.mxu0 0.0
    %1294 = vmatpush1.msra.mxu0 0.0
    %1295 = vmatprep.mubr.f32.mxu0 0.0
    %1296 = vmatmul.mubr.f32.gmra.mrb[0].mxu0 %v1131
    %v1297 = vpop.f32.mrb[0].mxu0
    %v1298 = vadd.f32 0.0, %v1297
    %v1299 = vpop.f32.mrb[0].mxu0
    %1300 = vmatprep.mubr.f32.mxu0 0.0
    %1301 = vmatmul.mubr.f32.gmra.mrb[0].mxu0 %v1134
    %v1302 = vpop.f32.mrb[0].mxu0
    %v1303 = vadd.f32 0.0, %v1302
    %v1304 = vpop.f32.mrb[0].mxu0
    %1305 = vmatprep.mubr.f32.mxu0 0.0
    %1306 = vmatmul.mubr.f32.gmra.mrb[0].mxu0 %v1137
    %v1307 = vpop.f32.mrb[0].mxu0
    %v1308 = vadd.f32 0.0, %v1307
    %v1309 = vpop.f32.mrb[0].mxu0
    %1310 = vdwg.mxu0
    %v1311 = vlaneseq
    %v1312 = vshrl.u32 %v1311, 7
    %v1313 = vsub.s32 0, %v1312
    %v1314 = vrot.slane %v893, %v1313
    %v1315 = vlaneseq
    %v1316 = vshrl.u32 %v1315, 7
    %v1317 = vsub.s32 0, %v1316
    %v1318 = vrot.slane %v895, %v1317
    %v1319 = vlaneseq
    %v1320 = vshrl.u32 %v1319, 7
    %v1321 = vsub.s32 0, %v1320
    %v1322 = vrot.slane %v964, %v1321
    %v1323 = vmul.f32 %v1215, %v1314
    %v1324 = vmul.f32 %v1217, %v1318
    %v1325 = vmul.f32 %v1298, %v1322
    %v1326 = vmul.f32 %v1221, %v1314
    %v1327 = vmul.f32 %v1223, %v1318
    %v1328 = vmul.f32 %v1303, %v1322
    %v1329 = vmul.f32 %v1227, %v1314
    %v1330 = vmul.f32 %v1229, %v1318
    %v1331 = vmul.f32 %v1308, %v1322
    %v1332 = vlaneseq
    %v1333 = vshrl.u32 %v1332, 7
    %v1334 = vsub.s32 0, %v1333
    %v1335 = vrot.slane %v1037, %v1334
    %v1336 = vlaneseq
    %v1337 = vshrl.u32 %v1336, 7
    %v1338 = vsub.s32 0, %v1337
    %v1339 = vrot.slane %v1039, %v1338
    %v1340 = vlaneseq
    %v1341 = vshrl.u32 %v1340, 7
    %v1342 = vsub.s32 0, %v1341
    %v1343 = vrot.slane %v1108, %v1342
    %v1344 = vadd.f32 %v1323, %v1335
    %v1345 = vadd.f32 %v1324, %v1339
    %v1346 = vadd.f32 %v1325, %v1343
    %v1347 = vadd.f32 %v1326, %v1335
    %v1348 = vadd.f32 %v1327, %v1339
    %v1349 = vadd.f32 %v1328, %v1343
    %v1350 = vadd.f32 %v1329, %v1335
    %v1351 = vadd.f32 %v1330, %v1339
    %v1352 = vadd.f32 %v1331, %v1343
    %v1353 = vmax.f32 %v1344, 0.0
    %v1354 = vmax.f32 %v1345, 0.0
    %v1355 = vmax.f32 %v1346, 0.0
    %v1356 = vmax.f32 %v1347, 0.0
    %v1357 = vmax.f32 %v1348, 0.0
    %v1358 = vmax.f32 %v1349, 0.0
    %v1359 = vmax.f32 %v1350, 0.0
    %v1360 = vmax.f32 %v1351, 0.0
    %v1361 = vmax.f32 %v1352, 0.0
    %v1362 = vld [vmem:[%s39] sm:$0xff]
    %v1363 = vld [vmem:[%s39 + $0x8] sm:$0xff]
    %v1364 = vld [vmem:[%s39 + $0x10] sm:$0xff]
    %v1365 = vld [vmem:[%s39 + $0x18] sm:$0xff]
    %v1366 = vld [vmem:[%s39 + $0x20] sm:$0xff]
    %v1367 = vld [vmem:[%s39 + $0x28] sm:$0xff]
    %v1368 = vld [vmem:[%s39 + $0x30] sm:$0xff]
    %v1369 = vld [vmem:[%s39 + $0x38] sm:$0xff]
    %v1370 = vld [vmem:[%s39 + $0x40] sm:$0xff]
    %v1371 = vld [vmem:[%s39 + $0x48] sm:$0xff]
    %v1372 = vld [vmem:[%s39 + $0x50] sm:$0xff]
    %v1373 = vld [vmem:[%s39 + $0x58] sm:$0xff]
    %v1374 = vld [vmem:[%s39 + $0x60] sm:$0xff]
    %v1375 = vld [vmem:[%s39 + $0x68] sm:$0xff]
    %v1376 = vld [vmem:[%s39 + $0x70] sm:$0xff]
    %v1377 = vld [vmem:[%s39 + $0x78] sm:$0xff]
    %v1378 = vld [vmem:[%s39 + $0x80] sm:$0xff]
    %v1379 = vld [vmem:[%s39 + $0x88] sm:$0xff]
    %v1380 = vld [vmem:[%s39 + $0x90] sm:$0xff]
    %v1381 = vld [vmem:[%s39 + $0x98] sm:$0xff]
    %v1382 = vld [vmem:[%s39 + $0xa0] sm:$0xff]
    %v1383 = vld [vmem:[%s39 + $0xa8] sm:$0xff]
    %v1384 = vld [vmem:[%s39 + $0xb0] sm:$0xff]
    %v1385 = vld [vmem:[%s39 + $0xb8] sm:$0xff]
    %v1386 = vld [vmem:[%s39 + $0xc0] sm:$0xff]
    %v1387 = vld [vmem:[%s39 + $0xc8] sm:$0xff]
    %v1388 = vld [vmem:[%s39 + $0xd0] sm:$0xff]
    %v1389 = vld [vmem:[%s39 + $0xd8] sm:$0xff]
    %v1390 = vld [vmem:[%s39 + $0xe0] sm:$0xff]
    %v1391 = vld [vmem:[%s39 + $0xe8] sm:$0xff]
    %v1392 = vld [vmem:[%s39 + $0xf0] sm:$0xff]
    %v1393 = vld [vmem:[%s39 + $0xf8] sm:$0xff]
    %v1394 = vld [vmem:[%s39 + $0x100] sm:$0xff]
    %v1395 = vld [vmem:[%s39 + $0x108] sm:$0x3f]
    %v1396 = vld [vmem:[%s41] sm:$0x1]
    %v1398 = vlaneseq
    %v1399 = vshrl.u32 %v1398, 7
    %v1400 = vsub.s32 0, %v1399
    %v1401 = vrot.slane %v1396, %v1400
    %vm1403 = vcmask 113664
    %v1405 = vsel %vm1403, %v1355, 0
    %v1408 = vsel %vm1403, %v1358, 0
    %v1411 = vsel %vm1403, %v1361, 0
    %v1414 = vsel %vm816, %v1395, 0
    %1416 = vmatprep.subr.mxu0 0.0
    %1417 = vmatpush1.msra.mxu0 %v1362
    %1418 = vmatprep.subr.mxu0 0.0
    %1419 = vmatpush1.msra.mxu0 %v1363
    %1420 = vmatprep.subr.mxu0 0.0
    %1421 = vmatpush1.msra.mxu0 %v1364
    %1422 = vmatprep.subr.mxu0 0.0
    %1423 = vmatpush1.msra.mxu0 %v1365
    %1424 = vmatprep.subr.mxu0 0.0
    %1425 = vmatpush1.msra.mxu0 %v1366
    %1426 = vmatprep.subr.mxu0 0.0
    %1427 = vmatpush1.msra.mxu0 %v1367
    %1428 = vmatprep.subr.mxu0 0.0
    %1429 = vmatpush1.msra.mxu0 %v1368
    %1430 = vmatprep.subr.mxu0 0.0
    %1431 = vmatpush1.msra.mxu0 %v1369
    %1432 = vmatprep.subr.mxu0 0.0
    %1433 = vmatpush1.msra.mxu0 %v1370
    %1434 = vmatprep.subr.mxu0 0.0
    %1435 = vmatpush1.msra.mxu0 %v1371
    %1436 = vmatprep.subr.mxu0 0.0
    %1437 = vmatpush1.msra.mxu0 %v1372
    %1438 = vmatprep.subr.mxu0 0.0
    %1439 = vmatpush1.msra.mxu0 %v1373
    %1440 = vmatprep.subr.mxu0 0.0
    %1441 = vmatpush1.msra.mxu0 %v1374
    %1442 = vmatprep.subr.mxu0 0.0
    %1443 = vmatpush1.msra.mxu0 %v1375
    %1444 = vmatprep.subr.mxu0 0.0
    %1445 = vmatpush1.msra.mxu0 %v1376
    %1446 = vmatprep.subr.mxu0 0.0
    %1447 = vmatpush1.msra.mxu0 %v1377
    %1448 = vmatprep.subr.mxu0 0.0
    %1449 = vmatpush1.msra.mxu0 %v1378
    %1450 = vmatprep.subr.mxu0 0.0
    %1451 = vmatpush1.msra.mxu0 %v1379
    %1452 = vmatprep.subr.mxu0 0.0
    %1453 = vmatpush1.msra.mxu0 %v1380
    %1454 = vmatprep.subr.mxu0 0.0
    %1455 = vmatpush1.msra.mxu0 %v1381
    %1456 = vmatprep.subr.mxu0 0.0
    %1457 = vmatpush1.msra.mxu0 %v1382
    %1458 = vmatprep.subr.mxu0 0.0
    %1459 = vmatpush1.msra.mxu0 %v1383
    %1460 = vmatprep.subr.mxu0 0.0
    %1461 = vmatpush1.msra.mxu0 %v1384
    %1462 = vmatprep.subr.mxu0 0.0
    %1463 = vmatpush1.msra.mxu0 %v1385
    %1464 = vmatprep.subr.mxu0 0.0
    %1465 = vmatpush1.msra.mxu0 %v1386
    %1466 = vmatprep.subr.mxu0 0.0
    %1467 = vmatpush1.msra.mxu0 %v1387
    %1468 = vmatprep.subr.mxu0 0.0
    %1469 = vmatpush1.msra.mxu0 %v1388
    %1470 = vmatprep.subr.mxu0 0.0
    %1471 = vmatpush1.msra.mxu0 %v1389
    %1472 = vmatprep.subr.mxu0 0.0
    %1473 = vmatpush1.msra.mxu0 %v1390
    %1474 = vmatprep.subr.mxu0 0.0
    %1475 = vmatpush1.msra.mxu0 %v1391
    %1476 = vmatprep.subr.mxu0 0.0
    %1477 = vmatpush1.msra.mxu0 %v1392
    %1478 = vmatprep.subr.mxu0 0.0
    %1479 = vmatpush1.msra.mxu0 %v1393
    %1480 = vmatprep.mubr.f32.mxu0 %v1354
    %1481 = vmatmul.mubr.f32.gmra.mrb[0].mxu0 %v1353
    %v1482 = vpop.f32.mrb[0].mxu0
    %v1483 = vadd.f32 %v1401, %v1482
    %v1484 = vpop.f32.mrb[0].mxu0
    %1485 = vmatprep.mubr.f32.mxu0 %v1357
    %1486 = vmatmul.mubr.f32.gmra.mrb[0].mxu0 %v1356
    %v1487 = vpop.f32.mrb[0].mxu0
    %v1488 = vadd.f32 %v1401, %v1487
    %v1489 = vpop.f32.mrb[0].mxu0
    %1490 = vmatprep.mubr.f32.mxu0 %v1360
    %1491 = vmatmul.mubr.f32.gmra.mrb[0].mxu0 %v1359
    %v1492 = vpop.f32.mrb[0].mxu0
    %v1493 = vadd.f32 %v1401, %v1492
    %v1494 = vpop.f32.mrb[0].mxu0
    %1495 = vdwg.mxu0
    %1496 = vmatprep.subr.mxu0 0.0
    %1497 = vmatpush1.msra.mxu0 %v1394
    %1498 = vmatprep.subr.mxu0 0.0
    %1499 = vmatpush1.msra.mxu0 %v1414
    %1500 = vmatprep.subr.mxu0 0.0
    %1501 = vmatpush1.msra.mxu0 0.0
    %1502 = vmatprep.subr.mxu0 0.0
    %1503 = vmatpush1.msra.mxu0 0.0
    %1504 = vmatprep.subr.mxu0 0.0
    %1505 = vmatpush1.msra.mxu0 0.0
    %1506 = vmatprep.subr.mxu0 0.0
    %1507 = vmatpush1.msra.mxu0 0.0
    %1508 = vmatprep.subr.mxu0 0.0
    %1509 = vmatpush1.msra.mxu0 0.0
    %1510 = vmatprep.subr.mxu0 0.0
    %1511 = vmatpush1.msra.mxu0 0.0
    %1512 = vmatprep.subr.mxu0 0.0
    %1513 = vmatpush1.msra.mxu0 0.0
    %1514 = vmatprep.subr.mxu0 0.0
    %1515 = vmatpush1.msra.mxu0 0.0
    %1516 = vmatprep.subr.mxu0 0.0
    %1517 = vmatpush1.msra.mxu0 0.0
    %1518 = vmatprep.subr.mxu0 0.0
    %1519 = vmatpush1.msra.mxu0 0.0
    %1520 = vmatprep.subr.mxu0 0.0
    %1521 = vmatpush1.msra.mxu0 0.0
    %1522 = vmatprep.subr.mxu0 0.0
    %1523 = vmatpush1.msra.mxu0 0.0
    %1524 = vmatprep.subr.mxu0 0.0
    %1525 = vmatpush1.msra.mxu0 0.0
    %1526 = vmatprep.subr.mxu0 0.0
    %1527 = vmatpush1.msra.mxu0 0.0
    %1528 = vmatprep.subr.mxu0 0.0
    %1529 = vmatpush1.msra.mxu0 0.0
    %1530 = vmatprep.subr.mxu0 0.0
    %1531 = vmatpush1.msra.mxu0 0.0
    %1532 = vmatprep.subr.mxu0 0.0
    %1533 = vmatpush1.msra.mxu0 0.0
    %1534 = vmatprep.subr.mxu0 0.0
    %1535 = vmatpush1.msra.mxu0 0.0
    %1536 = vmatprep.subr.mxu0 0.0
    %1537 = vmatpush1.msra.mxu0 0.0
    %1538 = vmatprep.subr.mxu0 0.0
    %1539 = vmatpush1.msra.mxu0 0.0
    %1540 = vmatprep.subr.mxu0 0.0
    %1541 = vmatpush1.msra.mxu0 0.0
    %1542 = vmatprep.subr.mxu0 0.0
    %1543 = vmatpush1.msra.mxu0 0.0
    %1544 = vmatprep.subr.mxu0 0.0
    %1545 = vmatpush1.msra.mxu0 0.0
    %1546 = vmatprep.subr.mxu0 0.0
    %1547 = vmatpush1.msra.mxu0 0.0
    %1548 = vmatprep.subr.mxu0 0.0
    %1549 = vmatpush1.msra.mxu0 0.0
    %1550 = vmatprep.subr.mxu0 0.0
    %1551 = vmatpush1.msra.mxu0 0.0
    %1552 = vmatprep.subr.mxu0 0.0
    %1553 = vmatpush1.msra.mxu0 0.0
    %1554 = vmatprep.subr.mxu0 0.0
    %1555 = vmatpush1.msra.mxu0 0.0
    %1556 = vmatprep.subr.mxu0 0.0
    %1557 = vmatpush1.msra.mxu0 0.0
    %1558 = vmatprep.subr.mxu0 0.0
    %1559 = vmatpush1.msra.mxu0 0.0
    %1560 = vmatprep.mubr.f32.mxu0 0.0
    %1561 = vmatmul.mubr.f32.gmra.mrb[0].mxu0 %v1405
    %v1562 = vpop.f32.mrb[0].mxu0
    %v1563 = vadd.f32 %v1483, %v1562
    %v1564 = vpop.f32.mrb[0].mxu0
    %1565 = vmatprep.mubr.f32.mxu0 0.0
    %1566 = vmatmul.mubr.f32.gmra.mrb[0].mxu0 %v1408
    %v1567 = vpop.f32.mrb[0].mxu0
    %v1568 = vadd.f32 %v1488, %v1567
    %v1569 = vpop.f32.mrb[0].mxu0
    %1570 = vmatprep.mubr.f32.mxu0 0.0
    %1571 = vmatmul.mubr.f32.gmra.mrb[0].mxu0 %v1411
    %v1572 = vpop.f32.mrb[0].mxu0
    %v1573 = vadd.f32 %v1493, %v1572
    %v1574 = vpop.f32.mrb[0].mxu0
    %1575 = vdwg.mxu0
    %vm1576 = vcmask 80896
    %v1577 = vsel %vm1576, %v1563, 0.0
    %v1578 = vsel %vm1576, %v1568, 0.0
    %v1579 = vadd.f32 %v1577, %v1578
    %vm1580 = vcmask 74752
    %v1581 = vsel %vm1580, %v1573, 0.0
    %v1582 = vadd.f32 %v1579, %v1581
    %v1583 = vrot.slane %v1582, 4
    %v1584 = vadd.f32 %v1582, %v1583
    %v1585 = vrot.slane %v1584, 2
    %v1586 = vadd.f32 %v1584, %v1585
    %v1587 = vrot.slane %v1586, 1
    %v1588 = vadd.f32 %v1586, %v1587
    %v1589 = vrcp.pop 18.0
    %v1590 = vmul.f32 %v1588, %v1589
    %v1591 = vsub.f32 %v1563, %v1590
    %v1592 = vsub.f32 %v1568, %v1590
    %v1593 = vsub.f32 %v1573, %v1590
    %v1594 = vmul.f32 %v1591, %v1591
    %v1595 = vmul.f32 %v1592, %v1592
    %v1596 = vmul.f32 %v1593, %v1593
    %v1597 = vsel %vm1576, %v1594, 0.0
    %v1598 = vsel %vm1576, %v1595, 0.0
    %v1599 = vadd.f32 %v1597, %v1598
    %v1600 = vsel %vm1580, %v1596, 0.0
    %v1601 = vadd.f32 %v1599, %v1600
    %v1602 = vrot.slane %v1601, 4
    %v1603 = vadd.f32 %v1601, %v1602
    %v1604 = vrot.slane %v1603, 2
    %v1605 = vadd.f32 %v1603, %v1604
    %v1606 = vrot.slane %v1605, 1
    %v1607 = vadd.f32 %v1605, %v1606
    %v1608 = vmul.f32 %v1607, %v1589
    %v1609 = vadd.f32 %v1608, 1e-05
    %v1610 = vrsqrt.pop %v1609
    %v1611 = vmul.f32 %v1591, %v1610
    %v1612 = vmul.f32 %v1592, %v1610
    %v1613 = vmul.f32 %v1593, %v1610
    %v1614 = vld [vmem:[%s43] sm:$0x1]
    %v1616 = vlaneseq
    %v1617 = vshrl.u32 %v1616, 7
    %v1618 = vsub.s32 0, %v1617
    %v1619 = vrot.slane %v1614, %v1618
    %v1621 = vmul.f32 %v1611, %v1619
    %v1622 = vmul.f32 %v1612, %v1619
    %v1623 = vmul.f32 %v1613, %v1619
    %v1624 = vld [vmem:[%s45] sm:$0x1]
    %v1626 = vlaneseq
    %v1627 = vshrl.u32 %v1626, 7
    %v1628 = vsub.s32 0, %v1627
    %v1629 = vrot.slane %v1624, %v1628
    %v1631 = vadd.f32 %v1621, %v1629
    %v1632 = vadd.f32 %v1622, %v1629
    %v1633 = vadd.f32 %v1623, %v1629
    %v1634 = vmax.f32 %v1631, 0.0
    %v1635 = vmax.f32 %v1632, 0.0
    %v1636 = vmax.f32 %v1633, 0.0
    %v1637 = vld [vmem:[%s47] sm:$0xff]
    %v1638 = vld [vmem:[%s47 + $0x8] sm:$0xff]
    %v1639 = vld [vmem:[%s47 + $0x10] sm:$0x3]
    %v1640 = vld [vmem:[%s47 + $0x18] sm:$0x3]
    %v1642 = vsel %vm1576, %v1634, 0
    %v1645 = vsel %vm1576, %v1635, 0
    %v1648 = vsel %vm1576, %v1636, 0
    %v1651 = vsel %vm368, %v1639, 0
    %v1654 = vsel %vm368, %v1640, 0
    %1656 = vmatprep.subr.mxu0 %v1638
    %1657 = vmatpush1.msra.mxu0 %v1637
    %1658 = vmatprep.subr.mxu0 %v1654
    %1659 = vmatpush1.msra.mxu0 %v1651
    %1660 = vmatprep.subr.mxu0 0.0
    %1661 = vmatpush1.msra.mxu0 0.0
    %1662 = vmatprep.subr.mxu0 0.0
    %1663 = vmatpush1.msra.mxu0 0.0
    %1664 = vmatprep.subr.mxu0 0.0
    %1665 = vmatpush1.msra.mxu0 0.0
    %1666 = vmatprep.subr.mxu0 0.0
    %1667 = vmatpush1.msra.mxu0 0.0
    %1668 = vmatprep.subr.mxu0 0.0
    %1669 = vmatpush1.msra.mxu0 0.0
    %1670 = vmatprep.subr.mxu0 0.0
    %1671 = vmatpush1.msra.mxu0 0.0
    %1672 = vmatprep.subr.mxu0 0.0
    %1673 = vmatpush1.msra.mxu0 0.0
    %1674 = vmatprep.subr.mxu0 0.0
    %1675 = vmatpush1.msra.mxu0 0.0
    %1676 = vmatprep.subr.mxu0 0.0
    %1677 = vmatpush1.msra.mxu0 0.0
    %1678 = vmatprep.subr.mxu0 0.0
    %1679 = vmatpush1.msra.mxu0 0.0
    %1680 = vmatprep.subr.mxu0 0.0
    %1681 = vmatpush1.msra.mxu0 0.0
    %1682 = vmatprep.subr.mxu0 0.0
    %1683 = vmatpush1.msra.mxu0 0.0
    %1684 = vmatprep.subr.mxu0 0.0
    %1685 = vmatpush1.msra.mxu0 0.0
    %1686 = vmatprep.subr.mxu0 0.0
    %1687 = vmatpush1.msra.mxu0 0.0
    %1688 = vmatprep.subr.mxu0 0.0
    %1689 = vmatpush1.msra.mxu0 0.0
    %1690 = vmatprep.subr.mxu0 0.0
    %1691 = vmatpush1.msra.mxu0 0.0
    %1692 = vmatprep.subr.mxu0 0.0
    %1693 = vmatpush1.msra.mxu0 0.0
    %1694 = vmatprep.subr.mxu0 0.0
    %1695 = vmatpush1.msra.mxu0 0.0
    %1696 = vmatprep.subr.mxu0 0.0
    %1697 = vmatpush1.msra.mxu0 0.0
    %1698 = vmatprep.subr.mxu0 0.0
    %1699 = vmatpush1.msra.mxu0 0.0
    %1700 = vmatprep.subr.mxu0 0.0
    %1701 = vmatpush1.msra.mxu0 0.0
    %1702 = vmatprep.subr.mxu0 0.0
    %1703 = vmatpush1.msra.mxu0 0.0
    %1704 = vmatprep.subr.mxu0 0.0
    %1705 = vmatpush1.msra.mxu0 0.0
    %1706 = vmatprep.subr.mxu0 0.0
    %1707 = vmatpush1.msra.mxu0 0.0
    %1708 = vmatprep.subr.mxu0 0.0
    %1709 = vmatpush1.msra.mxu0 0.0
    %1710 = vmatprep.subr.mxu0 0.0
    %1711 = vmatpush1.msra.mxu0 0.0
    %1712 = vmatprep.subr.mxu0 0.0
    %1713 = vmatpush1.msra.mxu0 0.0
    %1714 = vmatprep.subr.mxu0 0.0
    %1715 = vmatpush1.msra.mxu0 0.0
    %1716 = vmatprep.subr.mxu0 0.0
    %1717 = vmatpush1.msra.mxu0 0.0
    %1718 = vmatprep.subr.mxu0 0.0
    %1719 = vmatpush1.msra.mxu0 0.0
    %1720 = vmatprep.mubr.f32.mxu0 0.0
    %1721 = vmatmul.mubr.f32.gmra.mrb[0].mxu0 %v1642
    %v1722 = vpop.f32.mrb[0].mxu0
    %v1723 = vadd.f32 0.0, %v1722
    %v1724 = vpop.f32.mrb[0].mxu0
    %v1725 = vadd.f32 0.0, %v1724
    %1726 = vmatprep.mubr.f32.mxu0 0.0
    %1727 = vmatmul.mubr.f32.gmra.mrb[0].mxu0 %v1645
    %v1728 = vpop.f32.mrb[0].mxu0
    %v1729 = vadd.f32 0.0, %v1728
    %v1730 = vpop.f32.mrb[0].mxu0
    %v1731 = vadd.f32 0.0, %v1730
    %1732 = vmatprep.mubr.f32.mxu0 0.0
    %1733 = vmatmul.mubr.f32.gmra.mrb[0].mxu0 %v1648
    %v1734 = vpop.f32.mrb[0].mxu0
    %v1735 = vadd.f32 0.0, %v1734
    %v1736 = vpop.f32.mrb[0].mxu0
    %v1737 = vadd.f32 0.0, %v1736
    %1738 = vdwg.mxu0
    %v1739 = vld [vmem:[%s51] sm:$0xff]
    %v1740 = vld [vmem:[%s51 + $0x8] sm:$0xff]
    %v1741 = vld [vmem:[%s51 + $0x10] sm:$0xff]
    %v1742 = vld [vmem:[%s51 + $0x18] sm:$0xff]
    %v1743 = vld [vmem:[%s51 + $0x20] sm:$0x3]
    %v1744 = vld [vmem:[%s51 + $0x28] sm:$0x3]
    %v1745 = vmul.f32 %v1723, %v1739
    %v1746 = vmul.f32 %v1725, %v1740
    %v1747 = vmul.f32 %v1729, %v1741
    %v1748 = vmul.f32 %v1731, %v1742
    %v1749 = vmul.f32 %v1735, %v1743
    %v1750 = vmul.f32 %v1737, %v1744
    %v1751 = vld [vmem:[%s55] sm:$0xff]
    %v1752 = vld [vmem:[%s55 + $0x8] sm:$0xff]
    %v1753 = vld [vmem:[%s55 + $0x10] sm:$0xff]
    %v1754 = vld [vmem:[%s55 + $0x18] sm:$0xff]
    %v1755 = vld [vmem:[%s55 + $0x20] sm:$0xff]
    %v1756 = vld [vmem:[%s55 + $0x28] sm:$0xff]
    %v1757 = vld [vmem:[%s55 + $0x30] sm:$0xff]
    %v1758 = vld [vmem:[%s55 + $0x38] sm:$0xff]
    %v1759 = vld [vmem:[%s55 + $0x40] sm:$0xff]
    %v1760 = vld [vmem:[%s55 + $0x48] sm:$0xff]
    %v1761 = vld [vmem:[%s55 + $0x50] sm:$0xff]
    %v1762 = vld [vmem:[%s55 + $0x58] sm:$0xff]
    %v1763 = vld [vmem:[%s55 + $0x60] sm:$0xff]
    %v1764 = vld [vmem:[%s55 + $0x68] sm:$0xff]
    %v1765 = vld [vmem:[%s55 + $0x70] sm:$0xff]
    %v1766 = vld [vmem:[%s55 + $0x78] sm:$0xff]
    %v1767 = vld [vmem:[%s55 + $0x80] sm:$0xff]
    %v1768 = vld [vmem:[%s55 + $0x88] sm:$0xff]
    %v1770 = vsel %vm489, %v1746, 0
    %v1773 = vsel %vm489, %v1748, 0
    %v1776 = vsel %vm489, %v1750, 0
    %1778 = vmatprep.subr.mxu0 0.0
    %1779 = vmatpush1.msra.mxu0 %v1751
    %1780 = vmatprep.subr.mxu0 0.0
    %1781 = vmatpush1.msra.mxu0 %v1752
    %1782 = vmatprep.subr.mxu0 0.0
    %1783 = vmatpush1.msra.mxu0 %v1753
    %1784 = vmatprep.subr.mxu0 0.0
    %1785 = vmatpush1.msra.mxu0 %v1754
    %1786 = vmatprep.subr.mxu0 0.0
    %1787 = vmatpush1.msra.mxu0 %v1755
    %1788 = vmatprep.subr.mxu0 0.0
    %1789 = vmatpush1.msra.mxu0 %v1756
    %1790 = vmatprep.subr.mxu0 0.0
    %1791 = vmatpush1.msra.mxu0 %v1757
    %1792 = vmatprep.subr.mxu0 0.0
    %1793 = vmatpush1.msra.mxu0 %v1758
    %1794 = vmatprep.subr.mxu0 0.0
    %1795 = vmatpush1.msra.mxu0 %v1759
    %1796 = vmatprep.subr.mxu0 0.0
    %1797 = vmatpush1.msra.mxu0 %v1760
    %1798 = vmatprep.subr.mxu0 0.0
    %1799 = vmatpush1.msra.mxu0 %v1761
    %1800 = vmatprep.subr.mxu0 0.0
    %1801 = vmatpush1.msra.mxu0 %v1762
    %1802 = vmatprep.subr.mxu0 0.0
    %1803 = vmatpush1.msra.mxu0 %v1763
    %1804 = vmatprep.subr.mxu0 0.0
    %1805 = vmatpush1.msra.mxu0 %v1764
    %1806 = vmatprep.subr.mxu0 0.0
    %1807 = vmatpush1.msra.mxu0 %v1765
    %1808 = vmatprep.subr.mxu0 0.0
    %1809 = vmatpush1.msra.mxu0 %v1766
    %1810 = vmatprep.subr.mxu0 0.0
    %1811 = vmatpush1.msra.mxu0 %v1767
    %1812 = vmatprep.subr.mxu0 0.0
    %1813 = vmatpush1.msra.mxu0 %v1768
    %1814 = vmatprep.subr.mxu0 0.0
    %1815 = vmatpush1.msra.mxu0 0.0
    %1816 = vmatprep.subr.mxu0 0.0
    %1817 = vmatpush1.msra.mxu0 0.0
    %1818 = vmatprep.subr.mxu0 0.0
    %1819 = vmatpush1.msra.mxu0 0.0
    %1820 = vmatprep.subr.mxu0 0.0
    %1821 = vmatpush1.msra.mxu0 0.0
    %1822 = vmatprep.subr.mxu0 0.0
    %1823 = vmatpush1.msra.mxu0 0.0
    %1824 = vmatprep.subr.mxu0 0.0
    %1825 = vmatpush1.msra.mxu0 0.0
    %1826 = vmatprep.subr.mxu0 0.0
    %1827 = vmatpush1.msra.mxu0 0.0
    %1828 = vmatprep.subr.mxu0 0.0
    %1829 = vmatpush1.msra.mxu0 0.0
    %1830 = vmatprep.subr.mxu0 0.0
    %1831 = vmatpush1.msra.mxu0 0.0
    %1832 = vmatprep.subr.mxu0 0.0
    %1833 = vmatpush1.msra.mxu0 0.0
    %1834 = vmatprep.subr.mxu0 0.0
    %1835 = vmatpush1.msra.mxu0 0.0
    %1836 = vmatprep.subr.mxu0 0.0
    %1837 = vmatpush1.msra.mxu0 0.0
    %1838 = vmatprep.subr.mxu0 0.0
    %1839 = vmatpush1.msra.mxu0 0.0
    %1840 = vmatprep.subr.mxu0 0.0
    %1841 = vmatpush1.msra.mxu0 0.0
    %1842 = vmatprep.mubr.f32.mxu0 %v1770
    %1843 = vmatmul.mubr.f32.gmra.mrb[0].mxu0 %v1745
    %v1844 = vpop.f32.mrb[0].mxu0
    %v1845 = vadd.f32 0.0, %v1844
    %v1846 = vpop.f32.mrb[0].mxu0
    %1847 = vmatprep.mubr.f32.mxu0 %v1773
    %1848 = vmatmul.mubr.f32.gmra.mrb[0].mxu0 %v1747
    %v1849 = vpop.f32.mrb[0].mxu0
    %v1850 = vadd.f32 0.0, %v1849
    %v1851 = vpop.f32.mrb[0].mxu0
    %1852 = vmatprep.mubr.f32.mxu0 %v1776
    %1853 = vmatmul.mubr.f32.gmra.mrb[0].mxu0 %v1749
    %v1854 = vpop.f32.mrb[0].mxu0
    %v1855 = vadd.f32 0.0, %v1854
    %v1856 = vpop.f32.mrb[0].mxu0
    %1857 = vdwg.mxu0
    %v1858 = vld [vmem:[%s53] sm:$0x3]
    %v1859 = vld [vmem:[%s49] sm:$0x1]
    %v1861 = vlaneseq
    %v1862 = vshrl.u32 %v1861, 7
    %v1863 = vsub.s32 0, %v1862
    %v1864 = vrot.slane %v1859, %v1863
    %vm1866 = vcmask 146432
    %v1868 = vsel %vm1866, %v1858, 0
    %v1871 = vsel %vm368, %v1855, 0
    %1873 = vmatprep.subr.mxu0 0.0
    %1874 = vmatpush1.msra.mxu0 %v1845
    %1875 = vmatprep.subr.mxu0 0.0
    %1876 = vmatpush1.msra.mxu0 %v1850
    %1877 = vmatprep.subr.mxu0 0.0
    %1878 = vmatpush1.msra.mxu0 %v1871
    %1879 = vmatprep.subr.mxu0 0.0
    %1880 = vmatpush1.msra.mxu0 0.0
    %1881 = vmatprep.subr.mxu0 0.0
    %1882 = vmatpush1.msra.mxu0 0.0
    %1883 = vmatprep.subr.mxu0 0.0
    %1884 = vmatpush1.msra.mxu0 0.0
    %1885 = vmatprep.subr.mxu0 0.0
    %1886 = vmatpush1.msra.mxu0 0.0
    %1887 = vmatprep.subr.mxu0 0.0
    %1888 = vmatpush1.msra.mxu0 0.0
    %1889 = vmatprep.subr.mxu0 0.0
    %1890 = vmatpush1.msra.mxu0 0.0
    %1891 = vmatprep.subr.mxu0 0.0
    %1892 = vmatpush1.msra.mxu0 0.0
    %1893 = vmatprep.subr.mxu0 0.0
    %1894 = vmatpush1.msra.mxu0 0.0
    %1895 = vmatprep.subr.mxu0 0.0
    %1896 = vmatpush1.msra.mxu0 0.0
    %1897 = vmatprep.subr.mxu0 0.0
    %1898 = vmatpush1.msra.mxu0 0.0
    %1899 = vmatprep.subr.mxu0 0.0
    %1900 = vmatpush1.msra.mxu0 0.0
    %1901 = vmatprep.subr.mxu0 0.0
    %1902 = vmatpush1.msra.mxu0 0.0
    %1903 = vmatprep.subr.mxu0 0.0
    %1904 = vmatpush1.msra.mxu0 0.0
    %1905 = vmatprep.subr.mxu0 0.0
    %1906 = vmatpush1.msra.mxu0 0.0
    %1907 = vmatprep.subr.mxu0 0.0
    %1908 = vmatpush1.msra.mxu0 0.0
    %1909 = vmatprep.subr.mxu0 0.0
    %1910 = vmatpush1.msra.mxu0 0.0
    %1911 = vmatprep.subr.mxu0 0.0
    %1912 = vmatpush1.msra.mxu0 0.0
    %1913 = vmatprep.subr.mxu0 0.0
    %1914 = vmatpush1.msra.mxu0 0.0
    %1915 = vmatprep.subr.mxu0 0.0
    %1916 = vmatpush1.msra.mxu0 0.0
    %1917 = vmatprep.subr.mxu0 0.0
    %1918 = vmatpush1.msra.mxu0 0.0
    %1919 = vmatprep.subr.mxu0 0.0
    %1920 = vmatpush1.msra.mxu0 0.0
    %1921 = vmatprep.subr.mxu0 0.0
    %1922 = vmatpush1.msra.mxu0 0.0
    %1923 = vmatprep.subr.mxu0 0.0
    %1924 = vmatpush1.msra.mxu0 0.0
    %1925 = vmatprep.subr.mxu0 0.0
    %1926 = vmatpush1.msra.mxu0 0.0
    %1927 = vmatprep.subr.mxu0 0.0
    %1928 = vmatpush1.msra.mxu0 0.0
    %1929 = vmatprep.subr.mxu0 0.0
    %1930 = vmatpush1.msra.mxu0 0.0
    %1931 = vmatprep.subr.mxu0 0.0
    %1932 = vmatpush1.msra.mxu0 0.0
    %1933 = vmatprep.subr.mxu0 0.0
    %1934 = vmatpush1.msra.mxu0 0.0
    %1935 = vmatprep.subr.mxu0 0.0
    %1936 = vmatpush1.msra.mxu0 0.0
    %1937 = vmatprep.mubr.f32.mxu0 0.0
    %1938 = vmatmul.mubr.f32.gmra.mrb[0].mxu0 %v1868
    %v1939 = vpop.f32.mrb[0].mxu0
    %v1940 = vadd.f32 %v1864, %v1939
    %v1941 = vpop.f32.mrb[0].mxu0
    %1942 = vdwg.mxu0
    %v1943 = vsub.f32 0.0, %v1940
    %v1944 = vmul.f32 %v1943, 1.442695
    %v1945 = vpow.pop %v1944
    %v1946 = vadd.f32 %v1945, 1.0
    %v1947 = vrcp.pop %v1946
    %1948 = vst.msk [vmem:[#allocation9] sm:$0x3] %vm577, %v1947
    %v1949 = vld [vmem:[%s57] sm:$0xff]
    %v1950 = vld [vmem:[%s57 + $0x8] sm:$0xff]
    %v1951 = vld [vmem:[%s59] sm:$0xff]
    %v1952 = vld [vmem:[%s59 + $0x8] sm:$0xff]
    %v1954 = vsel %vm489, %v1947, 0
    %1956 = vmatprep.subr.mxu0 0.0
    %1957 = vmatpush1.msra.mxu0 %v1951
    %1958 = vmatprep.subr.mxu0 0.0
    %1959 = vmatpush1.msra.mxu0 %v1952
    %1960 = vmatprep.subr.mxu0 0.0
    %1961 = vmatpush1.msra.mxu0 0.0
    %1962 = vmatprep.subr.mxu0 0.0
    %1963 = vmatpush1.msra.mxu0 0.0
    %1964 = vmatprep.subr.mxu0 0.0
    %1965 = vmatpush1.msra.mxu0 0.0
    %1966 = vmatprep.subr.mxu0 0.0
    %1967 = vmatpush1.msra.mxu0 0.0
    %1968 = vmatprep.subr.mxu0 0.0
    %1969 = vmatpush1.msra.mxu0 0.0
    %1970 = vmatprep.subr.mxu0 0.0
    %1971 = vmatpush1.msra.mxu0 0.0
    %1972 = vmatprep.subr.mxu0 0.0
    %1973 = vmatpush1.msra.mxu0 0.0
    %1974 = vmatprep.subr.mxu0 0.0
    %1975 = vmatpush1.msra.mxu0 0.0
    %1976 = vmatprep.subr.mxu0 0.0
    %1977 = vmatpush1.msra.mxu0 0.0
    %1978 = vmatprep.subr.mxu0 0.0
    %1979 = vmatpush1.msra.mxu0 0.0
    %1980 = vmatprep.subr.mxu0 0.0
    %1981 = vmatpush1.msra.mxu0 0.0
    %1982 = vmatprep.subr.mxu0 0.0
    %1983 = vmatpush1.msra.mxu0 0.0
    %1984 = vmatprep.subr.mxu0 0.0
    %1985 = vmatpush1.msra.mxu0 0.0
    %1986 = vmatprep.subr.mxu0 0.0
    %1987 = vmatpush1.msra.mxu0 0.0
    %1988 = vmatprep.subr.mxu0 0.0
    %1989 = vmatpush1.msra.mxu0 0.0
    %1990 = vmatprep.subr.mxu0 0.0
    %1991 = vmatpush1.msra.mxu0 0.0
    %1992 = vmatprep.subr.mxu0 0.0
    %1993 = vmatpush1.msra.mxu0 0.0
    %1994 = vmatprep.subr.mxu0 0.0
    %1995 = vmatpush1.msra.mxu0 0.0
    %1996 = vmatprep.subr.mxu0 0.0
    %1997 = vmatpush1.msra.mxu0 0.0
    %1998 = vmatprep.subr.mxu0 0.0
    %1999 = vmatpush1.msra.mxu0 0.0
    %2000 = vmatprep.subr.mxu0 0.0
    %2001 = vmatpush1.msra.mxu0 0.0
    %2002 = vmatprep.subr.mxu0 0.0
    %2003 = vmatpush1.msra.mxu0 0.0
    %2004 = vmatprep.subr.mxu0 0.0
    %2005 = vmatpush1.msra.mxu0 0.0
    %2006 = vmatprep.subr.mxu0 0.0
    %2007 = vmatpush1.msra.mxu0 0.0
    %2008 = vmatprep.subr.mxu0 0.0
    %2009 = vmatpush1.msra.mxu0 0.0
    %2010 = vmatprep.subr.mxu0 0.0
    %2011 = vmatpush1.msra.mxu0 0.0
    %2012 = vmatprep.subr.mxu0 0.0
    %2013 = vmatpush1.msra.mxu0 0.0
    %2014 = vmatprep.subr.mxu0 0.0
    %2015 = vmatpush1.msra.mxu0 0.0
    %2016 = vmatprep.subr.mxu0 0.0
    %2017 = vmatpush1.msra.mxu0 0.0
    %2018 = vmatprep.subr.mxu0 0.0
    %2019 = vmatpush1.msra.mxu0 0.0
    %2020 = vmatprep.mubr.f32.mxu0 0.0
    %2021 = vmatmul.mubr.f32.gmra.mrb[0].mxu0 %v1954
    %v2022 = vpop.f32.mrb[0].mxu0
    %v2023 = vadd.f32 0.0, %v2022
    %v2024 = vpop.f32.mrb[0].mxu0
    %2025 = vdwg.mxu0
    %v2027 = vsel %vm489, %v594, 0
    %2029 = vmatprep.subr.mxu0 0.0
    %2030 = vmatpush1.msra.mxu0 %v1949
    %2031 = vmatprep.subr.mxu0 0.0
    %2032 = vmatpush1.msra.mxu0 %v1950
    %2033 = vmatprep.subr.mxu0 0.0
    %2034 = vmatpush1.msra.mxu0 0.0
    %2035 = vmatprep.subr.mxu0 0.0
    %2036 = vmatpush1.msra.mxu0 0.0
    %2037 = vmatprep.subr.mxu0 0.0
    %2038 = vmatpush1.msra.mxu0 0.0
    %2039 = vmatprep.subr.mxu0 0.0
    %2040 = vmatpush1.msra.mxu0 0.0
    %2041 = vmatprep.subr.mxu0 0.0
    %2042 = vmatpush1.msra.mxu0 0.0
    %2043 = vmatprep.subr.mxu0 0.0
    %2044 = vmatpush1.msra.mxu0 0.0
    %2045 = vmatprep.subr.mxu0 0.0
    %2046 = vmatpush1.msra.mxu0 0.0
    %2047 = vmatprep.subr.mxu0 0.0
    %2048 = vmatpush1.msra.mxu0 0.0
    %2049 = vmatprep.subr.mxu0 0.0
    %2050 = vmatpush1.msra.mxu0 0.0
    %2051 = vmatprep.subr.mxu0 0.0
    %2052 = vmatpush1.msra.mxu0 0.0
    %2053 = vmatprep.subr.mxu0 0.0
    %2054 = vmatpush1.msra.mxu0 0.0
    %2055 = vmatprep.subr.mxu0 0.0
    %2056 = vmatpush1.msra.mxu0 0.0
    %2057 = vmatprep.subr.mxu0 0.0
    %2058 = vmatpush1.msra.mxu0 0.0
    %2059 = vmatprep.subr.mxu0 0.0
    %2060 = vmatpush1.msra.mxu0 0.0
    %2061 = vmatprep.subr.mxu0 0.0
    %2062 = vmatpush1.msra.mxu0 0.0
    %2063 = vmatprep.subr.mxu0 0.0
    %2064 = vmatpush1.msra.mxu0 0.0
    %2065 = vmatprep.subr.mxu0 0.0
    %2066 = vmatpush1.msra.mxu0 0.0
    %2067 = vmatprep.subr.mxu0 0.0
    %2068 = vmatpush1.msra.mxu0 0.0
    %2069 = vmatprep.subr.mxu0 0.0
    %2070 = vmatpush1.msra.mxu0 0.0
    %2071 = vmatprep.subr.mxu0 0.0
    %2072 = vmatpush1.msra.mxu0 0.0
    %2073 = vmatprep.subr.mxu0 0.0
    %2074 = vmatpush1.msra.mxu0 0.0
    %2075 = vmatprep.subr.mxu0 0.0
    %2076 = vmatpush1.msra.mxu0 0.0
    %2077 = vmatprep.subr.mxu0 0.0
    %2078 = vmatpush1.msra.mxu0 0.0
    %2079 = vmatprep.subr.mxu0 0.0
    %2080 = vmatpush1.msra.mxu0 0.0
    %2081 = vmatprep.subr.mxu0 0.0
    %2082 = vmatpush1.msra.mxu0 0.0
    %2083 = vmatprep.subr.mxu0 0.0
    %2084 = vmatpush1.msra.mxu0 0.0
    %2085 = vmatprep.subr.mxu0 0.0
    %2086 = vmatpush1.msra.mxu0 0.0
    %2087 = vmatprep.subr.mxu0 0.0
    %2088 = vmatpush1.msra.mxu0 0.0
    %2089 = vmatprep.subr.mxu0 0.0
    %2090 = vmatpush1.msra.mxu0 0.0
    %2091 = vmatprep.subr.mxu0 0.0
    %2092 = vmatpush1.msra.mxu0 0.0
    %2093 = vmatprep.mubr.f32.mxu0 0.0
    %2094 = vmatmul.mubr.f32.gmra.mrb[0].mxu0 %v2027
    %v2095 = vpop.f32.mrb[0].mxu0
    %v2096 = vadd.f32 %v2023, %v2095
    %v2097 = vpop.f32.mrb[0].mxu0
    %2098 = vdwg.mxu0
    %2099 = vst.msk [vmem:[#allocation7] sm:$0x3] %vm263, %v2096
    %v2100 = vld [vmem:[%s61] sm:$0xff]
    %v2101 = vld [vmem:[%s61 + $0x8] sm:$0xff]
    %v2102 = vld [vmem:[%s61 + $0x10] sm:$0xff]
    %v2103 = vld [vmem:[%s61 + $0x18] sm:$0xff]
    %v2104 = vld [vmem:[%s63] sm:$0x1]
    %v2106 = vlaneseq
    %v2107 = vshrl.u32 %v2106, 7
    %v2108 = vsub.s32 0, %v2107
    %v2109 = vrot.slane %v2104, %v2108
    %v2112 = vsel %vm276, %v2096, 0
    %2114 = vmatprep.subr.mxu0 0.0
    %2115 = vmatpush1.msra.mxu0 %v2100
    %2116 = vmatprep.subr.mxu0 0.0
    %2117 = vmatpush1.msra.mxu0 %v2101
    %2118 = vmatprep.subr.mxu0 0.0
    %2119 = vmatpush1.msra.mxu0 %v2102
    %2120 = vmatprep.subr.mxu0 0.0
    %2121 = vmatpush1.msra.mxu0 %v2103
    %2122 = vmatprep.subr.mxu0 0.0
    %2123 = vmatpush1.msra.mxu0 0.0
    %2124 = vmatprep.subr.mxu0 0.0
    %2125 = vmatpush1.msra.mxu0 0.0
    %2126 = vmatprep.subr.mxu0 0.0
    %2127 = vmatpush1.msra.mxu0 0.0
    %2128 = vmatprep.subr.mxu0 0.0
    %2129 = vmatpush1.msra.mxu0 0.0
    %2130 = vmatprep.subr.mxu0 0.0
    %2131 = vmatpush1.msra.mxu0 0.0
    %2132 = vmatprep.subr.mxu0 0.0
    %2133 = vmatpush1.msra.mxu0 0.0
    %2134 = vmatprep.subr.mxu0 0.0
    %2135 = vmatpush1.msra.mxu0 0.0
    %2136 = vmatprep.subr.mxu0 0.0
    %2137 = vmatpush1.msra.mxu0 0.0
    %2138 = vmatprep.subr.mxu0 0.0
    %2139 = vmatpush1.msra.mxu0 0.0
    %2140 = vmatprep.subr.mxu0 0.0
    %2141 = vmatpush1.msra.mxu0 0.0
    %2142 = vmatprep.subr.mxu0 0.0
    %2143 = vmatpush1.msra.mxu0 0.0
    %2144 = vmatprep.subr.mxu0 0.0
    %2145 = vmatpush1.msra.mxu0 0.0
    %2146 = vmatprep.subr.mxu0 0.0
    %2147 = vmatpush1.msra.mxu0 0.0
    %2148 = vmatprep.subr.mxu0 0.0
    %2149 = vmatpush1.msra.mxu0 0.0
    %2150 = vmatprep.subr.mxu0 0.0
    %2151 = vmatpush1.msra.mxu0 0.0
    %2152 = vmatprep.subr.mxu0 0.0
    %2153 = vmatpush1.msra.mxu0 0.0
    %2154 = vmatprep.subr.mxu0 0.0
    %2155 = vmatpush1.msra.mxu0 0.0
    %2156 = vmatprep.subr.mxu0 0.0
    %2157 = vmatpush1.msra.mxu0 0.0
    %2158 = vmatprep.subr.mxu0 0.0
    %2159 = vmatpush1.msra.mxu0 0.0
    %2160 = vmatprep.subr.mxu0 0.0
    %2161 = vmatpush1.msra.mxu0 0.0
    %2162 = vmatprep.subr.mxu0 0.0
    %2163 = vmatpush1.msra.mxu0 0.0
    %2164 = vmatprep.subr.mxu0 0.0
    %2165 = vmatpush1.msra.mxu0 0.0
    %2166 = vmatprep.subr.mxu0 0.0
    %2167 = vmatpush1.msra.mxu0 0.0
    %2168 = vmatprep.subr.mxu0 0.0
    %2169 = vmatpush1.msra.mxu0 0.0
    %2170 = vmatprep.subr.mxu0 0.0
    %2171 = vmatpush1.msra.mxu0 0.0
    %2172 = vmatprep.subr.mxu0 0.0
    %2173 = vmatpush1.msra.mxu0 0.0
    %2174 = vmatprep.subr.mxu0 0.0
    %2175 = vmatpush1.msra.mxu0 0.0
    %2176 = vmatprep.subr.mxu0 0.0
    %2177 = vmatpush1.msra.mxu0 0.0
    %2178 = vmatprep.mubr.f32.mxu0 0.0
    %2179 = vmatmul.mubr.f32.gmra.mrb[0].mxu0 %v2112
    %v2180 = vpop.f32.mrb[0].mxu0
    %v2181 = vadd.f32 %v2109, %v2180
    %v2182 = vpop.f32.mrb[0].mxu0
    %2183 = vdwg.mxu0
    %vm2184 = vcmask 17408
    %2185 = vst.msk [vmem:[#allocation15] sm:$0x3] %vm2184, %v2181
    // Predicated region
    $region130: #{cdssnet_forward.3} parent=1 // pred_check
      _
    $region131: #{cdssnet_forward.3} parent=1 // pred_check_branch
      %2187 = sbr.rel (0) target = $region133
    $region132: #{cdssnet_forward.3} parent=1 // pred_region
      %s2189 = ssub.s32 32, 32
      %2190 = vsyncadd [#allocation3], %s2189
      %s2192 = sshll.u32 [#allocation2], 4
      %s2193 = int_to_ptr.vmem [resolvable:$true] %s2192
      %2195 = dma.vmem_to_hbm [thread:$0]  %s2193, 32, %s65, [#allocation3]
    $region133: #{cdssnet_forward.3} parent=1 // pred_fallthru
      _
    // Predicated region
    $region134: #{cdssnet_forward.3} parent=1 // pred_check
      _
    $region135: #{cdssnet_forward.3} parent=1 // pred_check_branch
      %2197 = sbr.rel (0) target = $region137
    $region136: #{cdssnet_forward.3} parent=1 // pred_region
      %s2199 = ssub.s32 32, 32
      %2200 = vsyncadd [#allocation5], %s2199
      %s2202 = sshll.u32 [#allocation4], 4
      %s2203 = int_to_ptr.vmem [resolvable:$true] %s2202
      %2205 = dma.vmem_to_hbm [thread:$0]  %s2203, 32, %s67, [#allocation5]
    $region137: #{cdssnet_forward.3} parent=1 // pred_fallthru
      _
    // Predicated region
    $region138: #{cdssnet_forward.3} parent=1 // pred_check
      _
    $region139: #{cdssnet_forward.3} parent=1 // pred_check_branch
      %2207 = sbr.rel (0) target = $region141
    $region140: #{cdssnet_forward.3} parent=1 // pred_region
      %s2209 = ssub.s32 16, 16
      %2210 = vsyncadd [#allocation5], %s2209
      %s2212 = sshll.u32 [#allocation6], 4
      %s2213 = int_to_ptr.vmem [resolvable:$true] %s2212
      %2215 = dma.vmem_to_hbm [thread:$0]  %s2213, 16, %s69, [#allocation5]
    $region141: #{cdssnet_forward.3} parent=1 // pred_fallthru
      _
    // Predicated region
    $region142: #{cdssnet_forward.3} parent=1 // pred_check
      _
    $region143: #{cdssnet_forward.3} parent=1 // pred_check_branch
      %2217 = sbr.rel (0) target = $region145
    $region144: #{cdssnet_forward.3} parent=1 // pred_region
      %s2219 = ssub.s32 32, 32
      %2220 = vsyncadd [#allocation8], %s2219
      %s2222 = sshll.u32 [#allocation7], 4
      %s2223 = int_to_ptr.vmem [resolvable:$true] %s2222
      %2225 = dma.vmem_to_hbm [thread:$0]  %s2223, 32, %s71, [#allocation8]
    $region145: #{cdssnet_forward.3} parent=1 // pred_fallthru
      _
    // Predicated region
    $region146: #{cdssnet_forward.3} parent=1 // pred_check
      _
    $region147: #{cdssnet_forward.3} parent=1 // pred_check_branch
      %2227 = sbr.rel (0) target = $region149
    $region148: #{cdssnet_forward.3} parent=1 // pred_region
      %s2229 = ssub.s32 32, 32
      %2230 = vsyncadd [#allocation8], %s2229
      %s2232 = sshll.u32 [#allocation9], 4
      %s2233 = int_to_ptr.vmem [resolvable:$true] %s2232
      %2235 = dma.vmem_to_hbm [thread:$0]  %s2233, 32, %s73, [#allocation8]
    $region149: #{cdssnet_forward.3} parent=1 // pred_fallthru
      _
    // Predicated region
    $region150: #{cdssnet_forward.3} parent=1 // pred_check
      _
    $region151: #{cdssnet_forward.3} parent=1 // pred_check_branch
      %2237 = sbr.rel (0) target = $region153
    $region152: #{cdssnet_forward.3} parent=1 // pred_region
      %s2239 = ssub.s32 32, 32
      %2240 = vsyncadd [#allocation11], %s2239
      %s2242 = sshll.u32 [#allocation10], 4
      %s2243 = int_to_ptr.vmem [resolvable:$true] %s2242
      %2245 = dma.vmem_to_hbm [thread:$0]  %s2243, 32, %s75, [#allocation11]
    $region153: #{cdssnet_forward.3} parent=1 // pred_fallthru
      _
    // Predicated region
    $region154: #{cdssnet_forward.3} parent=1 // pred_check
      _
    $region155: #{cdssnet_forward.3} parent=1 // pred_check_branch
      %2247 = sbr.rel (0) target = $region157
    $region156: #{cdssnet_forward.3} parent=1 // pred_region
      %s2249 = ssub.s32 32, 32
      %2250 = vsyncadd [#allocation11], %s2249
      %s2252 = sshll.u32 [#allocation12], 4
      %s2253 = int_to_ptr.vmem [resolvable:$true] %s2252
      %2255 = dma.vmem_to_hbm [thread:$0]  %s2253, 32, %s77, [#allocation11]
    $region157: #{cdssnet_forward.3} parent=1 // pred_fallthru
      _
    // Predicated region
    $region158: #{cdssnet_forward.3} parent=1 // pred_check
      _
    $region159: #{cdssnet_forward.3} parent=1 // pred_check_branch
      %2257 = sbr.rel (0) target = $region161
    $region160: #{cdssnet_forward.3} parent=1 // pred_region
      %s2259 = ssub.s32 16, 16
      %2260 = vsyncadd [#allocation14], %s2259
      %s2262 = sshll.u32 [#allocation13], 4
      %s2263 = int_to_ptr.vmem [resolvable:$true] %s2262
      %2265 = dma.vmem_to_hbm [thread:$0]  %s2263, 16, %s79, [#allocation14]
    $region161: #{cdssnet_forward.3} parent=1 // pred_fallthru
      _
    // Predicated region
    $region162: #{cdssnet_forward.3} parent=1 // pred_check
      _
    $region163: #{cdssnet_forward.3} parent=1 // pred_check_branch
      %2267 = sbr.rel (0) target = $region165
    $region164: #{cdssnet_forward.3} parent=1 // pred_region
      %s2269 = ssub.s32 32, 32
      %2270 = vsyncadd [#allocation14], %s2269
      %s2272 = sshll.u32 [#allocation15], 4
      %s2273 = int_to_ptr.vmem [resolvable:$true] %s2272
      %2275 = dma.vmem_to_hbm [thread:$0]  %s2273, 32, %s81, [#allocation14]
    $region165: #{cdssnet_forward.3} parent=1 // pred_fallthru
      _
    // Predicated region
    $region166: #{cdssnet_forward.3} parent=1 // pred_check
      _
    $region167: #{cdssnet_forward.3} parent=1 // pred_check_branch
      %2277 = sbr.rel (0) target = $region169
    $region168: #{cdssnet_forward.3} parent=1 // pred_region
      %2278 = dma.done [#allocation3], 32
    $region169: #{cdssnet_forward.3} parent=1 // pred_fallthru
      _
    // Predicated region
    $region170: #{cdssnet_forward.3} parent=1 // pred_check
      _
    $region171: #{cdssnet_forward.3} parent=1 // pred_check_branch
      %2280 = sbr.rel (0) target = $region173
    $region172: #{cdssnet_forward.3} parent=1 // pred_region
      %2281 = dma.done [#allocation5], 32
    $region173: #{cdssnet_forward.3} parent=1 // pred_fallthru
      _
    // Predicated region
    $region174: #{cdssnet_forward.3} parent=1 // pred_check
      _
    $region175: #{cdssnet_forward.3} parent=1 // pred_check_branch
      %2283 = sbr.rel (0) target = $region177
    $region176: #{cdssnet_forward.3} parent=1 // pred_region
      %2284 = dma.done [#allocation5], 16
    $region177: #{cdssnet_forward.3} parent=1 // pred_fallthru
      _
    // Predicated region
    $region178: #{cdssnet_forward.3} parent=1 // pred_check
      _
    $region179: #{cdssnet_forward.3} parent=1 // pred_check_branch
      %2286 = sbr.rel (0) target = $region181
    $region180: #{cdssnet_forward.3} parent=1 // pred_region
      %2287 = dma.done [#allocation8], 32
    $region181: #{cdssnet_forward.3} parent=1 // pred_fallthru
      _
    // Predicated region
    $region182: #{cdssnet_forward.3} parent=1 // pred_check
      _
    $region183: #{cdssnet_forward.3} parent=1 // pred_check_branch
      %2289 = sbr.rel (0) target = $region185
    $region184: #{cdssnet_forward.3} parent=1 // pred_region
      %2290 = dma.done [#allocation8], 32
    $region185: #{cdssnet_forward.3} parent=1 // pred_fallthru
      _
    // Predicated region
    $region186: #{cdssnet_forward.3} parent=1 // pred_check
      _
    $region187: #{cdssnet_forward.3} parent=1 // pred_check_branch
      %2292 = sbr.rel (0) target = $region189
    $region188: #{cdssnet_forward.3} parent=1 // pred_region
      %2293 = dma.done [#allocation11], 32
    $region189: #{cdssnet_forward.3} parent=1 // pred_fallthru
      _
    // Predicated region
    $region190: #{cdssnet_forward.3} parent=1 // pred_check
      _
    $region191: #{cdssnet_forward.3} parent=1 // pred_check_branch
      %2295 = sbr.rel (0) target = $region193
    $region192: #{cdssnet_forward.3} parent=1 // pred_region
      %2296 = dma.done [#allocation11], 32
    $region193: #{cdssnet_forward.3} parent=1 // pred_fallthru
      _
    // Predicated region
    $region194: #{cdssnet_forward.3} parent=1 // pred_check
      _
    $region195: #{cdssnet_forward.3} parent=1 // pred_check_branch
      %2298 = sbr.rel (0) target = $region197
    $region196: #{cdssnet_forward.3} parent=1 // pred_region
      %2299 = dma.done [#allocation14], 16
    $region197: #{cdssnet_forward.3} parent=1 // pred_fallthru
      _
    // Predicated region
    $region198: #{cdssnet_forward.3} parent=1 // pred_check
      _
    $region199: #{cdssnet_forward.3} parent=1 // pred_check_branch
      %2301 = sbr.rel (0) target = $region201
    $region200: #{cdssnet_forward.3} parent=1 // pred_region
      %2302 = dma.done [#allocation14], 32
    $region201: #{cdssnet_forward.3} parent=1 // pred_fallthru
      _
    %2303 = vsyncpa [#allocation3], 1
    %2304 = vsyncpa [#allocation5], 1
    %2305 = vsyncpa [#allocation8], 1
    %2306 = vsyncpa [#allocation11], 1
    %2307 = vsyncpa [#allocation14], 1

</llo_original>
